<compile_context>
chip_gen: v7x
topology: tpu7x:2x2x1
jax: 0.10.0
libtpu: 0.0.40
codegen_flags: <defaults>
</compile_context>

<pallas_src>
import math

import jax
import jax.numpy as jnp
from jax.experimental import pallas as pl

# ---- BASELINE_MODEL (small synthetic sizes) --------------------------------
IN_DIM = 16
EMBED_DIM = 32          # d_model
NHEAD = 4
HEAD_DIM = EMBED_DIM // NHEAD
NLAYER = 2
NCLASS = 5
FFN_DIM = 64            # PyTorch TransformerEncoderLayer default is 2048; kept small
LN_EPS = 1e-5
LANES = 128

# ---- global slab row layout (shape [GSLAB_ROWS, 128]) ----------------------
ROW_WIN = 0                               # rows 0..IN_DIM-1     : w_in   [M, D]
ROW_WCLS = ROW_WIN + IN_DIM               # rows 16..47          : w_cls  [D, 128]
ROW_BIN = ROW_WCLS + EMBED_DIM            # row 48               : b_in
ROW_BCLS = ROW_BIN + 1                    # row 49               : b_cls (padded)
GSLAB_ROWS = 56

# ---- per-layer slab row layout (shape [NLAYER, LSLAB_ROWS, 128]) -----------
ROW_WQKV = 0                              # rows 0..31   : wqkv [D, 3D]
ROW_WO = ROW_WQKV + EMBED_DIM             # rows 32..63  : wo   [D, D]
ROW_W1 = ROW_WO + EMBED_DIM               # rows 64..95  : w1   [D, F]
ROW_W2 = ROW_W1 + EMBED_DIM               # rows 96..159 : w2   [F, D]
ROW_BQKV = ROW_W2 + FFN_DIM               # row 160
ROW_BO = ROW_BQKV + 1                     # row 161
ROW_G1 = ROW_BO + 1                       # row 162
ROW_B1 = ROW_G1 + 1                       # row 163
ROW_FB1 = ROW_B1 + 1                      # row 164
ROW_FB2 = ROW_FB1 + 1                     # row 165
ROW_G2 = ROW_FB2 + 1                      # row 166
ROW_B2 = ROW_G2 + 1                       # row 167
LSLAB_ROWS = 168


# ---------------------------- shared math helpers ---------------------------
def _layer_norm(x, gamma, beta):
    mean = jnp.mean(x, axis=-1, keepdims=True)
    var = jnp.mean((x - mean) ** 2, axis=-1, keepdims=True)
    inv = jax.lax.rsqrt(var + LN_EPS)
    return (x - mean) * inv * gamma + beta


# ------------------------------- the kernel ---------------------------------
def baseline_kernel(x_ref, pe_ref, g_ref, w_ref, out_ref):
    D, F, Dh, H = EMBED_DIM, FFN_DIM, HEAD_DIM, NHEAD
    BS, M = x_ref.shape
    S = pe_ref.shape[0]
    B = BS // S
    scale = 1.0 / math.sqrt(Dh)

    # input linear projection + positional encoding (dropout = identity in eval)
    x = x_ref[...]                                                  # [B*S, M]
    h = (jnp.dot(x, g_ref[ROW_WIN:ROW_WIN + M, :D],
                 preferred_element_type=jnp.float32)
         + g_ref[ROW_BIN:ROW_BIN + 1, :D])                          # [B*S, D]
    h = (h.reshape(B, S, D) + pe_ref[...][None]).reshape(BS, D)

    for l in range(NLAYER):
        # ---- multi-head self-attention: one fused QKV matmul -----------------
        qkv = (jnp.dot(h, w_ref[l, ROW_WQKV:ROW_WQKV + D, :3 * D],
                       preferred_element_type=jnp.float32)
               + w_ref[l, ROW_BQKV:ROW_BQKV + 1, :3 * D])           # [B*S, 3D]
        q = qkv[:, 0 * D:1 * D].reshape(B, S, D)
        k = qkv[:, 1 * D:2 * D].reshape(B, S, D)
        v = qkv[:, 2 * D:3 * D].reshape(B, S, D)

        ctx = []
        for hh in range(H):
            lo, hi = hh * Dh, (hh + 1) * Dh
            s = jnp.einsum('bqd,bkd->bqk', q[..., lo:hi], k[..., lo:hi],
                           preferred_element_type=jnp.float32) * scale
            s = s - jnp.max(s, axis=-1, keepdims=True)
            p = jnp.exp(s)
            p = p / jnp.sum(p, axis=-1, keepdims=True)
            ctx.append(jnp.einsum('bqk,bkd->bqd', p, v[..., lo:hi],
                                  preferred_element_type=jnp.float32))
        ctx = jnp.concatenate(ctx, axis=-1).reshape(BS, D)          # [B*S, D]

        # single fused out-projection over all heads
        attn = (jnp.dot(ctx, w_ref[l, ROW_WO:ROW_WO + D, :D],
                        preferred_element_type=jnp.float32)
                + w_ref[l, ROW_BO:ROW_BO + 1, :D])
        h = _layer_norm(h + attn,
                        w_ref[l, ROW_G1:ROW_G1 + 1, :D],
                        w_ref[l, ROW_B1:ROW_B1 + 1, :D])

        # ---- feed-forward (relu) ---------------------------------------------
        ff = (jnp.dot(h, w_ref[l, ROW_W1:ROW_W1 + D, :F],
                      preferred_element_type=jnp.float32)
              + w_ref[l, ROW_FB1:ROW_FB1 + 1, :F])
        ff = jnp.maximum(ff, 0.0)
        ff = (jnp.dot(ff, w_ref[l, ROW_W2:ROW_W2 + F, :D],
                      preferred_element_type=jnp.float32)
              + w_ref[l, ROW_FB2:ROW_FB2 + 1, :D])
        h = _layer_norm(h + ff,
                        w_ref[l, ROW_G2:ROW_G2 + 1, :D],
                        w_ref[l, ROW_B2:ROW_B2 + 1, :D])

    # seq-max pooling per batch, then lane-dense classifier (full-block store)
    pooled = jnp.max(h.reshape(B, S, D), axis=1)                    # [B, D]
    nrows = out_ref.shape[0]
    if nrows > B:
        pooled = jnp.concatenate(
            [pooled, jnp.zeros((nrows - B, D), jnp.float32)], axis=0)
    logits = (jnp.dot(pooled, g_ref[ROW_WCLS:ROW_WCLS + D, :],
                      preferred_element_type=jnp.float32)
              + g_ref[ROW_BCLS:ROW_BCLS + 1, :])                    # [nrows, 128]
    out_ref[...] = logits


# ------------------------------- wrapper ------------------------------------
def baseline_forward(x, packed):
    B, S, M = x.shape
    pe_tbl, gslab, wslab = packed
    pe = pe_tbl[:S]                                                 # [S, D]
    out_rows = ((B + 7) // 8) * 8                                   # (8,128)-dense block
    out = pl.pallas_call(
        baseline_kernel,
        out_shape=jax.ShapeDtypeStruct((out_rows, LANES), jnp.float32),
    )(x.reshape(B * S, M), pe, gslab, wslab)
    return out[:B, :NCLASS]


# --------------------------- parameter building -----------------------------
def make_positional_encoding(max_len, d_model):
    position = jnp.arange(max_len, dtype=jnp.float32)[:, None]
    div_term = jnp.exp(jnp.arange(0, d_model, 2, dtype=jnp.float32)
                       * (-math.log(10000.0) / d_model))
    pe = jnp.zeros((max_len, d_model), jnp.float32)
    pe = pe.at[:, 0::2].set(jnp.sin(position * div_term))
    pe = pe.at[:, 1::2].set(jnp.cos(position * div_term))
    return pe


def init_params(key, in_dim):
    D, F, C = EMBED_DIM, FFN_DIM, NCLASS

    def dense(k, fan_in, shape):
        bound = 1.0 / math.sqrt(fan_in)
        return jax.random.uniform(k, shape, jnp.float32, -bound, bound)

    keys = iter(jax.random.split(key, 4 + NLAYER * 8))
    params = {
        'w_in': dense(next(keys), in_dim, (in_dim, D)),
        'b_in': dense(next(keys), in_dim, (D,)),
        'w_cls': dense(next(keys), D, (D, C)),
        'b_cls': dense(next(keys), D, (C,)),
        'pe': make_positional_encoding(64, D),
        'layers': [],
    }
    for _ in range(NLAYER):
        params['layers'].append({
            'wqkv': dense(next(keys), D, (D, 3 * D)),
            'bqkv': dense(next(keys), D, (3 * D,)),
            'wo': dense(next(keys), D, (D, D)),
            'bo': dense(next(keys), D, (D,)),
            'ln1_g': jnp.ones((D,), jnp.float32),
            'ln1_b': jnp.zeros((D,), jnp.float32),
            'w1': dense(next(keys), D, (D, F)),
            'b1': dense(next(keys), D, (F,)),
            'w2': dense(next(keys), F, (F, D)),
            'b2': dense(next(keys), F, (D,)),
            'ln2_g': jnp.ones((D,), jnp.float32),
            'ln2_b': jnp.zeros((D,), jnp.float32),
        })
    return params


def pack_params(params):
    """Pack params into 2 lane-dense slabs (global + per-layer) + the PE table."""
    D, F, M = EMBED_DIM, FFN_DIM, IN_DIM

    g = jnp.zeros((GSLAB_ROWS, LANES), jnp.float32)
    g = g.at[ROW_WIN:ROW_WIN + M, :D].set(params['w_in'])
    g = g.at[ROW_WCLS:ROW_WCLS + D, :NCLASS].set(params['w_cls'])
    g = g.at[ROW_BIN, :D].set(params['b_in'])
    g = g.at[ROW_BCLS, :NCLASS].set(params['b_cls'])

    w = jnp.zeros((NLAYER, LSLAB_ROWS, LANES), jnp.float32)
    for l, lp in enumerate(params['layers']):
        w = w.at[l, ROW_WQKV:ROW_WQKV + D, :3 * D].set(lp['wqkv'])
        w = w.at[l, ROW_WO:ROW_WO + D, :D].set(lp['wo'])
        w = w.at[l, ROW_W1:ROW_W1 + D, :F].set(lp['w1'])
        w = w.at[l, ROW_W2:ROW_W2 + F, :D].set(lp['w2'])
        w = w.at[l, ROW_BQKV, :3 * D].set(lp['bqkv'])
        w = w.at[l, ROW_BO, :D].set(lp['bo'])
        w = w.at[l, ROW_G1, :D].set(lp['ln1_g'])
        w = w.at[l, ROW_B1, :D].set(lp['ln1_b'])
        w = w.at[l, ROW_FB1, :F].set(lp['b1'])
        w = w.at[l, ROW_FB2, :D].set(lp['b2'])
        w = w.at[l, ROW_G2, :D].set(lp['ln2_g'])
        w = w.at[l, ROW_B2, :D].set(lp['ln2_b'])

    return params['pe'], g, w


# ----------------------- pure-JAX reference (for checking) ------------------
def reference_forward(x, params):
    D, Dh = EMBED_DIM, HEAD_DIM
    B, S, _ = x.shape
    h = jnp.einsum('bsm,md->bsd', x, params['w_in']) + params['b_in']
    h = h + params['pe'][:S][None]
    for lp in params['layers']:
        qkv = jnp.einsum('bsd,de->bse', h, lp['wqkv']) + lp['bqkv']
        q, k, v = qkv[..., :D], qkv[..., D:2 * D], qkv[..., 2 * D:]
        q = q.reshape(B, S, NHEAD, Dh).transpose(0, 2, 1, 3)
        k = k.reshape(B, S, NHEAD, Dh).transpose(0, 2, 1, 3)
        v = v.reshape(B, S, NHEAD, Dh).transpose(0, 2, 1, 3)
        s = jnp.einsum('bhqd,bhkd->bhqk', q, k) / math.sqrt(Dh)
        p = jax.nn.softmax(s, axis=-1)
        ctx = jnp.einsum('bhqk,bhkd->bhqd', p, v)
        ctx = ctx.transpose(0, 2, 1, 3).reshape(B, S, D)
        attn = jnp.einsum('bsd,de->bse', ctx, lp['wo']) + lp['bo']
        h = _layer_norm(h + attn, lp['ln1_g'], lp['ln1_b'])
        ff = jax.nn.relu(jnp.einsum('bsd,df->bsf', h, lp['w1']) + lp['b1'])
        ff = jnp.einsum('bsf,fd->bsd', ff, lp['w2']) + lp['b2']
        h = _layer_norm(h + ff, lp['ln2_g'], lp['ln2_b'])
    pooled = jnp.max(h, axis=1)
    return jnp.dot(pooled, params['w_cls']) + params['b_cls']


# --------------------------------- main --------------------------------------
if __name__ == "__main__":
    key = jax.random.PRNGKey(0)
    kx, kp = jax.random.split(key)

    B, S = 2, 8
    x = jax.random.normal(kx, (B, S, IN_DIM), dtype=jnp.float32)
    params = init_params(kp, IN_DIM)
    packed = pack_params(params)

    logits = baseline_forward(x, packed)
    jax.block_until_ready(logits)

    assert logits.shape == (B, NCLASS), logits.shape
    assert bool(jnp.all(jnp.isfinite(logits)))

    ref = reference_forward(x, params)
    max_err = float(jnp.max(jnp.abs(logits - ref)))
    assert bool(jnp.allclose(logits, ref, atol=2e-2, rtol=2e-2)), max_err

    print("KERNEL_OK")
</pallas_src>

<mosaic_0001>
module attributes {stable_mosaic.version = 11 : i64} {
  func.func @baseline_kernel(%arg0: memref<16x16xf32, #tpu.memory_space<vmem>>, %arg1: memref<8x32xf32, #tpu.memory_space<vmem>>, %arg2: memref<56x128xf32, #tpu.memory_space<vmem>>, %arg3: memref<2x168x128xf32, #tpu.memory_space<vmem>>, %arg4: memref<8x128xf32, #tpu.memory_space<vmem>>) attributes {dimension_semantics = [], scalar_prefetch = 0 : i64, scratch_operands = 0 : i64, tpu.core_type = #tpu.core_type<tc>} {
    %c0 = arith.constant 0 : index
    %c0_0 = arith.constant 0 : index
    %0 = vector.load %arg0[%c0, %c0_0] : memref<16x16xf32, #tpu.memory_space<vmem>>, vector<16x16xf32>
    %c0_1 = arith.constant 0 : index
    %c0_2 = arith.constant 0 : index
    %1 = vector.load %arg2[%c0_1, %c0_2] : memref<56x128xf32, #tpu.memory_space<vmem>>, vector<16x32xf32>
    %cst = arith.constant dense<0.000000e+00> : vector<16x32xf32>
    %2 = tpu.matmul %0, %1, %cst {dimension_numbers = #tpu.dot_dimension_numbers<[1], [0], [0], [1], [0, 0, 1, 1], [], []>} : vector<16x16xf32>, vector<16x32xf32>, vector<16x32xf32> -> vector<16x32xf32>
    %c48 = arith.constant 48 : index
    %c0_3 = arith.constant 0 : index
    %3 = vector.load %arg2[%c48, %c0_3] : memref<56x128xf32, #tpu.memory_space<vmem>>, vector<1x32xf32>
    %4 = vector.broadcast %3 : vector<1x32xf32> to vector<16x32xf32>
    %5 = arith.addf %2, %4 : vector<16x32xf32>
    %6 = vector.shape_cast %5 : vector<16x32xf32> to vector<2x8x32xf32>
    %c0_4 = arith.constant 0 : index
    %c0_5 = arith.constant 0 : index
    %7 = vector.load %arg1[%c0_4, %c0_5] : memref<8x32xf32, #tpu.memory_space<vmem>>, vector<8x32xf32>
    %8 = vector.shape_cast %7 : vector<8x32xf32> to vector<1x8x32xf32>
    %9 = vector.broadcast %8 : vector<1x8x32xf32> to vector<2x8x32xf32>
    %10 = arith.addf %6, %9 : vector<2x8x32xf32>
    %11 = vector.shape_cast %10 : vector<2x8x32xf32> to vector<16x32xf32>
    %c0_6 = arith.constant 0 : index
    %c0_7 = arith.constant 0 : index
    %c0_8 = arith.constant 0 : index
    %12 = vector.load %arg3[%c0_6, %c0_7, %c0_8] : memref<2x168x128xf32, #tpu.memory_space<vmem>>, vector<1x32x96xf32>
    %13 = vector.shape_cast %12 : vector<1x32x96xf32> to vector<32x96xf32>
    %cst_9 = arith.constant dense<0.000000e+00> : vector<16x96xf32>
    %14 = tpu.matmul %11, %13, %cst_9 {dimension_numbers = #tpu.dot_dimension_numbers<[1], [0], [0], [1], [0, 0, 1, 1], [], []>} : vector<16x32xf32>, vector<32x96xf32>, vector<16x96xf32> -> vector<16x96xf32>
    %c0_10 = arith.constant 0 : index
    %c160 = arith.constant 160 : index
    %c0_11 = arith.constant 0 : index
    %15 = vector.load %arg3[%c0_10, %c160, %c0_11] : memref<2x168x128xf32, #tpu.memory_space<vmem>>, vector<1x1x96xf32>
    %16 = vector.shape_cast %15 : vector<1x1x96xf32> to vector<1x96xf32>
    %17 = vector.broadcast %16 : vector<1x96xf32> to vector<16x96xf32>
    %18 = arith.addf %14, %17 : vector<16x96xf32>
    %19 = vector.extract_strided_slice %18 {offsets = [0, 0], sizes = [16, 32], strides = [1, 1]} : vector<16x96xf32> to vector<16x32xf32>
    %20 = vector.shape_cast %19 : vector<16x32xf32> to vector<2x8x32xf32>
    %21 = vector.extract_strided_slice %18 {offsets = [0, 32], sizes = [16, 32], strides = [1, 1]} : vector<16x96xf32> to vector<16x32xf32>
    %22 = vector.shape_cast %21 : vector<16x32xf32> to vector<2x8x32xf32>
    %23 = vector.extract_strided_slice %18 {offsets = [0, 64], sizes = [16, 32], strides = [1, 1]} : vector<16x96xf32> to vector<16x32xf32>
    %24 = vector.shape_cast %23 : vector<16x32xf32> to vector<2x8x32xf32>
    %25 = vector.extract_strided_slice %20 {offsets = [0, 0, 0], sizes = [2, 8, 8], strides = [1, 1, 1]} : vector<2x8x32xf32> to vector<2x8x8xf32>
    %26 = vector.extract_strided_slice %22 {offsets = [0, 0, 0], sizes = [2, 8, 8], strides = [1, 1, 1]} : vector<2x8x32xf32> to vector<2x8x8xf32>
    "tpu.trace_start"() <{level = 10 : i32, message = "bqd,bkd->bqk"}> : () -> ()
    %cst_12 = arith.constant dense<0.000000e+00> : vector<2x8x8xf32>
    %27 = tpu.matmul %25, %26, %cst_12 {dimension_numbers = #tpu.dot_dimension_numbers<[2], [2], [1], [1], [0, 0, 0, 1, 1, 1], [0], [0]>} : vector<2x8x8xf32>, vector<2x8x8xf32>, vector<2x8x8xf32> -> vector<2x8x8xf32>
    "tpu.trace_stop"() : () -> ()
    %cst_13 = arith.constant 0.353553385 : f32
    %28 = vector.broadcast %cst_13 : f32 to vector<2x8x8xf32>
    %29 = arith.mulf %27, %28 : vector<2x8x8xf32>
    %cst_14 = arith.constant dense<0xFF800000> : vector<2x8xf32>
    %30 = vector.multi_reduction <maximumf>, %29, %cst_14 [2] : vector<2x8x8xf32> to vector<2x8xf32>
    %31 = vector.shape_cast %30 : vector<2x8xf32> to vector<2x8x1xf32>
    %32 = vector.broadcast %31 : vector<2x8x1xf32> to vector<2x8x8xf32>
    %33 = arith.subf %29, %32 : vector<2x8x8xf32>
    %34 = math.exp %33 : vector<2x8x8xf32>
    %cst_15 = arith.constant dense<0.000000e+00> : vector<2x8xf32>
    %35 = vector.multi_reduction <add>, %34, %cst_15 [2] : vector<2x8x8xf32> to vector<2x8xf32>
    %36 = vector.shape_cast %35 : vector<2x8xf32> to vector<2x8x1xf32>
    %37 = vector.broadcast %36 : vector<2x8x1xf32> to vector<2x8x8xf32>
    %38 = arith.divf %34, %37 : vector<2x8x8xf32>
    %39 = vector.extract_strided_slice %24 {offsets = [0, 0, 0], sizes = [2, 8, 8], strides = [1, 1, 1]} : vector<2x8x32xf32> to vector<2x8x8xf32>
    "tpu.trace_start"() <{level = 10 : i32, message = "bqk,bkd->bqd"}> : () -> ()
    %cst_16 = arith.constant dense<0.000000e+00> : vector<2x8x8xf32>
    %40 = tpu.matmul %38, %39, %cst_16 {dimension_numbers = #tpu.dot_dimension_numbers<[2], [1], [1], [2], [0, 0, 0, 1, 1, 2], [0], [0]>} : vector<2x8x8xf32>, vector<2x8x8xf32>, vector<2x8x8xf32> -> vector<2x8x8xf32>
    "tpu.trace_stop"() : () -> ()
    %41 = vector.extract_strided_slice %20 {offsets = [0, 0, 8], sizes = [2, 8, 8], strides = [1, 1, 1]} : vector<2x8x32xf32> to vector<2x8x8xf32>
    %42 = vector.extract_strided_slice %22 {offsets = [0, 0, 8], sizes = [2, 8, 8], strides = [1, 1, 1]} : vector<2x8x32xf32> to vector<2x8x8xf32>
    "tpu.trace_start"() <{level = 10 : i32, message = "bqd,bkd->bqk"}> : () -> ()
    %cst_17 = arith.constant dense<0.000000e+00> : vector<2x8x8xf32>
    %43 = tpu.matmul %41, %42, %cst_17 {dimension_numbers = #tpu.dot_dimension_numbers<[2], [2], [1], [1], [0, 0, 0, 1, 1, 1], [0], [0]>} : vector<2x8x8xf32>, vector<2x8x8xf32>, vector<2x8x8xf32> -> vector<2x8x8xf32>
    "tpu.trace_stop"() : () -> ()
    %cst_18 = arith.constant 0.353553385 : f32
    %44 = vector.broadcast %cst_18 : f32 to vector<2x8x8xf32>
    %45 = arith.mulf %43, %44 : vector<2x8x8xf32>
    %cst_19 = arith.constant dense<0xFF800000> : vector<2x8xf32>
    %46 = vector.multi_reduction <maximumf>, %45, %cst_19 [2] : vector<2x8x8xf32> to vector<2x8xf32>
    %47 = vector.shape_cast %46 : vector<2x8xf32> to vector<2x8x1xf32>
    %48 = vector.broadcast %47 : vector<2x8x1xf32> to vector<2x8x8xf32>
    %49 = arith.subf %45, %48 : vector<2x8x8xf32>
    %50 = math.exp %49 : vector<2x8x8xf32>
    %cst_20 = arith.constant dense<0.000000e+00> : vector<2x8xf32>
    %51 = vector.multi_reduction <add>, %50, %cst_20 [2] : vector<2x8x8xf32> to vector<2x8xf32>
    %52 = vector.shape_cast %51 : vector<2x8xf32> to vector<2x8x1xf32>
    %53 = vector.broadcast %52 : vector<2x8x1xf32> to vector<2x8x8xf32>
    %54 = arith.divf %50, %53 : vector<2x8x8xf32>
    %55 = vector.extract_strided_slice %24 {offsets = [0, 0, 8], sizes = [2, 8, 8], strides = [1, 1, 1]} : vector<2x8x32xf32> to vector<2x8x8xf32>
    "tpu.trace_start"() <{level = 10 : i32, message = "bqk,bkd->bqd"}> : () -> ()
    %cst_21 = arith.constant dense<0.000000e+00> : vector<2x8x8xf32>
    %56 = tpu.matmul %54, %55, %cst_21 {dimension_numbers = #tpu.dot_dimension_numbers<[2], [1], [1], [2], [0, 0, 0, 1, 1, 2], [0], [0]>} : vector<2x8x8xf32>, vector<2x8x8xf32>, vector<2x8x8xf32> -> vector<2x8x8xf32>
    "tpu.trace_stop"() : () -> ()
    %57 = vector.extract_strided_slice %20 {offsets = [0, 0, 16], sizes = [2, 8, 8], strides = [1, 1, 1]} : vector<2x8x32xf32> to vector<2x8x8xf32>
    %58 = vector.extract_strided_slice %22 {offsets = [0, 0, 16], sizes = [2, 8, 8], strides = [1, 1, 1]} : vector<2x8x32xf32> to vector<2x8x8xf32>
    "tpu.trace_start"() <{level = 10 : i32, message = "bqd,bkd->bqk"}> : () -> ()
    %cst_22 = arith.constant dense<0.000000e+00> : vector<2x8x8xf32>
    %59 = tpu.matmul %57, %58, %cst_22 {dimension_numbers = #tpu.dot_dimension_numbers<[2], [2], [1], [1], [0, 0, 0, 1, 1, 1], [0], [0]>} : vector<2x8x8xf32>, vector<2x8x8xf32>, vector<2x8x8xf32> -> vector<2x8x8xf32>
    "tpu.trace_stop"() : () -> ()
    %cst_23 = arith.constant 0.353553385 : f32
    %60 = vector.broadcast %cst_23 : f32 to vector<2x8x8xf32>
    %61 = arith.mulf %59, %60 : vector<2x8x8xf32>
    %cst_24 = arith.constant dense<0xFF800000> : vector<2x8xf32>
    %62 = vector.multi_reduction <maximumf>, %61, %cst_24 [2] : vector<2x8x8xf32> to vector<2x8xf32>
    %63 = vector.shape_cast %62 : vector<2x8xf32> to vector<2x8x1xf32>
    %64 = vector.broadcast %63 : vector<2x8x1xf32> to vector<2x8x8xf32>
    %65 = arith.subf %61, %64 : vector<2x8x8xf32>
    %66 = math.exp %65 : vector<2x8x8xf32>
    %cst_25 = arith.constant dense<0.000000e+00> : vector<2x8xf32>
    %67 = vector.multi_reduction <add>, %66, %cst_25 [2] : vector<2x8x8xf32> to vector<2x8xf32>
    %68 = vector.shape_cast %67 : vector<2x8xf32> to vector<2x8x1xf32>
    %69 = vector.broadcast %68 : vector<2x8x1xf32> to vector<2x8x8xf32>
    %70 = arith.divf %66, %69 : vector<2x8x8xf32>
    %71 = vector.extract_strided_slice %24 {offsets = [0, 0, 16], sizes = [2, 8, 8], strides = [1, 1, 1]} : vector<2x8x32xf32> to vector<2x8x8xf32>
    "tpu.trace_start"() <{level = 10 : i32, message = "bqk,bkd->bqd"}> : () -> ()
    %cst_26 = arith.constant dense<0.000000e+00> : vector<2x8x8xf32>
    %72 = tpu.matmul %70, %71, %cst_26 {dimension_numbers = #tpu.dot_dimension_numbers<[2], [1], [1], [2], [0, 0, 0, 1, 1, 2], [0], [0]>} : vector<2x8x8xf32>, vector<2x8x8xf32>, vector<2x8x8xf32> -> vector<2x8x8xf32>
    "tpu.trace_stop"() : () -> ()
    %73 = vector.extract_strided_slice %20 {offsets = [0, 0, 24], sizes = [2, 8, 8], strides = [1, 1, 1]} : vector<2x8x32xf32> to vector<2x8x8xf32>
    %74 = vector.extract_strided_slice %22 {offsets = [0, 0, 24], sizes = [2, 8, 8], strides = [1, 1, 1]} : vector<2x8x32xf32> to vector<2x8x8xf32>
    "tpu.trace_start"() <{level = 10 : i32, message = "bqd,bkd->bqk"}> : () -> ()
    %cst_27 = arith.constant dense<0.000000e+00> : vector<2x8x8xf32>
    %75 = tpu.matmul %73, %74, %cst_27 {dimension_numbers = #tpu.dot_dimension_numbers<[2], [2], [1], [1], [0, 0, 0, 1, 1, 1], [0], [0]>} : vector<2x8x8xf32>, vector<2x8x8xf32>, vector<2x8x8xf32> -> vector<2x8x8xf32>
    "tpu.trace_stop"() : () -> ()
    %cst_28 = arith.constant 0.353553385 : f32
    %76 = vector.broadcast %cst_28 : f32 to vector<2x8x8xf32>
    %77 = arith.mulf %75, %76 : vector<2x8x8xf32>
    %cst_29 = arith.constant dense<0xFF800000> : vector<2x8xf32>
    %78 = vector.multi_reduction <maximumf>, %77, %cst_29 [2] : vector<2x8x8xf32> to vector<2x8xf32>
    %79 = vector.shape_cast %78 : vector<2x8xf32> to vector<2x8x1xf32>
    %80 = vector.broadcast %79 : vector<2x8x1xf32> to vector<2x8x8xf32>
    %81 = arith.subf %77, %80 : vector<2x8x8xf32>
    %82 = math.exp %81 : vector<2x8x8xf32>
    %cst_30 = arith.constant dense<0.000000e+00> : vector<2x8xf32>
    %83 = vector.multi_reduction <add>, %82, %cst_30 [2] : vector<2x8x8xf32> to vector<2x8xf32>
    %84 = vector.shape_cast %83 : vector<2x8xf32> to vector<2x8x1xf32>
    %85 = vector.broadcast %84 : vector<2x8x1xf32> to vector<2x8x8xf32>
    %86 = arith.divf %82, %85 : vector<2x8x8xf32>
    %87 = vector.extract_strided_slice %24 {offsets = [0, 0, 24], sizes = [2, 8, 8], strides = [1, 1, 1]} : vector<2x8x32xf32> to vector<2x8x8xf32>
    "tpu.trace_start"() <{level = 10 : i32, message = "bqk,bkd->bqd"}> : () -> ()
    %cst_31 = arith.constant dense<0.000000e+00> : vector<2x8x8xf32>
    %88 = tpu.matmul %86, %87, %cst_31 {dimension_numbers = #tpu.dot_dimension_numbers<[2], [1], [1], [2], [0, 0, 0, 1, 1, 2], [0], [0]>} : vector<2x8x8xf32>, vector<2x8x8xf32>, vector<2x8x8xf32> -> vector<2x8x8xf32>
    "tpu.trace_stop"() : () -> ()
    %89 = tpu.concatenate %40, %56, %72, %88 in 2 : vector<2x8x8xf32>, vector<2x8x8xf32>, vector<2x8x8xf32>, vector<2x8x8xf32> -> vector<2x8x32xf32>
    %90 = vector.shape_cast %89 : vector<2x8x32xf32> to vector<16x32xf32>
    %c0_32 = arith.constant 0 : index
    %c32 = arith.constant 32 : index
    %c0_33 = arith.constant 0 : index
    %91 = vector.load %arg3[%c0_32, %c32, %c0_33] : memref<2x168x128xf32, #tpu.memory_space<vmem>>, vector<1x32x32xf32>
    %92 = vector.shape_cast %91 : vector<1x32x32xf32> to vector<32x32xf32>
    %cst_34 = arith.constant dense<0.000000e+00> : vector<16x32xf32>
    %93 = tpu.matmul %90, %92, %cst_34 {dimension_numbers = #tpu.dot_dimension_numbers<[1], [0], [0], [1], [0, 0, 1, 1], [], []>} : vector<16x32xf32>, vector<32x32xf32>, vector<16x32xf32> -> vector<16x32xf32>
    %c0_35 = arith.constant 0 : index
    %c161 = arith.constant 161 : index
    %c0_36 = arith.constant 0 : index
    %94 = vector.load %arg3[%c0_35, %c161, %c0_36] : memref<2x168x128xf32, #tpu.memory_space<vmem>>, vector<1x1x32xf32>
    %95 = vector.shape_cast %94 : vector<1x1x32xf32> to vector<1x32xf32>
    %96 = vector.broadcast %95 : vector<1x32xf32> to vector<16x32xf32>
    %97 = arith.addf %93, %96 : vector<16x32xf32>
    %98 = arith.addf %11, %97 : vector<16x32xf32>
    %c0_37 = arith.constant 0 : index
    %c162 = arith.constant 162 : index
    %c0_38 = arith.constant 0 : index
    %99 = vector.load %arg3[%c0_37, %c162, %c0_38] : memref<2x168x128xf32, #tpu.memory_space<vmem>>, vector<1x1x32xf32>
    %100 = vector.shape_cast %99 : vector<1x1x32xf32> to vector<1x32xf32>
    %c0_39 = arith.constant 0 : index
    %c163 = arith.constant 163 : index
    %c0_40 = arith.constant 0 : index
    %101 = vector.load %arg3[%c0_39, %c163, %c0_40] : memref<2x168x128xf32, #tpu.memory_space<vmem>>, vector<1x1x32xf32>
    %102 = vector.shape_cast %101 : vector<1x1x32xf32> to vector<1x32xf32>
    %cst_41 = arith.constant dense<0.000000e+00> : vector<16xf32>
    %103 = vector.multi_reduction <add>, %98, %cst_41 [1] : vector<16x32xf32> to vector<16xf32>
    %104 = vector.shape_cast %103 : vector<16xf32> to vector<16x1xf32>
    %cst_42 = arith.constant 3.200000e+01 : f32
    %105 = vector.broadcast %cst_42 : f32 to vector<16x1xf32>
    %106 = arith.divf %104, %105 : vector<16x1xf32>
    %107 = vector.broadcast %106 : vector<16x1xf32> to vector<16x32xf32>
    %108 = arith.subf %98, %107 : vector<16x32xf32>
    %109 = arith.mulf %108, %108 : vector<16x32xf32>
    %cst_43 = arith.constant dense<0.000000e+00> : vector<16xf32>
    %110 = vector.multi_reduction <add>, %109, %cst_43 [1] : vector<16x32xf32> to vector<16xf32>
    %111 = vector.shape_cast %110 : vector<16xf32> to vector<16x1xf32>
    %cst_44 = arith.constant 3.200000e+01 : f32
    %112 = vector.broadcast %cst_44 : f32 to vector<16x1xf32>
    %113 = arith.divf %111, %112 : vector<16x1xf32>
    %cst_45 = arith.constant 9.99999974E-6 : f32
    %114 = vector.broadcast %cst_45 : f32 to vector<16x1xf32>
    %115 = arith.addf %113, %114 : vector<16x1xf32>
    %116 = math.rsqrt %115 : vector<16x1xf32>
    %117 = vector.broadcast %106 : vector<16x1xf32> to vector<16x32xf32>
    %118 = arith.subf %98, %117 : vector<16x32xf32>
    %119 = vector.broadcast %116 : vector<16x1xf32> to vector<16x32xf32>
    %120 = arith.mulf %118, %119 : vector<16x32xf32>
    %121 = vector.broadcast %100 : vector<1x32xf32> to vector<16x32xf32>
    %122 = arith.mulf %120, %121 : vector<16x32xf32>
    %123 = vector.broadcast %102 : vector<1x32xf32> to vector<16x32xf32>
    %124 = arith.addf %122, %123 : vector<16x32xf32>
    %c0_46 = arith.constant 0 : index
    %c64 = arith.constant 64 : index
    %c0_47 = arith.constant 0 : index
    %125 = vector.load %arg3[%c0_46, %c64, %c0_47] : memref<2x168x128xf32, #tpu.memory_space<vmem>>, vector<1x32x64xf32>
    %126 = vector.shape_cast %125 : vector<1x32x64xf32> to vector<32x64xf32>
    %cst_48 = arith.constant dense<0.000000e+00> : vector<16x64xf32>
    %127 = tpu.matmul %124, %126, %cst_48 {dimension_numbers = #tpu.dot_dimension_numbers<[1], [0], [0], [1], [0, 0, 1, 1], [], []>} : vector<16x32xf32>, vector<32x64xf32>, vector<16x64xf32> -> vector<16x64xf32>
    %c0_49 = arith.constant 0 : index
    %c164 = arith.constant 164 : index
    %c0_50 = arith.constant 0 : index
    %128 = vector.load %arg3[%c0_49, %c164, %c0_50] : memref<2x168x128xf32, #tpu.memory_space<vmem>>, vector<1x1x64xf32>
    %129 = vector.shape_cast %128 : vector<1x1x64xf32> to vector<1x64xf32>
    %130 = vector.broadcast %129 : vector<1x64xf32> to vector<16x64xf32>
    %131 = arith.addf %127, %130 : vector<16x64xf32>
    %cst_51 = arith.constant 0.000000e+00 : f32
    %132 = vector.broadcast %cst_51 : f32 to vector<16x64xf32>
    %133 = arith.maximumf %131, %132 : vector<16x64xf32>
    %c0_52 = arith.constant 0 : index
    %c96 = arith.constant 96 : index
    %c0_53 = arith.constant 0 : index
    %134 = vector.load %arg3[%c0_52, %c96, %c0_53] : memref<2x168x128xf32, #tpu.memory_space<vmem>>, vector<1x64x32xf32>
    %135 = vector.shape_cast %134 : vector<1x64x32xf32> to vector<64x32xf32>
    %cst_54 = arith.constant dense<0.000000e+00> : vector<16x32xf32>
    %136 = tpu.matmul %133, %135, %cst_54 {dimension_numbers = #tpu.dot_dimension_numbers<[1], [0], [0], [1], [0, 0, 1, 1], [], []>} : vector<16x64xf32>, vector<64x32xf32>, vector<16x32xf32> -> vector<16x32xf32>
    %c0_55 = arith.constant 0 : index
    %c165 = arith.constant 165 : index
    %c0_56 = arith.constant 0 : index
    %137 = vector.load %arg3[%c0_55, %c165, %c0_56] : memref<2x168x128xf32, #tpu.memory_space<vmem>>, vector<1x1x32xf32>
    %138 = vector.shape_cast %137 : vector<1x1x32xf32> to vector<1x32xf32>
    %139 = vector.broadcast %138 : vector<1x32xf32> to vector<16x32xf32>
    %140 = arith.addf %136, %139 : vector<16x32xf32>
    %141 = arith.addf %124, %140 : vector<16x32xf32>
    %c0_57 = arith.constant 0 : index
    %c166 = arith.constant 166 : index
    %c0_58 = arith.constant 0 : index
    %142 = vector.load %arg3[%c0_57, %c166, %c0_58] : memref<2x168x128xf32, #tpu.memory_space<vmem>>, vector<1x1x32xf32>
    %143 = vector.shape_cast %142 : vector<1x1x32xf32> to vector<1x32xf32>
    %c0_59 = arith.constant 0 : index
    %c167 = arith.constant 167 : index
    %c0_60 = arith.constant 0 : index
    %144 = vector.load %arg3[%c0_59, %c167, %c0_60] : memref<2x168x128xf32, #tpu.memory_space<vmem>>, vector<1x1x32xf32>
    %145 = vector.shape_cast %144 : vector<1x1x32xf32> to vector<1x32xf32>
    %cst_61 = arith.constant dense<0.000000e+00> : vector<16xf32>
    %146 = vector.multi_reduction <add>, %141, %cst_61 [1] : vector<16x32xf32> to vector<16xf32>
    %147 = vector.shape_cast %146 : vector<16xf32> to vector<16x1xf32>
    %cst_62 = arith.constant 3.200000e+01 : f32
    %148 = vector.broadcast %cst_62 : f32 to vector<16x1xf32>
    %149 = arith.divf %147, %148 : vector<16x1xf32>
    %150 = vector.broadcast %149 : vector<16x1xf32> to vector<16x32xf32>
    %151 = arith.subf %141, %150 : vector<16x32xf32>
    %152 = arith.mulf %151, %151 : vector<16x32xf32>
    %cst_63 = arith.constant dense<0.000000e+00> : vector<16xf32>
    %153 = vector.multi_reduction <add>, %152, %cst_63 [1] : vector<16x32xf32> to vector<16xf32>
    %154 = vector.shape_cast %153 : vector<16xf32> to vector<16x1xf32>
    %cst_64 = arith.constant 3.200000e+01 : f32
    %155 = vector.broadcast %cst_64 : f32 to vector<16x1xf32>
    %156 = arith.divf %154, %155 : vector<16x1xf32>
    %cst_65 = arith.constant 9.99999974E-6 : f32
    %157 = vector.broadcast %cst_65 : f32 to vector<16x1xf32>
    %158 = arith.addf %156, %157 : vector<16x1xf32>
    %159 = math.rsqrt %158 : vector<16x1xf32>
    %160 = vector.broadcast %149 : vector<16x1xf32> to vector<16x32xf32>
    %161 = arith.subf %141, %160 : vector<16x32xf32>
    %162 = vector.broadcast %159 : vector<16x1xf32> to vector<16x32xf32>
    %163 = arith.mulf %161, %162 : vector<16x32xf32>
    %164 = vector.broadcast %143 : vector<1x32xf32> to vector<16x32xf32>
    %165 = arith.mulf %163, %164 : vector<16x32xf32>
    %166 = vector.broadcast %145 : vector<1x32xf32> to vector<16x32xf32>
    %167 = arith.addf %165, %166 : vector<16x32xf32>
    %c1 = arith.constant 1 : index
    %c0_66 = arith.constant 0 : index
    %c0_67 = arith.constant 0 : index
    %168 = vector.load %arg3[%c1, %c0_66, %c0_67] : memref<2x168x128xf32, #tpu.memory_space<vmem>>, vector<1x32x96xf32>
    %169 = vector.shape_cast %168 : vector<1x32x96xf32> to vector<32x96xf32>
    %cst_68 = arith.constant dense<0.000000e+00> : vector<16x96xf32>
    %170 = tpu.matmul %167, %169, %cst_68 {dimension_numbers = #tpu.dot_dimension_numbers<[1], [0], [0], [1], [0, 0, 1, 1], [], []>} : vector<16x32xf32>, vector<32x96xf32>, vector<16x96xf32> -> vector<16x96xf32>
    %c1_69 = arith.constant 1 : index
    %c160_70 = arith.constant 160 : index
    %c0_71 = arith.constant 0 : index
    %171 = vector.load %arg3[%c1_69, %c160_70, %c0_71] : memref<2x168x128xf32, #tpu.memory_space<vmem>>, vector<1x1x96xf32>
    %172 = vector.shape_cast %171 : vector<1x1x96xf32> to vector<1x96xf32>
    %173 = vector.broadcast %172 : vector<1x96xf32> to vector<16x96xf32>
    %174 = arith.addf %170, %173 : vector<16x96xf32>
    %175 = vector.extract_strided_slice %174 {offsets = [0, 0], sizes = [16, 32], strides = [1, 1]} : vector<16x96xf32> to vector<16x32xf32>
    %176 = vector.shape_cast %175 : vector<16x32xf32> to vector<2x8x32xf32>
    %177 = vector.extract_strided_slice %174 {offsets = [0, 32], sizes = [16, 32], strides = [1, 1]} : vector<16x96xf32> to vector<16x32xf32>
    %178 = vector.shape_cast %177 : vector<16x32xf32> to vector<2x8x32xf32>
    %179 = vector.extract_strided_slice %174 {offsets = [0, 64], sizes = [16, 32], strides = [1, 1]} : vector<16x96xf32> to vector<16x32xf32>
    %180 = vector.shape_cast %179 : vector<16x32xf32> to vector<2x8x32xf32>
    %181 = vector.extract_strided_slice %176 {offsets = [0, 0, 0], sizes = [2, 8, 8], strides = [1, 1, 1]} : vector<2x8x32xf32> to vector<2x8x8xf32>
    %182 = vector.extract_strided_slice %178 {offsets = [0, 0, 0], sizes = [2, 8, 8], strides = [1, 1, 1]} : vector<2x8x32xf32> to vector<2x8x8xf32>
    "tpu.trace_start"() <{level = 10 : i32, message = "bqd,bkd->bqk"}> : () -> ()
    %cst_72 = arith.constant dense<0.000000e+00> : vector<2x8x8xf32>
    %183 = tpu.matmul %181, %182, %cst_72 {dimension_numbers = #tpu.dot_dimension_numbers<[2], [2], [1], [1], [0, 0, 0, 1, 1, 1], [0], [0]>} : vector<2x8x8xf32>, vector<2x8x8xf32>, vector<2x8x8xf32> -> vector<2x8x8xf32>
    "tpu.trace_stop"() : () -> ()
    %cst_73 = arith.constant 0.353553385 : f32
    %184 = vector.broadcast %cst_73 : f32 to vector<2x8x8xf32>
    %185 = arith.mulf %183, %184 : vector<2x8x8xf32>
    %cst_74 = arith.constant dense<0xFF800000> : vector<2x8xf32>
    %186 = vector.multi_reduction <maximumf>, %185, %cst_74 [2] : vector<2x8x8xf32> to vector<2x8xf32>
    %187 = vector.shape_cast %186 : vector<2x8xf32> to vector<2x8x1xf32>
    %188 = vector.broadcast %187 : vector<2x8x1xf32> to vector<2x8x8xf32>
    %189 = arith.subf %185, %188 : vector<2x8x8xf32>
    %190 = math.exp %189 : vector<2x8x8xf32>
    %cst_75 = arith.constant dense<0.000000e+00> : vector<2x8xf32>
    %191 = vector.multi_reduction <add>, %190, %cst_75 [2] : vector<2x8x8xf32> to vector<2x8xf32>
    %192 = vector.shape_cast %191 : vector<2x8xf32> to vector<2x8x1xf32>
    %193 = vector.broadcast %192 : vector<2x8x1xf32> to vector<2x8x8xf32>
    %194 = arith.divf %190, %193 : vector<2x8x8xf32>
    %195 = vector.extract_strided_slice %180 {offsets = [0, 0, 0], sizes = [2, 8, 8], strides = [1, 1, 1]} : vector<2x8x32xf32> to vector<2x8x8xf32>
    "tpu.trace_start"() <{level = 10 : i32, message = "bqk,bkd->bqd"}> : () -> ()
    %cst_76 = arith.constant dense<0.000000e+00> : vector<2x8x8xf32>
    %196 = tpu.matmul %194, %195, %cst_76 {dimension_numbers = #tpu.dot_dimension_numbers<[2], [1], [1], [2], [0, 0, 0, 1, 1, 2], [0], [0]>} : vector<2x8x8xf32>, vector<2x8x8xf32>, vector<2x8x8xf32> -> vector<2x8x8xf32>
    "tpu.trace_stop"() : () -> ()
    %197 = vector.extract_strided_slice %176 {offsets = [0, 0, 8], sizes = [2, 8, 8], strides = [1, 1, 1]} : vector<2x8x32xf32> to vector<2x8x8xf32>
    %198 = vector.extract_strided_slice %178 {offsets = [0, 0, 8], sizes = [2, 8, 8], strides = [1, 1, 1]} : vector<2x8x32xf32> to vector<2x8x8xf32>
    "tpu.trace_start"() <{level = 10 : i32, message = "bqd,bkd->bqk"}> : () -> ()
    %cst_77 = arith.constant dense<0.000000e+00> : vector<2x8x8xf32>
    %199 = tpu.matmul %197, %198, %cst_77 {dimension_numbers = #tpu.dot_dimension_numbers<[2], [2], [1], [1], [0, 0, 0, 1, 1, 1], [0], [0]>} : vector<2x8x8xf32>, vector<2x8x8xf32>, vector<2x8x8xf32> -> vector<2x8x8xf32>
    "tpu.trace_stop"() : () -> ()
    %cst_78 = arith.constant 0.353553385 : f32
    %200 = vector.broadcast %cst_78 : f32 to vector<2x8x8xf32>
    %201 = arith.mulf %199, %200 : vector<2x8x8xf32>
    %cst_79 = arith.constant dense<0xFF800000> : vector<2x8xf32>
    %202 = vector.multi_reduction <maximumf>, %201, %cst_79 [2] : vector<2x8x8xf32> to vector<2x8xf32>
    %203 = vector.shape_cast %202 : vector<2x8xf32> to vector<2x8x1xf32>
    %204 = vector.broadcast %203 : vector<2x8x1xf32> to vector<2x8x8xf32>
    %205 = arith.subf %201, %204 : vector<2x8x8xf32>
    %206 = math.exp %205 : vector<2x8x8xf32>
    %cst_80 = arith.constant dense<0.000000e+00> : vector<2x8xf32>
    %207 = vector.multi_reduction <add>, %206, %cst_80 [2] : vector<2x8x8xf32> to vector<2x8xf32>
    %208 = vector.shape_cast %207 : vector<2x8xf32> to vector<2x8x1xf32>
    %209 = vector.broadcast %208 : vector<2x8x1xf32> to vector<2x8x8xf32>
    %210 = arith.divf %206, %209 : vector<2x8x8xf32>
    %211 = vector.extract_strided_slice %180 {offsets = [0, 0, 8], sizes = [2, 8, 8], strides = [1, 1, 1]} : vector<2x8x32xf32> to vector<2x8x8xf32>
    "tpu.trace_start"() <{level = 10 : i32, message = "bqk,bkd->bqd"}> : () -> ()
    %cst_81 = arith.constant dense<0.000000e+00> : vector<2x8x8xf32>
    %212 = tpu.matmul %210, %211, %cst_81 {dimension_numbers = #tpu.dot_dimension_numbers<[2], [1], [1], [2], [0, 0, 0, 1, 1, 2], [0], [0]>} : vector<2x8x8xf32>, vector<2x8x8xf32>, vector<2x8x8xf32> -> vector<2x8x8xf32>
    "tpu.trace_stop"() : () -> ()
    %213 = vector.extract_strided_slice %176 {offsets = [0, 0, 16], sizes = [2, 8, 8], strides = [1, 1, 1]} : vector<2x8x32xf32> to vector<2x8x8xf32>
    %214 = vector.extract_strided_slice %178 {offsets = [0, 0, 16], sizes = [2, 8, 8], strides = [1, 1, 1]} : vector<2x8x32xf32> to vector<2x8x8xf32>
    "tpu.trace_start"() <{level = 10 : i32, message = "bqd,bkd->bqk"}> : () -> ()
    %cst_82 = arith.constant dense<0.000000e+00> : vector<2x8x8xf32>
    %215 = tpu.matmul %213, %214, %cst_82 {dimension_numbers = #tpu.dot_dimension_numbers<[2], [2], [1], [1], [0, 0, 0, 1, 1, 1], [0], [0]>} : vector<2x8x8xf32>, vector<2x8x8xf32>, vector<2x8x8xf32> -> vector<2x8x8xf32>
    "tpu.trace_stop"() : () -> ()
    %cst_83 = arith.constant 0.353553385 : f32
    %216 = vector.broadcast %cst_83 : f32 to vector<2x8x8xf32>
    %217 = arith.mulf %215, %216 : vector<2x8x8xf32>
    %cst_84 = arith.constant dense<0xFF800000> : vector<2x8xf32>
    %218 = vector.multi_reduction <maximumf>, %217, %cst_84 [2] : vector<2x8x8xf32> to vector<2x8xf32>
    %219 = vector.shape_cast %218 : vector<2x8xf32> to vector<2x8x1xf32>
    %220 = vector.broadcast %219 : vector<2x8x1xf32> to vector<2x8x8xf32>
    %221 = arith.subf %217, %220 : vector<2x8x8xf32>
    %222 = math.exp %221 : vector<2x8x8xf32>
    %cst_85 = arith.constant dense<0.000000e+00> : vector<2x8xf32>
    %223 = vector.multi_reduction <add>, %222, %cst_85 [2] : vector<2x8x8xf32> to vector<2x8xf32>
    %224 = vector.shape_cast %223 : vector<2x8xf32> to vector<2x8x1xf32>
    %225 = vector.broadcast %224 : vector<2x8x1xf32> to vector<2x8x8xf32>
    %226 = arith.divf %222, %225 : vector<2x8x8xf32>
    %227 = vector.extract_strided_slice %180 {offsets = [0, 0, 16], sizes = [2, 8, 8], strides = [1, 1, 1]} : vector<2x8x32xf32> to vector<2x8x8xf32>
    "tpu.trace_start"() <{level = 10 : i32, message = "bqk,bkd->bqd"}> : () -> ()
    %cst_86 = arith.constant dense<0.000000e+00> : vector<2x8x8xf32>
    %228 = tpu.matmul %226, %227, %cst_86 {dimension_numbers = #tpu.dot_dimension_numbers<[2], [1], [1], [2], [0, 0, 0, 1, 1, 2], [0], [0]>} : vector<2x8x8xf32>, vector<2x8x8xf32>, vector<2x8x8xf32> -> vector<2x8x8xf32>
    "tpu.trace_stop"() : () -> ()
    %229 = vector.extract_strided_slice %176 {offsets = [0, 0, 24], sizes = [2, 8, 8], strides = [1, 1, 1]} : vector<2x8x32xf32> to vector<2x8x8xf32>
    %230 = vector.extract_strided_slice %178 {offsets = [0, 0, 24], sizes = [2, 8, 8], strides = [1, 1, 1]} : vector<2x8x32xf32> to vector<2x8x8xf32>
    "tpu.trace_start"() <{level = 10 : i32, message = "bqd,bkd->bqk"}> : () -> ()
    %cst_87 = arith.constant dense<0.000000e+00> : vector<2x8x8xf32>
    %231 = tpu.matmul %229, %230, %cst_87 {dimension_numbers = #tpu.dot_dimension_numbers<[2], [2], [1], [1], [0, 0, 0, 1, 1, 1], [0], [0]>} : vector<2x8x8xf32>, vector<2x8x8xf32>, vector<2x8x8xf32> -> vector<2x8x8xf32>
    "tpu.trace_stop"() : () -> ()
    %cst_88 = arith.constant 0.353553385 : f32
    %232 = vector.broadcast %cst_88 : f32 to vector<2x8x8xf32>
    %233 = arith.mulf %231, %232 : vector<2x8x8xf32>
    %cst_89 = arith.constant dense<0xFF800000> : vector<2x8xf32>
    %234 = vector.multi_reduction <maximumf>, %233, %cst_89 [2] : vector<2x8x8xf32> to vector<2x8xf32>
    %235 = vector.shape_cast %234 : vector<2x8xf32> to vector<2x8x1xf32>
    %236 = vector.broadcast %235 : vector<2x8x1xf32> to vector<2x8x8xf32>
    %237 = arith.subf %233, %236 : vector<2x8x8xf32>
    %238 = math.exp %237 : vector<2x8x8xf32>
    %cst_90 = arith.constant dense<0.000000e+00> : vector<2x8xf32>
    %239 = vector.multi_reduction <add>, %238, %cst_90 [2] : vector<2x8x8xf32> to vector<2x8xf32>
    %240 = vector.shape_cast %239 : vector<2x8xf32> to vector<2x8x1xf32>
    %241 = vector.broadcast %240 : vector<2x8x1xf32> to vector<2x8x8xf32>
    %242 = arith.divf %238, %241 : vector<2x8x8xf32>
    %243 = vector.extract_strided_slice %180 {offsets = [0, 0, 24], sizes = [2, 8, 8], strides = [1, 1, 1]} : vector<2x8x32xf32> to vector<2x8x8xf32>
    "tpu.trace_start"() <{level = 10 : i32, message = "bqk,bkd->bqd"}> : () -> ()
    %cst_91 = arith.constant dense<0.000000e+00> : vector<2x8x8xf32>
    %244 = tpu.matmul %242, %243, %cst_91 {dimension_numbers = #tpu.dot_dimension_numbers<[2], [1], [1], [2], [0, 0, 0, 1, 1, 2], [0], [0]>} : vector<2x8x8xf32>, vector<2x8x8xf32>, vector<2x8x8xf32> -> vector<2x8x8xf32>
    "tpu.trace_stop"() : () -> ()
    %245 = tpu.concatenate %196, %212, %228, %244 in 2 : vector<2x8x8xf32>, vector<2x8x8xf32>, vector<2x8x8xf32>, vector<2x8x8xf32> -> vector<2x8x32xf32>
    %246 = vector.shape_cast %245 : vector<2x8x32xf32> to vector<16x32xf32>
    %c1_92 = arith.constant 1 : index
    %c32_93 = arith.constant 32 : index
    %c0_94 = arith.constant 0 : index
    %247 = vector.load %arg3[%c1_92, %c32_93, %c0_94] : memref<2x168x128xf32, #tpu.memory_space<vmem>>, vector<1x32x32xf32>
    %248 = vector.shape_cast %247 : vector<1x32x32xf32> to vector<32x32xf32>
    %cst_95 = arith.constant dense<0.000000e+00> : vector<16x32xf32>
    %249 = tpu.matmul %246, %248, %cst_95 {dimension_numbers = #tpu.dot_dimension_numbers<[1], [0], [0], [1], [0, 0, 1, 1], [], []>} : vector<16x32xf32>, vector<32x32xf32>, vector<16x32xf32> -> vector<16x32xf32>
    %c1_96 = arith.constant 1 : index
    %c161_97 = arith.constant 161 : index
    %c0_98 = arith.constant 0 : index
    %250 = vector.load %arg3[%c1_96, %c161_97, %c0_98] : memref<2x168x128xf32, #tpu.memory_space<vmem>>, vector<1x1x32xf32>
    %251 = vector.shape_cast %250 : vector<1x1x32xf32> to vector<1x32xf32>
    %252 = vector.broadcast %251 : vector<1x32xf32> to vector<16x32xf32>
    %253 = arith.addf %249, %252 : vector<16x32xf32>
    %254 = arith.addf %167, %253 : vector<16x32xf32>
    %c1_99 = arith.constant 1 : index
    %c162_100 = arith.constant 162 : index
    %c0_101 = arith.constant 0 : index
    %255 = vector.load %arg3[%c1_99, %c162_100, %c0_101] : memref<2x168x128xf32, #tpu.memory_space<vmem>>, vector<1x1x32xf32>
    %256 = vector.shape_cast %255 : vector<1x1x32xf32> to vector<1x32xf32>
    %c1_102 = arith.constant 1 : index
    %c163_103 = arith.constant 163 : index
    %c0_104 = arith.constant 0 : index
    %257 = vector.load %arg3[%c1_102, %c163_103, %c0_104] : memref<2x168x128xf32, #tpu.memory_space<vmem>>, vector<1x1x32xf32>
    %258 = vector.shape_cast %257 : vector<1x1x32xf32> to vector<1x32xf32>
    %cst_105 = arith.constant dense<0.000000e+00> : vector<16xf32>
    %259 = vector.multi_reduction <add>, %254, %cst_105 [1] : vector<16x32xf32> to vector<16xf32>
    %260 = vector.shape_cast %259 : vector<16xf32> to vector<16x1xf32>
    %cst_106 = arith.constant 3.200000e+01 : f32
    %261 = vector.broadcast %cst_106 : f32 to vector<16x1xf32>
    %262 = arith.divf %260, %261 : vector<16x1xf32>
    %263 = vector.broadcast %262 : vector<16x1xf32> to vector<16x32xf32>
    %264 = arith.subf %254, %263 : vector<16x32xf32>
    %265 = arith.mulf %264, %264 : vector<16x32xf32>
    %cst_107 = arith.constant dense<0.000000e+00> : vector<16xf32>
    %266 = vector.multi_reduction <add>, %265, %cst_107 [1] : vector<16x32xf32> to vector<16xf32>
    %267 = vector.shape_cast %266 : vector<16xf32> to vector<16x1xf32>
    %cst_108 = arith.constant 3.200000e+01 : f32
    %268 = vector.broadcast %cst_108 : f32 to vector<16x1xf32>
    %269 = arith.divf %267, %268 : vector<16x1xf32>
    %cst_109 = arith.constant 9.99999974E-6 : f32
    %270 = vector.broadcast %cst_109 : f32 to vector<16x1xf32>
    %271 = arith.addf %269, %270 : vector<16x1xf32>
    %272 = math.rsqrt %271 : vector<16x1xf32>
    %273 = vector.broadcast %262 : vector<16x1xf32> to vector<16x32xf32>
    %274 = arith.subf %254, %273 : vector<16x32xf32>
    %275 = vector.broadcast %272 : vector<16x1xf32> to vector<16x32xf32>
    %276 = arith.mulf %274, %275 : vector<16x32xf32>
    %277 = vector.broadcast %256 : vector<1x32xf32> to vector<16x32xf32>
    %278 = arith.mulf %276, %277 : vector<16x32xf32>
    %279 = vector.broadcast %258 : vector<1x32xf32> to vector<16x32xf32>
    %280 = arith.addf %278, %279 : vector<16x32xf32>
    %c1_110 = arith.constant 1 : index
    %c64_111 = arith.constant 64 : index
    %c0_112 = arith.constant 0 : index
    %281 = vector.load %arg3[%c1_110, %c64_111, %c0_112] : memref<2x168x128xf32, #tpu.memory_space<vmem>>, vector<1x32x64xf32>
    %282 = vector.shape_cast %281 : vector<1x32x64xf32> to vector<32x64xf32>
    %cst_113 = arith.constant dense<0.000000e+00> : vector<16x64xf32>
    %283 = tpu.matmul %280, %282, %cst_113 {dimension_numbers = #tpu.dot_dimension_numbers<[1], [0], [0], [1], [0, 0, 1, 1], [], []>} : vector<16x32xf32>, vector<32x64xf32>, vector<16x64xf32> -> vector<16x64xf32>
    %c1_114 = arith.constant 1 : index
    %c164_115 = arith.constant 164 : index
    %c0_116 = arith.constant 0 : index
    %284 = vector.load %arg3[%c1_114, %c164_115, %c0_116] : memref<2x168x128xf32, #tpu.memory_space<vmem>>, vector<1x1x64xf32>
    %285 = vector.shape_cast %284 : vector<1x1x64xf32> to vector<1x64xf32>
    %286 = vector.broadcast %285 : vector<1x64xf32> to vector<16x64xf32>
    %287 = arith.addf %283, %286 : vector<16x64xf32>
    %cst_117 = arith.constant 0.000000e+00 : f32
    %288 = vector.broadcast %cst_117 : f32 to vector<16x64xf32>
    %289 = arith.maximumf %287, %288 : vector<16x64xf32>
    %c1_118 = arith.constant 1 : index
    %c96_119 = arith.constant 96 : index
    %c0_120 = arith.constant 0 : index
    %290 = vector.load %arg3[%c1_118, %c96_119, %c0_120] : memref<2x168x128xf32, #tpu.memory_space<vmem>>, vector<1x64x32xf32>
    %291 = vector.shape_cast %290 : vector<1x64x32xf32> to vector<64x32xf32>
    %cst_121 = arith.constant dense<0.000000e+00> : vector<16x32xf32>
    %292 = tpu.matmul %289, %291, %cst_121 {dimension_numbers = #tpu.dot_dimension_numbers<[1], [0], [0], [1], [0, 0, 1, 1], [], []>} : vector<16x64xf32>, vector<64x32xf32>, vector<16x32xf32> -> vector<16x32xf32>
    %c1_122 = arith.constant 1 : index
    %c165_123 = arith.constant 165 : index
    %c0_124 = arith.constant 0 : index
    %293 = vector.load %arg3[%c1_122, %c165_123, %c0_124] : memref<2x168x128xf32, #tpu.memory_space<vmem>>, vector<1x1x32xf32>
    %294 = vector.shape_cast %293 : vector<1x1x32xf32> to vector<1x32xf32>
    %295 = vector.broadcast %294 : vector<1x32xf32> to vector<16x32xf32>
    %296 = arith.addf %292, %295 : vector<16x32xf32>
    %297 = arith.addf %280, %296 : vector<16x32xf32>
    %c1_125 = arith.constant 1 : index
    %c166_126 = arith.constant 166 : index
    %c0_127 = arith.constant 0 : index
    %298 = vector.load %arg3[%c1_125, %c166_126, %c0_127] : memref<2x168x128xf32, #tpu.memory_space<vmem>>, vector<1x1x32xf32>
    %299 = vector.shape_cast %298 : vector<1x1x32xf32> to vector<1x32xf32>
    %c1_128 = arith.constant 1 : index
    %c167_129 = arith.constant 167 : index
    %c0_130 = arith.constant 0 : index
    %300 = vector.load %arg3[%c1_128, %c167_129, %c0_130] : memref<2x168x128xf32, #tpu.memory_space<vmem>>, vector<1x1x32xf32>
    %301 = vector.shape_cast %300 : vector<1x1x32xf32> to vector<1x32xf32>
    %cst_131 = arith.constant dense<0.000000e+00> : vector<16xf32>
    %302 = vector.multi_reduction <add>, %297, %cst_131 [1] : vector<16x32xf32> to vector<16xf32>
    %303 = vector.shape_cast %302 : vector<16xf32> to vector<16x1xf32>
    %cst_132 = arith.constant 3.200000e+01 : f32
    %304 = vector.broadcast %cst_132 : f32 to vector<16x1xf32>
    %305 = arith.divf %303, %304 : vector<16x1xf32>
    %306 = vector.broadcast %305 : vector<16x1xf32> to vector<16x32xf32>
    %307 = arith.subf %297, %306 : vector<16x32xf32>
    %308 = arith.mulf %307, %307 : vector<16x32xf32>
    %cst_133 = arith.constant dense<0.000000e+00> : vector<16xf32>
    %309 = vector.multi_reduction <add>, %308, %cst_133 [1] : vector<16x32xf32> to vector<16xf32>
    %310 = vector.shape_cast %309 : vector<16xf32> to vector<16x1xf32>
    %cst_134 = arith.constant 3.200000e+01 : f32
    %311 = vector.broadcast %cst_134 : f32 to vector<16x1xf32>
    %312 = arith.divf %310, %311 : vector<16x1xf32>
    %cst_135 = arith.constant 9.99999974E-6 : f32
    %313 = vector.broadcast %cst_135 : f32 to vector<16x1xf32>
    %314 = arith.addf %312, %313 : vector<16x1xf32>
    %315 = math.rsqrt %314 : vector<16x1xf32>
    %316 = vector.broadcast %305 : vector<16x1xf32> to vector<16x32xf32>
    %317 = arith.subf %297, %316 : vector<16x32xf32>
    %318 = vector.broadcast %315 : vector<16x1xf32> to vector<16x32xf32>
    %319 = arith.mulf %317, %318 : vector<16x32xf32>
    %320 = vector.broadcast %299 : vector<1x32xf32> to vector<16x32xf32>
    %321 = arith.mulf %319, %320 : vector<16x32xf32>
    %322 = vector.broadcast %301 : vector<1x32xf32> to vector<16x32xf32>
    %323 = arith.addf %321, %322 : vector<16x32xf32>
    %324 = vector.shape_cast %323 : vector<16x32xf32> to vector<2x8x32xf32>
    %cst_136 = arith.constant dense<0xFF800000> : vector<2x32xf32>
    %325 = vector.multi_reduction <maximumf>, %324, %cst_136 [1] : vector<2x8x32xf32> to vector<2x32xf32>
    %cst_137 = arith.constant 0.000000e+00 : f32
    %326 = vector.broadcast %cst_137 : f32 to vector<6x32xf32>
    %327 = tpu.concatenate %325, %326 in 0 : vector<2x32xf32>, vector<6x32xf32> -> vector<8x32xf32>
    %c16 = arith.constant 16 : index
    %c0_138 = arith.constant 0 : index
    %328 = vector.load %arg2[%c16, %c0_138] : memref<56x128xf32, #tpu.memory_space<vmem>>, vector<32x128xf32>
    %cst_139 = arith.constant dense<0.000000e+00> : vector<8x128xf32>
    %329 = tpu.matmul %327, %328, %cst_139 {dimension_numbers = #tpu.dot_dimension_numbers<[1], [0], [0], [1], [0, 0, 1, 1], [], []>} : vector<8x32xf32>, vector<32x128xf32>, vector<8x128xf32> -> vector<8x128xf32>
    %c49 = arith.constant 49 : index
    %c0_140 = arith.constant 0 : index
    %330 = vector.load %arg2[%c49, %c0_140] : memref<56x128xf32, #tpu.memory_space<vmem>>, vector<1x128xf32>
    %331 = vector.broadcast %330 : vector<1x128xf32> to vector<8x128xf32>
    %332 = arith.addf %329, %331 : vector<8x128xf32>
    %c0_141 = arith.constant 0 : index
    %c0_142 = arith.constant 0 : index
    %333 = vector.load %arg4[%c0_141, %c0_142] : memref<8x128xf32, #tpu.memory_space<vmem>>, vector<8x128xf32>
    tpu.vector_store %arg4[%c0_141, %c0_142], %332 {strides = array<i32>} : memref<8x128xf32, #tpu.memory_space<vmem>>, vector<8x128xf32>,
    return
  }
}

</mosaic_0001>

<llo_original>
// kernel: tpu_custom_call.1
$region0: #{tpu_custom_call.1}
  #allocation0 [shape = 'u32[]', space=smem, size = 0x4, offset = 0x4, fixed_abs, tag = 'smem constant byte address 0x4 - core index']
  #allocation1 [shape = 'u32[144,128]{1,0:T(1,128)}', space=vmem, size = 0x12000, scoped, tag = 'internal scratch']
  %s0 = inlined_call_operand.hbm [shape: f32[16,16], index: 0, kind: input, shape index: {}]
  %s1 = inlined_call_operand.hbm [shape: f32[8,32], index: 1, kind: input, shape index: {}]
  %s2 = inlined_call_operand.hbm [shape: f32[56,128], index: 2, kind: input, shape index: {}]
  %s3 = inlined_call_operand.hbm [shape: f32[2,168,128], index: 3, kind: input, shape index: {}]
  %s4 = inlined_call_operand.hbm [shape: f32[8,128], index: 4, kind: output, shape index: {}]
  %s5 = sld [smem:[#allocation0]]
  $region42: #{tpu_custom_call.1} parent=0
    _
  %s7 = ssub.s32 1, %s5
  %s8 = scalar_select 0, %s7, %s5
  $region1: #{tpu_custom_call.1} parent=0
    #allocation2 [shape = 'u8[8192]{0}', space=vmem, size = 0x2000, scoped, tag = 'input window, operand 0, single buffered']
    #allocation3 [shape = 's32[1]{0}', space=sflag, size = 0x4, scoped, tag = 'scoped memory for tpu_custom_call.1']
    #allocation4 [shape = 's32[1]{0}', space=sflag, size = 0x4, scoped, tag = 'scoped memory for tpu_custom_call.1']
    #allocation5 [shape = 'u8[4096]{0}', space=vmem, size = 0x1000, scoped, tag = 'input window, operand 1, single buffered']
    #allocation6 [shape = 's32[1]{0}', space=sflag, size = 0x4, scoped, tag = 'scoped memory for tpu_custom_call.1']
    #allocation7 [shape = 'u8[28672]{0}', space=vmem, size = 0x7000, scoped, tag = 'input window, operand 2, single buffered']
    #allocation8 [shape = 'u8[172032]{0}', space=vmem, size = 0x2a000, scoped, tag = 'input window, operand 3, single buffered']
    #allocation9 [shape = 's32[1]{0}', space=sflag, size = 0x4, scoped, tag = 'scoped memory for tpu_custom_call.1']
    #allocation10 [shape = 'u8[4096]{0}', space=vmem, size = 0x1000, scoped, tag = 'output window, operand 0, single buffered']
    %9 = vsyncpa [#allocation3], 0
    %10 = vsyncpa [#allocation6], 0
    %11 = vsyncpa [#allocation9], 0
    %12 = vsyncpa [#allocation4], 0
    // Predicated region
    $region2: #{tpu_custom_call.1} parent=1 // pred_check
      _
    $region3: #{tpu_custom_call.1} parent=1 // pred_check_branch
      %14 = sbr.rel (0) target = $region5
    $region4: #{tpu_custom_call.1} parent=1 // pred_region
      %s16 = ssub.s32 256, 256
      %17 = vsyncadd [#allocation3], %s16
      %s18 = sshll.u32 [#allocation2], 4
      %s19 = int_to_ptr.vmem [resolvable:$true] %s18
      %24 = dma.hbm_to_vmem [thread:$0]  %s0, 256, %s19, [#allocation3], 128, 128, 8
    $region5: #{tpu_custom_call.1} parent=1 // pred_fallthru
      _
    // Predicated region
    $region6: #{tpu_custom_call.1} parent=1 // pred_check
      _
    $region7: #{tpu_custom_call.1} parent=1 // pred_check_branch
      %26 = sbr.rel (0) target = $region9
    $region8: #{tpu_custom_call.1} parent=1 // pred_region
      %s28 = ssub.s32 128, 128
      %29 = vsyncadd [#allocation6], %s28
      %s31 = sshll.u32 [#allocation5], 4
      %s32 = int_to_ptr.vmem [resolvable:$true] %s31
      %34 = dma.hbm_to_vmem [thread:$0]  %s1, 128, %s32, [#allocation6]
    $region9: #{tpu_custom_call.1} parent=1 // pred_fallthru
      _
    // Predicated region
    $region10: #{tpu_custom_call.1} parent=1 // pred_check
      _
    $region11: #{tpu_custom_call.1} parent=1 // pred_check_branch
      %36 = sbr.rel (0) target = $region13
    $region12: #{tpu_custom_call.1} parent=1 // pred_region
      %s38 = ssub.s32 896, 896
      %39 = vsyncadd [#allocation6], %s38
      %s40 = sshll.u32 [#allocation7], 4
      %s41 = int_to_ptr.vmem [resolvable:$true] %s40
      %46 = dma.hbm_to_vmem [thread:$0]  %s2, 896, %s41, [#allocation6], 128, 128, 8
    $region13: #{tpu_custom_call.1} parent=1 // pred_fallthru
      _
    // Predicated region
    $region14: #{tpu_custom_call.1} parent=1 // pred_check
      _
    $region15: #{tpu_custom_call.1} parent=1 // pred_check_branch
      %48 = sbr.rel (0) target = $region17
    $region16: #{tpu_custom_call.1} parent=1 // pred_region
      %s50 = ssub.s32 5376, 5376
      %51 = vsyncadd [#allocation9], %s50
      %s52 = sshll.u32 [#allocation8], 4
      %s53 = int_to_ptr.vmem [resolvable:$true] %s52
      %58 = dma.hbm_to_vmem [thread:$0]  %s3, 5376, %s53, [#allocation9], 128, 128, 8
    $region17: #{tpu_custom_call.1} parent=1 // pred_fallthru
      _
    // Predicated region
    $region18: #{tpu_custom_call.1} parent=1 // pred_check
      _
    $region19: #{tpu_custom_call.1} parent=1 // pred_check_branch
      %60 = sbr.rel (0) target = $region21
    $region20: #{tpu_custom_call.1} parent=1 // pred_region
      %61 = dma.done [#allocation3], 256
    $region21: #{tpu_custom_call.1} parent=1 // pred_fallthru
      _
    // Predicated region
    $region22: #{tpu_custom_call.1} parent=1 // pred_check
      _
    $region23: #{tpu_custom_call.1} parent=1 // pred_check_branch
      %63 = sbr.rel (0) target = $region25
    $region24: #{tpu_custom_call.1} parent=1 // pred_region
      %64 = dma.done [#allocation6], 128
    $region25: #{tpu_custom_call.1} parent=1 // pred_fallthru
      _
    // Predicated region
    $region26: #{tpu_custom_call.1} parent=1 // pred_check
      _
    $region27: #{tpu_custom_call.1} parent=1 // pred_check_branch
      %66 = sbr.rel (0) target = $region29
    $region28: #{tpu_custom_call.1} parent=1 // pred_region
      %67 = dma.done [#allocation6], 896
    $region29: #{tpu_custom_call.1} parent=1 // pred_fallthru
      _
    // Predicated region
    $region30: #{tpu_custom_call.1} parent=1 // pred_check
      _
    $region31: #{tpu_custom_call.1} parent=1 // pred_check_branch
      %69 = sbr.rel (0) target = $region33
    $region32: #{tpu_custom_call.1} parent=1 // pred_region
      %70 = dma.done [#allocation9], 5376
    $region33: #{tpu_custom_call.1} parent=1 // pred_fallthru
      _
    %v71 = vld [vmem:[#allocation2] sm:$0xff]
    %v72 = vld [vmem:[#allocation2 + $0x8] sm:$0xff]
    %v73 = vld [vmem:[#allocation7] sm:$0xff]
    %v74 = vld [vmem:[#allocation7 + $0x8] sm:$0xff]
    %v75 = vld [vmem:[#allocation7 + $0x30] sm:$0x1]
    %v76 = vlaneseq
    %v77 = vshrl.u32 %v76, 7
    %v78 = vsub.s32 0, %v77
    %v79 = vrot.slane %v75, %v78
    %vm80 = vcmask 130048
    %v82 = vsel %vm80, %v71, 0
    %v85 = vsel %vm80, %v72, 0
    %87 = vmatprep.subr.mxu0 0.0
    %88 = vmatpush1.msra.mxu0 %v73
    %89 = vmatprep.subr.mxu0 0.0
    %90 = vmatpush1.msra.mxu0 %v74
    %91 = vmatprep.subr.mxu0 0.0
    %92 = vmatpush1.msra.mxu0 0.0
    %93 = vmatprep.subr.mxu0 0.0
    %94 = vmatpush1.msra.mxu0 0.0
    %95 = vmatprep.subr.mxu0 0.0
    %96 = vmatpush1.msra.mxu0 0.0
    %97 = vmatprep.subr.mxu0 0.0
    %98 = vmatpush1.msra.mxu0 0.0
    %99 = vmatprep.subr.mxu0 0.0
    %100 = vmatpush1.msra.mxu0 0.0
    %101 = vmatprep.subr.mxu0 0.0
    %102 = vmatpush1.msra.mxu0 0.0
    %103 = vmatprep.subr.mxu0 0.0
    %104 = vmatpush1.msra.mxu0 0.0
    %105 = vmatprep.subr.mxu0 0.0
    %106 = vmatpush1.msra.mxu0 0.0
    %107 = vmatprep.subr.mxu0 0.0
    %108 = vmatpush1.msra.mxu0 0.0
    %109 = vmatprep.subr.mxu0 0.0
    %110 = vmatpush1.msra.mxu0 0.0
    %111 = vmatprep.subr.mxu0 0.0
    %112 = vmatpush1.msra.mxu0 0.0
    %113 = vmatprep.subr.mxu0 0.0
    %114 = vmatpush1.msra.mxu0 0.0
    %115 = vmatprep.subr.mxu0 0.0
    %116 = vmatpush1.msra.mxu0 0.0
    %117 = vmatprep.subr.mxu0 0.0
    %118 = vmatpush1.msra.mxu0 0.0
    %119 = vmatprep.subr.mxu0 0.0
    %120 = vmatpush1.msra.mxu0 0.0
    %121 = vmatprep.subr.mxu0 0.0
    %122 = vmatpush1.msra.mxu0 0.0
    %123 = vmatprep.subr.mxu0 0.0
    %124 = vmatpush1.msra.mxu0 0.0
    %125 = vmatprep.subr.mxu0 0.0
    %126 = vmatpush1.msra.mxu0 0.0
    %127 = vmatprep.subr.mxu0 0.0
    %128 = vmatpush1.msra.mxu0 0.0
    %129 = vmatprep.subr.mxu0 0.0
    %130 = vmatpush1.msra.mxu0 0.0
    %131 = vmatprep.subr.mxu0 0.0
    %132 = vmatpush1.msra.mxu0 0.0
    %133 = vmatprep.subr.mxu0 0.0
    %134 = vmatpush1.msra.mxu0 0.0
    %135 = vmatprep.subr.mxu0 0.0
    %136 = vmatpush1.msra.mxu0 0.0
    %137 = vmatprep.subr.mxu0 0.0
    %138 = vmatpush1.msra.mxu0 0.0
    %139 = vmatprep.subr.mxu0 0.0
    %140 = vmatpush1.msra.mxu0 0.0
    %141 = vmatprep.subr.mxu0 0.0
    %142 = vmatpush1.msra.mxu0 0.0
    %143 = vmatprep.subr.mxu0 0.0
    %144 = vmatpush1.msra.mxu0 0.0
    %145 = vmatprep.subr.mxu0 0.0
    %146 = vmatpush1.msra.mxu0 0.0
    %147 = vmatprep.subr.mxu0 0.0
    %148 = vmatpush1.msra.mxu0 0.0
    %149 = vmatprep.subr.mxu0 0.0
    %150 = vmatpush1.msra.mxu0 0.0
    %151 = vmatprep.mubr.f32.mxu0 0.0
    %152 = vmatmul.mubr.f32.gmra.mrb[0].mxu0 %v82
    %v153 = vpop.f32.mrb[0].mxu0
    %v154 = vadd.f32 %v79, %v153
    %v155 = vpop.f32.mrb[0].mxu0
    %156 = vmatprep.mubr.f32.mxu0 0.0
    %157 = vmatmul.mubr.f32.gmra.mrb[0].mxu0 %v85
    %v158 = vpop.f32.mrb[0].mxu0
    %v159 = vadd.f32 %v79, %v158
    %v160 = vpop.f32.mrb[0].mxu0
    %161 = vdwg.mxu0
    %v162 = vld [vmem:[#allocation5] sm:$0xff]
    %v163 = vadd.f32 %v154, %v162
    %v164 = vadd.f32 %v159, %v162
    %v165 = vld [vmem:[#allocation8] sm:$0xff]
    %v166 = vld [vmem:[#allocation8 + $0x8] sm:$0xff]
    %v167 = vld [vmem:[#allocation8 + $0x10] sm:$0xff]
    %v168 = vld [vmem:[#allocation8 + $0x18] sm:$0xff]
    %v169 = vld [vmem:[#allocation8 + $0xa0] sm:$0x1]
    %v170 = vlaneseq
    %v171 = vshrl.u32 %v170, 7
    %v172 = vsub.s32 0, %v171
    %v173 = vrot.slane %v169, %v172
    %vm174 = vcmask 261120
    %v176 = vsel %vm174, %v163, 0
    %v179 = vsel %vm174, %v164, 0
    %181 = vmatprep.subr.mxu0 0.0
    %182 = vmatpush1.msra.mxu0 %v165
    %183 = vmatprep.subr.mxu0 0.0
    %184 = vmatpush1.msra.mxu0 %v166
    %185 = vmatprep.subr.mxu0 0.0
    %186 = vmatpush1.msra.mxu0 %v167
    %187 = vmatprep.subr.mxu0 0.0
    %188 = vmatpush1.msra.mxu0 %v168
    %189 = vmatprep.subr.mxu0 0.0
    %190 = vmatpush1.msra.mxu0 0.0
    %191 = vmatprep.subr.mxu0 0.0
    %192 = vmatpush1.msra.mxu0 0.0
    %193 = vmatprep.subr.mxu0 0.0
    %194 = vmatpush1.msra.mxu0 0.0
    %195 = vmatprep.subr.mxu0 0.0
    %196 = vmatpush1.msra.mxu0 0.0
    %197 = vmatprep.subr.mxu0 0.0
    %198 = vmatpush1.msra.mxu0 0.0
    %199 = vmatprep.subr.mxu0 0.0
    %200 = vmatpush1.msra.mxu0 0.0
    %201 = vmatprep.subr.mxu0 0.0
    %202 = vmatpush1.msra.mxu0 0.0
    %203 = vmatprep.subr.mxu0 0.0
    %204 = vmatpush1.msra.mxu0 0.0
    %205 = vmatprep.subr.mxu0 0.0
    %206 = vmatpush1.msra.mxu0 0.0
    %207 = vmatprep.subr.mxu0 0.0
    %208 = vmatpush1.msra.mxu0 0.0
    %209 = vmatprep.subr.mxu0 0.0
    %210 = vmatpush1.msra.mxu0 0.0
    %211 = vmatprep.subr.mxu0 0.0
    %212 = vmatpush1.msra.mxu0 0.0
    %213 = vmatprep.subr.mxu0 0.0
    %214 = vmatpush1.msra.mxu0 0.0
    %215 = vmatprep.subr.mxu0 0.0
    %216 = vmatpush1.msra.mxu0 0.0
    %217 = vmatprep.subr.mxu0 0.0
    %218 = vmatpush1.msra.mxu0 0.0
    %219 = vmatprep.subr.mxu0 0.0
    %220 = vmatpush1.msra.mxu0 0.0
    %221 = vmatprep.subr.mxu0 0.0
    %222 = vmatpush1.msra.mxu0 0.0
    %223 = vmatprep.subr.mxu0 0.0
    %224 = vmatpush1.msra.mxu0 0.0
    %225 = vmatprep.subr.mxu0 0.0
    %226 = vmatpush1.msra.mxu0 0.0
    %227 = vmatprep.subr.mxu0 0.0
    %228 = vmatpush1.msra.mxu0 0.0
    %229 = vmatprep.subr.mxu0 0.0
    %230 = vmatpush1.msra.mxu0 0.0
    %231 = vmatprep.subr.mxu0 0.0
    %232 = vmatpush1.msra.mxu0 0.0
    %233 = vmatprep.subr.mxu0 0.0
    %234 = vmatpush1.msra.mxu0 0.0
    %235 = vmatprep.subr.mxu0 0.0
    %236 = vmatpush1.msra.mxu0 0.0
    %237 = vmatprep.subr.mxu0 0.0
    %238 = vmatpush1.msra.mxu0 0.0
    %239 = vmatprep.subr.mxu0 0.0
    %240 = vmatpush1.msra.mxu0 0.0
    %241 = vmatprep.subr.mxu0 0.0
    %242 = vmatpush1.msra.mxu0 0.0
    %243 = vmatprep.subr.mxu0 0.0
    %244 = vmatpush1.msra.mxu0 0.0
    %245 = vmatprep.mubr.f32.mxu0 0.0
    %246 = vmatmul.mubr.f32.gmra.mrb[0].mxu0 %v176
    %v247 = vpop.f32.mrb[0].mxu0
    %v248 = vadd.f32 %v173, %v247
    %v249 = vpop.f32.mrb[0].mxu0
    %250 = vmatprep.mubr.f32.mxu0 0.0
    %251 = vmatmul.mubr.f32.gmra.mrb[0].mxu0 %v179
    %v252 = vpop.f32.mrb[0].mxu0
    %v253 = vadd.f32 %v173, %v252
    %v254 = vpop.f32.mrb[0].mxu0
    %255 = vdwg.mxu0
    %257 = vrot.lane.b32.xlu0 %v248, 96
    %v258 = vpop.permute.xlu0 %257
    %vm259 = vcmask 64512
    %v260 = vsel %vm259, %v248, 0
    %v262 = vsel %vm259, %v258, 0
    %264 = vmatprep.subr.mxu0 0.0
    %265 = vmatpush1.xpose.msra.mxu0 %v262
    %266 = vmatprep.subr.mxu0 0.0
    %267 = vmatpush1.xpose.msra.mxu0 0.0
    %268 = vmatprep.subr.mxu0 0.0
    %269 = vmatpush1.xpose.msra.mxu0 0.0
    %270 = vmatprep.subr.mxu0 0.0
    %271 = vmatpush1.xpose.msra.mxu0 0.0
    %272 = vmatprep.subr.mxu0 0.0
    %273 = vmatpush1.xpose.msra.mxu0 0.0
    %274 = vmatprep.subr.mxu0 0.0
    %275 = vmatpush1.xpose.msra.mxu0 0.0
    %276 = vmatprep.subr.mxu0 0.0
    %277 = vmatpush1.xpose.msra.mxu0 0.0
    %278 = vmatprep.subr.mxu0 0.0
    %279 = vmatpush1.xpose.msra.mxu0 0.0
    %280 = vmatprep.subr.mxu0 0.0
    %281 = vmatpush1.xpose.msra.mxu0 0.0
    %282 = vmatprep.subr.mxu0 0.0
    %283 = vmatpush1.xpose.msra.mxu0 0.0
    %284 = vmatprep.subr.mxu0 0.0
    %285 = vmatpush1.xpose.msra.mxu0 0.0
    %286 = vmatprep.subr.mxu0 0.0
    %287 = vmatpush1.xpose.msra.mxu0 0.0
    %288 = vmatprep.subr.mxu0 0.0
    %289 = vmatpush1.xpose.msra.mxu0 0.0
    %290 = vmatprep.subr.mxu0 0.0
    %291 = vmatpush1.xpose.msra.mxu0 0.0
    %292 = vmatprep.subr.mxu0 0.0
    %293 = vmatpush1.xpose.msra.mxu0 0.0
    %294 = vmatprep.subr.mxu0 0.0
    %295 = vmatpush1.xpose.msra.mxu0 0.0
    %296 = vmatprep.subr.mxu0 0.0
    %297 = vmatpush1.xpose.msra.mxu0 0.0
    %298 = vmatprep.subr.mxu0 0.0
    %299 = vmatpush1.xpose.msra.mxu0 0.0
    %300 = vmatprep.subr.mxu0 0.0
    %301 = vmatpush1.xpose.msra.mxu0 0.0
    %302 = vmatprep.subr.mxu0 0.0
    %303 = vmatpush1.xpose.msra.mxu0 0.0
    %304 = vmatprep.subr.mxu0 0.0
    %305 = vmatpush1.xpose.msra.mxu0 0.0
    %306 = vmatprep.subr.mxu0 0.0
    %307 = vmatpush1.xpose.msra.mxu0 0.0
    %308 = vmatprep.subr.mxu0 0.0
    %309 = vmatpush1.xpose.msra.mxu0 0.0
    %310 = vmatprep.subr.mxu0 0.0
    %311 = vmatpush1.xpose.msra.mxu0 0.0
    %312 = vmatprep.subr.mxu0 0.0
    %313 = vmatpush1.xpose.msra.mxu0 0.0
    %314 = vmatprep.subr.mxu0 0.0
    %315 = vmatpush1.xpose.msra.mxu0 0.0
    %316 = vmatprep.subr.mxu0 0.0
    %317 = vmatpush1.xpose.msra.mxu0 0.0
    %318 = vmatprep.subr.mxu0 0.0
    %319 = vmatpush1.xpose.msra.mxu0 0.0
    %320 = vmatprep.subr.mxu0 0.0
    %321 = vmatpush1.xpose.msra.mxu0 0.0
    %322 = vmatprep.subr.mxu0 0.0
    %323 = vmatpush1.xpose.msra.mxu0 0.0
    %324 = vmatprep.subr.mxu0 0.0
    %325 = vmatpush1.xpose.msra.mxu0 0.0
    %326 = vmatprep.subr.mxu0 0.0
    %327 = vmatpush1.xpose.msra.mxu0 0.0
    %328 = vmatprep.mubr.f32.mxu0 0.0
    %329 = vmatmul.mubr.f32.gmra.mrb[0].mxu0 %v260
    %v330 = vpop.f32.mrb[0].mxu0
    %v331 = vadd.f32 0.0, %v330
    %v332 = vpop.f32.mrb[0].mxu0
    %333 = vdwg.mxu0
    %335 = vrot.lane.b32.xlu0 %v253, 96
    %v336 = vpop.permute.xlu0 %335
    %v337 = vsel %vm259, %v253, 0
    %v339 = vsel %vm259, %v336, 0
    %341 = vmatprep.subr.mxu0 0.0
    %342 = vmatpush1.xpose.msra.mxu0 %v339
    %343 = vmatprep.subr.mxu0 0.0
    %344 = vmatpush1.xpose.msra.mxu0 0.0
    %345 = vmatprep.subr.mxu0 0.0
    %346 = vmatpush1.xpose.msra.mxu0 0.0
    %347 = vmatprep.subr.mxu0 0.0
    %348 = vmatpush1.xpose.msra.mxu0 0.0
    %349 = vmatprep.subr.mxu0 0.0
    %350 = vmatpush1.xpose.msra.mxu0 0.0
    %351 = vmatprep.subr.mxu0 0.0
    %352 = vmatpush1.xpose.msra.mxu0 0.0
    %353 = vmatprep.subr.mxu0 0.0
    %354 = vmatpush1.xpose.msra.mxu0 0.0
    %355 = vmatprep.subr.mxu0 0.0
    %356 = vmatpush1.xpose.msra.mxu0 0.0
    %357 = vmatprep.subr.mxu0 0.0
    %358 = vmatpush1.xpose.msra.mxu0 0.0
    %359 = vmatprep.subr.mxu0 0.0
    %360 = vmatpush1.xpose.msra.mxu0 0.0
    %361 = vmatprep.subr.mxu0 0.0
    %362 = vmatpush1.xpose.msra.mxu0 0.0
    %363 = vmatprep.subr.mxu0 0.0
    %364 = vmatpush1.xpose.msra.mxu0 0.0
    %365 = vmatprep.subr.mxu0 0.0
    %366 = vmatpush1.xpose.msra.mxu0 0.0
    %367 = vmatprep.subr.mxu0 0.0
    %368 = vmatpush1.xpose.msra.mxu0 0.0
    %369 = vmatprep.subr.mxu0 0.0
    %370 = vmatpush1.xpose.msra.mxu0 0.0
    %371 = vmatprep.subr.mxu0 0.0
    %372 = vmatpush1.xpose.msra.mxu0 0.0
    %373 = vmatprep.subr.mxu0 0.0
    %374 = vmatpush1.xpose.msra.mxu0 0.0
    %375 = vmatprep.subr.mxu0 0.0
    %376 = vmatpush1.xpose.msra.mxu0 0.0
    %377 = vmatprep.subr.mxu0 0.0
    %378 = vmatpush1.xpose.msra.mxu0 0.0
    %379 = vmatprep.subr.mxu0 0.0
    %380 = vmatpush1.xpose.msra.mxu0 0.0
    %381 = vmatprep.subr.mxu0 0.0
    %382 = vmatpush1.xpose.msra.mxu0 0.0
    %383 = vmatprep.subr.mxu0 0.0
    %384 = vmatpush1.xpose.msra.mxu0 0.0
    %385 = vmatprep.subr.mxu0 0.0
    %386 = vmatpush1.xpose.msra.mxu0 0.0
    %387 = vmatprep.subr.mxu0 0.0
    %388 = vmatpush1.xpose.msra.mxu0 0.0
    %389 = vmatprep.subr.mxu0 0.0
    %390 = vmatpush1.xpose.msra.mxu0 0.0
    %391 = vmatprep.subr.mxu0 0.0
    %392 = vmatpush1.xpose.msra.mxu0 0.0
    %393 = vmatprep.subr.mxu0 0.0
    %394 = vmatpush1.xpose.msra.mxu0 0.0
    %395 = vmatprep.subr.mxu0 0.0
    %396 = vmatpush1.xpose.msra.mxu0 0.0
    %397 = vmatprep.subr.mxu0 0.0
    %398 = vmatpush1.xpose.msra.mxu0 0.0
    %399 = vmatprep.subr.mxu0 0.0
    %400 = vmatpush1.xpose.msra.mxu0 0.0
    %401 = vmatprep.subr.mxu0 0.0
    %402 = vmatpush1.xpose.msra.mxu0 0.0
    %403 = vmatprep.subr.mxu0 0.0
    %404 = vmatpush1.xpose.msra.mxu0 0.0
    %405 = vmatprep.mubr.f32.mxu0 0.0
    %406 = vmatmul.mubr.f32.gmra.mrb[0].mxu0 %v337
    %v407 = vpop.f32.mrb[0].mxu0
    %v408 = vadd.f32 0.0, %v407
    %v409 = vpop.f32.mrb[0].mxu0
    %410 = vdwg.mxu0
    %v411 = vmul.f32 %v331, 0.35355338
    %v412 = vmul.f32 %v408, 0.35355338
    %v413 = vsel %vm259, %v411, -inf
    %414 = vmax.xlane.f32.xlu0 %v413
    %v415 = vpop.xlane.xlu0 %414
    %v416 = vsel %vm259, %v412, -inf
    %417 = vmax.xlane.f32.xlu0 %v416
    %v418 = vpop.xlane.xlu0 %417
    %v419 = vsub.f32 %v411, %v415
    %v420 = vsub.f32 %v412, %v418
    %v421 = vmul.f32 %v419, 1.442695
    %v422 = vpow.pop %v421
    %v423 = vmul.f32 %v420, 1.442695
    %v424 = vpow.pop %v423
    %v425 = vsel %vm259, %v422, 0.0
    %426 = vadd.xlane.f32.xlu0 %v425
    %v427 = vpop.xlane.xlu0 %426
    %v428 = vsel %vm259, %v424, 0.0
    %429 = vadd.xlane.f32.xlu0 %v428
    %v430 = vpop.xlane.xlu0 %429
    %v431 = vrcp.pop %v427
    %v432 = vmul.f32 %v422, %v431
    %v433 = vrcp.pop %v430
    %v434 = vmul.f32 %v424, %v433
    %435 = vrot.lane.b32.xlu0 %v248, 64
    %v436 = vpop.permute.xlu0 %435
    %v439 = vsel %vm259, %v432, 0
    %441 = vmatprep.subr.mxu0 0.0
    %442 = vmatpush1.msra.mxu0 %v436
    %443 = vmatprep.subr.mxu0 0.0
    %444 = vmatpush1.msra.mxu0 0.0
    %445 = vmatprep.subr.mxu0 0.0
    %446 = vmatpush1.msra.mxu0 0.0
    %447 = vmatprep.subr.mxu0 0.0
    %448 = vmatpush1.msra.mxu0 0.0
    %449 = vmatprep.subr.mxu0 0.0
    %450 = vmatpush1.msra.mxu0 0.0
    %451 = vmatprep.subr.mxu0 0.0
    %452 = vmatpush1.msra.mxu0 0.0
    %453 = vmatprep.subr.mxu0 0.0
    %454 = vmatpush1.msra.mxu0 0.0
    %455 = vmatprep.subr.mxu0 0.0
    %456 = vmatpush1.msra.mxu0 0.0
    %457 = vmatprep.subr.mxu0 0.0
    %458 = vmatpush1.msra.mxu0 0.0
    %459 = vmatprep.subr.mxu0 0.0
    %460 = vmatpush1.msra.mxu0 0.0
    %461 = vmatprep.subr.mxu0 0.0
    %462 = vmatpush1.msra.mxu0 0.0
    %463 = vmatprep.subr.mxu0 0.0
    %464 = vmatpush1.msra.mxu0 0.0
    %465 = vmatprep.subr.mxu0 0.0
    %466 = vmatpush1.msra.mxu0 0.0
    %467 = vmatprep.subr.mxu0 0.0
    %468 = vmatpush1.msra.mxu0 0.0
    %469 = vmatprep.subr.mxu0 0.0
    %470 = vmatpush1.msra.mxu0 0.0
    %471 = vmatprep.subr.mxu0 0.0
    %472 = vmatpush1.msra.mxu0 0.0
    %473 = vmatprep.subr.mxu0 0.0
    %474 = vmatpush1.msra.mxu0 0.0
    %475 = vmatprep.subr.mxu0 0.0
    %476 = vmatpush1.msra.mxu0 0.0
    %477 = vmatprep.subr.mxu0 0.0
    %478 = vmatpush1.msra.mxu0 0.0
    %479 = vmatprep.subr.mxu0 0.0
    %480 = vmatpush1.msra.mxu0 0.0
    %481 = vmatprep.subr.mxu0 0.0
    %482 = vmatpush1.msra.mxu0 0.0
    %483 = vmatprep.subr.mxu0 0.0
    %484 = vmatpush1.msra.mxu0 0.0
    %485 = vmatprep.subr.mxu0 0.0
    %486 = vmatpush1.msra.mxu0 0.0
    %487 = vmatprep.subr.mxu0 0.0
    %488 = vmatpush1.msra.mxu0 0.0
    %489 = vmatprep.subr.mxu0 0.0
    %490 = vmatpush1.msra.mxu0 0.0
    %491 = vmatprep.subr.mxu0 0.0
    %492 = vmatpush1.msra.mxu0 0.0
    %493 = vmatprep.subr.mxu0 0.0
    %494 = vmatpush1.msra.mxu0 0.0
    %495 = vmatprep.subr.mxu0 0.0
    %496 = vmatpush1.msra.mxu0 0.0
    %497 = vmatprep.subr.mxu0 0.0
    %498 = vmatpush1.msra.mxu0 0.0
    %499 = vmatprep.subr.mxu0 0.0
    %500 = vmatpush1.msra.mxu0 0.0
    %501 = vmatprep.subr.mxu0 0.0
    %502 = vmatpush1.msra.mxu0 0.0
    %503 = vmatprep.subr.mxu0 0.0
    %504 = vmatpush1.msra.mxu0 0.0
    %505 = vmatprep.mubr.f32.mxu0 0.0
    %506 = vmatmul.mubr.f32.gmra.mrb[0].mxu0 %v439
    %v507 = vpop.f32.mrb[0].mxu0
    %v508 = vadd.f32 0.0, %v507
    %v509 = vpop.f32.mrb[0].mxu0
    %510 = vdwg.mxu0
    %511 = vrot.lane.b32.xlu0 %v253, 64
    %v512 = vpop.permute.xlu0 %511
    %v515 = vsel %vm259, %v434, 0
    %517 = vmatprep.subr.mxu0 0.0
    %518 = vmatpush1.msra.mxu0 %v512
    %519 = vmatprep.subr.mxu0 0.0
    %520 = vmatpush1.msra.mxu0 0.0
    %521 = vmatprep.subr.mxu0 0.0
    %522 = vmatpush1.msra.mxu0 0.0
    %523 = vmatprep.subr.mxu0 0.0
    %524 = vmatpush1.msra.mxu0 0.0
    %525 = vmatprep.subr.mxu0 0.0
    %526 = vmatpush1.msra.mxu0 0.0
    %527 = vmatprep.subr.mxu0 0.0
    %528 = vmatpush1.msra.mxu0 0.0
    %529 = vmatprep.subr.mxu0 0.0
    %530 = vmatpush1.msra.mxu0 0.0
    %531 = vmatprep.subr.mxu0 0.0
    %532 = vmatpush1.msra.mxu0 0.0
    %533 = vmatprep.subr.mxu0 0.0
    %534 = vmatpush1.msra.mxu0 0.0
    %535 = vmatprep.subr.mxu0 0.0
    %536 = vmatpush1.msra.mxu0 0.0
    %537 = vmatprep.subr.mxu0 0.0
    %538 = vmatpush1.msra.mxu0 0.0
    %539 = vmatprep.subr.mxu0 0.0
    %540 = vmatpush1.msra.mxu0 0.0
    %541 = vmatprep.subr.mxu0 0.0
    %542 = vmatpush1.msra.mxu0 0.0
    %543 = vmatprep.subr.mxu0 0.0
    %544 = vmatpush1.msra.mxu0 0.0
    %545 = vmatprep.subr.mxu0 0.0
    %546 = vmatpush1.msra.mxu0 0.0
    %547 = vmatprep.subr.mxu0 0.0
    %548 = vmatpush1.msra.mxu0 0.0
    %549 = vmatprep.subr.mxu0 0.0
    %550 = vmatpush1.msra.mxu0 0.0
    %551 = vmatprep.subr.mxu0 0.0
    %552 = vmatpush1.msra.mxu0 0.0
    %553 = vmatprep.subr.mxu0 0.0
    %554 = vmatpush1.msra.mxu0 0.0
    %555 = vmatprep.subr.mxu0 0.0
    %556 = vmatpush1.msra.mxu0 0.0
    %557 = vmatprep.subr.mxu0 0.0
    %558 = vmatpush1.msra.mxu0 0.0
    %559 = vmatprep.subr.mxu0 0.0
    %560 = vmatpush1.msra.mxu0 0.0
    %561 = vmatprep.subr.mxu0 0.0
    %562 = vmatpush1.msra.mxu0 0.0
    %563 = vmatprep.subr.mxu0 0.0
    %564 = vmatpush1.msra.mxu0 0.0
    %565 = vmatprep.subr.mxu0 0.0
    %566 = vmatpush1.msra.mxu0 0.0
    %567 = vmatprep.subr.mxu0 0.0
    %568 = vmatpush1.msra.mxu0 0.0
    %569 = vmatprep.subr.mxu0 0.0
    %570 = vmatpush1.msra.mxu0 0.0
    %571 = vmatprep.subr.mxu0 0.0
    %572 = vmatpush1.msra.mxu0 0.0
    %573 = vmatprep.subr.mxu0 0.0
    %574 = vmatpush1.msra.mxu0 0.0
    %575 = vmatprep.subr.mxu0 0.0
    %576 = vmatpush1.msra.mxu0 0.0
    %577 = vmatprep.subr.mxu0 0.0
    %578 = vmatpush1.msra.mxu0 0.0
    %579 = vmatprep.subr.mxu0 0.0
    %580 = vmatpush1.msra.mxu0 0.0
    %581 = vmatprep.mubr.f32.mxu0 0.0
    %582 = vmatmul.mubr.f32.gmra.mrb[0].mxu0 %v515
    %v583 = vpop.f32.mrb[0].mxu0
    %v584 = vadd.f32 0.0, %v583
    %v585 = vpop.f32.mrb[0].mxu0
    %586 = vdwg.mxu0
    %587 = vrot.lane.b32.xlu0 %v248, 120
    %v588 = vpop.permute.xlu0 %587
    %589 = vrot.lane.b32.xlu0 %v248, 88
    %v590 = vpop.permute.xlu0 %589
    %v591 = vsel %vm259, %v588, 0
    %v593 = vsel %vm259, %v590, 0
    %595 = vmatprep.subr.mxu0 0.0
    %596 = vmatpush1.xpose.msra.mxu0 %v593
    %597 = vmatprep.subr.mxu0 0.0
    %598 = vmatpush1.xpose.msra.mxu0 0.0
    %599 = vmatprep.subr.mxu0 0.0
    %600 = vmatpush1.xpose.msra.mxu0 0.0
    %601 = vmatprep.subr.mxu0 0.0
    %602 = vmatpush1.xpose.msra.mxu0 0.0
    %603 = vmatprep.subr.mxu0 0.0
    %604 = vmatpush1.xpose.msra.mxu0 0.0
    %605 = vmatprep.subr.mxu0 0.0
    %606 = vmatpush1.xpose.msra.mxu0 0.0
    %607 = vmatprep.subr.mxu0 0.0
    %608 = vmatpush1.xpose.msra.mxu0 0.0
    %609 = vmatprep.subr.mxu0 0.0
    %610 = vmatpush1.xpose.msra.mxu0 0.0
    %611 = vmatprep.subr.mxu0 0.0
    %612 = vmatpush1.xpose.msra.mxu0 0.0
    %613 = vmatprep.subr.mxu0 0.0
    %614 = vmatpush1.xpose.msra.mxu0 0.0
    %615 = vmatprep.subr.mxu0 0.0
    %616 = vmatpush1.xpose.msra.mxu0 0.0
    %617 = vmatprep.subr.mxu0 0.0
    %618 = vmatpush1.xpose.msra.mxu0 0.0
    %619 = vmatprep.subr.mxu0 0.0
    %620 = vmatpush1.xpose.msra.mxu0 0.0
    %621 = vmatprep.subr.mxu0 0.0
    %622 = vmatpush1.xpose.msra.mxu0 0.0
    %623 = vmatprep.subr.mxu0 0.0
    %624 = vmatpush1.xpose.msra.mxu0 0.0
    %625 = vmatprep.subr.mxu0 0.0
    %626 = vmatpush1.xpose.msra.mxu0 0.0
    %627 = vmatprep.subr.mxu0 0.0
    %628 = vmatpush1.xpose.msra.mxu0 0.0
    %629 = vmatprep.subr.mxu0 0.0
    %630 = vmatpush1.xpose.msra.mxu0 0.0
    %631 = vmatprep.subr.mxu0 0.0
    %632 = vmatpush1.xpose.msra.mxu0 0.0
    %633 = vmatprep.subr.mxu0 0.0
    %634 = vmatpush1.xpose.msra.mxu0 0.0
    %635 = vmatprep.subr.mxu0 0.0
    %636 = vmatpush1.xpose.msra.mxu0 0.0
    %637 = vmatprep.subr.mxu0 0.0
    %638 = vmatpush1.xpose.msra.mxu0 0.0
    %639 = vmatprep.subr.mxu0 0.0
    %640 = vmatpush1.xpose.msra.mxu0 0.0
    %641 = vmatprep.subr.mxu0 0.0
    %642 = vmatpush1.xpose.msra.mxu0 0.0
    %643 = vmatprep.subr.mxu0 0.0
    %644 = vmatpush1.xpose.msra.mxu0 0.0
    %645 = vmatprep.subr.mxu0 0.0
    %646 = vmatpush1.xpose.msra.mxu0 0.0
    %647 = vmatprep.subr.mxu0 0.0
    %648 = vmatpush1.xpose.msra.mxu0 0.0
    %649 = vmatprep.subr.mxu0 0.0
    %650 = vmatpush1.xpose.msra.mxu0 0.0
    %651 = vmatprep.subr.mxu0 0.0
    %652 = vmatpush1.xpose.msra.mxu0 0.0
    %653 = vmatprep.subr.mxu0 0.0
    %654 = vmatpush1.xpose.msra.mxu0 0.0
    %655 = vmatprep.subr.mxu0 0.0
    %656 = vmatpush1.xpose.msra.mxu0 0.0
    %657 = vmatprep.subr.mxu0 0.0
    %658 = vmatpush1.xpose.msra.mxu0 0.0
    %659 = vmatprep.mubr.f32.mxu0 0.0
    %660 = vmatmul.mubr.f32.gmra.mrb[0].mxu0 %v591
    %v661 = vpop.f32.mrb[0].mxu0
    %v662 = vadd.f32 0.0, %v661
    %v663 = vpop.f32.mrb[0].mxu0
    %664 = vdwg.mxu0
    %665 = vrot.lane.b32.xlu0 %v253, 120
    %v666 = vpop.permute.xlu0 %665
    %667 = vrot.lane.b32.xlu0 %v253, 88
    %v668 = vpop.permute.xlu0 %667
    %v669 = vsel %vm259, %v666, 0
    %v671 = vsel %vm259, %v668, 0
    %673 = vmatprep.subr.mxu0 0.0
    %674 = vmatpush1.xpose.msra.mxu0 %v671
    %675 = vmatprep.subr.mxu0 0.0
    %676 = vmatpush1.xpose.msra.mxu0 0.0
    %677 = vmatprep.subr.mxu0 0.0
    %678 = vmatpush1.xpose.msra.mxu0 0.0
    %679 = vmatprep.subr.mxu0 0.0
    %680 = vmatpush1.xpose.msra.mxu0 0.0
    %681 = vmatprep.subr.mxu0 0.0
    %682 = vmatpush1.xpose.msra.mxu0 0.0
    %683 = vmatprep.subr.mxu0 0.0
    %684 = vmatpush1.xpose.msra.mxu0 0.0
    %685 = vmatprep.subr.mxu0 0.0
    %686 = vmatpush1.xpose.msra.mxu0 0.0
    %687 = vmatprep.subr.mxu0 0.0
    %688 = vmatpush1.xpose.msra.mxu0 0.0
    %689 = vmatprep.subr.mxu0 0.0
    %690 = vmatpush1.xpose.msra.mxu0 0.0
    %691 = vmatprep.subr.mxu0 0.0
    %692 = vmatpush1.xpose.msra.mxu0 0.0
    %693 = vmatprep.subr.mxu0 0.0
    %694 = vmatpush1.xpose.msra.mxu0 0.0
    %695 = vmatprep.subr.mxu0 0.0
    %696 = vmatpush1.xpose.msra.mxu0 0.0
    %697 = vmatprep.subr.mxu0 0.0
    %698 = vmatpush1.xpose.msra.mxu0 0.0
    %699 = vmatprep.subr.mxu0 0.0
    %700 = vmatpush1.xpose.msra.mxu0 0.0
    %701 = vmatprep.subr.mxu0 0.0
    %702 = vmatpush1.xpose.msra.mxu0 0.0
    %703 = vmatprep.subr.mxu0 0.0
    %704 = vmatpush1.xpose.msra.mxu0 0.0
    %705 = vmatprep.subr.mxu0 0.0
    %706 = vmatpush1.xpose.msra.mxu0 0.0
    %707 = vmatprep.subr.mxu0 0.0
    %708 = vmatpush1.xpose.msra.mxu0 0.0
    %709 = vmatprep.subr.mxu0 0.0
    %710 = vmatpush1.xpose.msra.mxu0 0.0
    %711 = vmatprep.subr.mxu0 0.0
    %712 = vmatpush1.xpose.msra.mxu0 0.0
    %713 = vmatprep.subr.mxu0 0.0
    %714 = vmatpush1.xpose.msra.mxu0 0.0
    %715 = vmatprep.subr.mxu0 0.0
    %716 = vmatpush1.xpose.msra.mxu0 0.0
    %717 = vmatprep.subr.mxu0 0.0
    %718 = vmatpush1.xpose.msra.mxu0 0.0
    %719 = vmatprep.subr.mxu0 0.0
    %720 = vmatpush1.xpose.msra.mxu0 0.0
    %721 = vmatprep.subr.mxu0 0.0
    %722 = vmatpush1.xpose.msra.mxu0 0.0
    %723 = vmatprep.subr.mxu0 0.0
    %724 = vmatpush1.xpose.msra.mxu0 0.0
    %725 = vmatprep.subr.mxu0 0.0
    %726 = vmatpush1.xpose.msra.mxu0 0.0
    %727 = vmatprep.subr.mxu0 0.0
    %728 = vmatpush1.xpose.msra.mxu0 0.0
    %729 = vmatprep.subr.mxu0 0.0
    %730 = vmatpush1.xpose.msra.mxu0 0.0
    %731 = vmatprep.subr.mxu0 0.0
    %732 = vmatpush1.xpose.msra.mxu0 0.0
    %733 = vmatprep.subr.mxu0 0.0
    %734 = vmatpush1.xpose.msra.mxu0 0.0
    %735 = vmatprep.subr.mxu0 0.0
    %736 = vmatpush1.xpose.msra.mxu0 0.0
    %737 = vmatprep.mubr.f32.mxu0 0.0
    %738 = vmatmul.mubr.f32.gmra.mrb[0].mxu0 %v669
    %v739 = vpop.f32.mrb[0].mxu0
    %v740 = vadd.f32 0.0, %v739
    %v741 = vpop.f32.mrb[0].mxu0
    %742 = vdwg.mxu0
    %v743 = vmul.f32 %v662, 0.35355338
    %v744 = vmul.f32 %v740, 0.35355338
    %v745 = vsel %vm259, %v743, -inf
    %746 = vmax.xlane.f32.xlu0 %v745
    %v747 = vpop.xlane.xlu0 %746
    %v748 = vsel %vm259, %v744, -inf
    %749 = vmax.xlane.f32.xlu0 %v748
    %v750 = vpop.xlane.xlu0 %749
    %v751 = vsub.f32 %v743, %v747
    %v752 = vsub.f32 %v744, %v750
    %v753 = vmul.f32 %v751, 1.442695
    %v754 = vpow.pop %v753
    %v755 = vmul.f32 %v752, 1.442695
    %v756 = vpow.pop %v755
    %v757 = vsel %vm259, %v754, 0.0
    %758 = vadd.xlane.f32.xlu0 %v757
    %v759 = vpop.xlane.xlu0 %758
    %v760 = vsel %vm259, %v756, 0.0
    %761 = vadd.xlane.f32.xlu0 %v760
    %v762 = vpop.xlane.xlu0 %761
    %v763 = vrcp.pop %v759
    %v764 = vmul.f32 %v754, %v763
    %v765 = vrcp.pop %v762
    %v766 = vmul.f32 %v756, %v765
    %767 = vrot.lane.b32.xlu0 %v248, 56
    %v768 = vpop.permute.xlu0 %767
    %v771 = vsel %vm259, %v764, 0
    %773 = vmatprep.subr.mxu0 0.0
    %774 = vmatpush1.msra.mxu0 %v768
    %775 = vmatprep.subr.mxu0 0.0
    %776 = vmatpush1.msra.mxu0 0.0
    %777 = vmatprep.subr.mxu0 0.0
    %778 = vmatpush1.msra.mxu0 0.0
    %779 = vmatprep.subr.mxu0 0.0
    %780 = vmatpush1.msra.mxu0 0.0
    %781 = vmatprep.subr.mxu0 0.0
    %782 = vmatpush1.msra.mxu0 0.0
    %783 = vmatprep.subr.mxu0 0.0
    %784 = vmatpush1.msra.mxu0 0.0
    %785 = vmatprep.subr.mxu0 0.0
    %786 = vmatpush1.msra.mxu0 0.0
    %787 = vmatprep.subr.mxu0 0.0
    %788 = vmatpush1.msra.mxu0 0.0
    %789 = vmatprep.subr.mxu0 0.0
    %790 = vmatpush1.msra.mxu0 0.0
    %791 = vmatprep.subr.mxu0 0.0
    %792 = vmatpush1.msra.mxu0 0.0
    %793 = vmatprep.subr.mxu0 0.0
    %794 = vmatpush1.msra.mxu0 0.0
    %795 = vmatprep.subr.mxu0 0.0
    %796 = vmatpush1.msra.mxu0 0.0
    %797 = vmatprep.subr.mxu0 0.0
    %798 = vmatpush1.msra.mxu0 0.0
    %799 = vmatprep.subr.mxu0 0.0
    %800 = vmatpush1.msra.mxu0 0.0
    %801 = vmatprep.subr.mxu0 0.0
    %802 = vmatpush1.msra.mxu0 0.0
    %803 = vmatprep.subr.mxu0 0.0
    %804 = vmatpush1.msra.mxu0 0.0
    %805 = vmatprep.subr.mxu0 0.0
    %806 = vmatpush1.msra.mxu0 0.0
    %807 = vmatprep.subr.mxu0 0.0
    %808 = vmatpush1.msra.mxu0 0.0
    %809 = vmatprep.subr.mxu0 0.0
    %810 = vmatpush1.msra.mxu0 0.0
    %811 = vmatprep.subr.mxu0 0.0
    %812 = vmatpush1.msra.mxu0 0.0
    %813 = vmatprep.subr.mxu0 0.0
    %814 = vmatpush1.msra.mxu0 0.0
    %815 = vmatprep.subr.mxu0 0.0
    %816 = vmatpush1.msra.mxu0 0.0
    %817 = vmatprep.subr.mxu0 0.0
    %818 = vmatpush1.msra.mxu0 0.0
    %819 = vmatprep.subr.mxu0 0.0
    %820 = vmatpush1.msra.mxu0 0.0
    %821 = vmatprep.subr.mxu0 0.0
    %822 = vmatpush1.msra.mxu0 0.0
    %823 = vmatprep.subr.mxu0 0.0
    %824 = vmatpush1.msra.mxu0 0.0
    %825 = vmatprep.subr.mxu0 0.0
    %826 = vmatpush1.msra.mxu0 0.0
    %827 = vmatprep.subr.mxu0 0.0
    %828 = vmatpush1.msra.mxu0 0.0
    %829 = vmatprep.subr.mxu0 0.0
    %830 = vmatpush1.msra.mxu0 0.0
    %831 = vmatprep.subr.mxu0 0.0
    %832 = vmatpush1.msra.mxu0 0.0
    %833 = vmatprep.subr.mxu0 0.0
    %834 = vmatpush1.msra.mxu0 0.0
    %835 = vmatprep.subr.mxu0 0.0
    %836 = vmatpush1.msra.mxu0 0.0
    %837 = vmatprep.mubr.f32.mxu0 0.0
    %838 = vmatmul.mubr.f32.gmra.mrb[0].mxu0 %v771
    %v839 = vpop.f32.mrb[0].mxu0
    %v840 = vadd.f32 0.0, %v839
    %v841 = vpop.f32.mrb[0].mxu0
    %842 = vdwg.mxu0
    %843 = vrot.lane.b32.xlu0 %v253, 56
    %v844 = vpop.permute.xlu0 %843
    %v847 = vsel %vm259, %v766, 0
    %849 = vmatprep.subr.mxu0 0.0
    %850 = vmatpush1.msra.mxu0 %v844
    %851 = vmatprep.subr.mxu0 0.0
    %852 = vmatpush1.msra.mxu0 0.0
    %853 = vmatprep.subr.mxu0 0.0
    %854 = vmatpush1.msra.mxu0 0.0
    %855 = vmatprep.subr.mxu0 0.0
    %856 = vmatpush1.msra.mxu0 0.0
    %857 = vmatprep.subr.mxu0 0.0
    %858 = vmatpush1.msra.mxu0 0.0
    %859 = vmatprep.subr.mxu0 0.0
    %860 = vmatpush1.msra.mxu0 0.0
    %861 = vmatprep.subr.mxu0 0.0
    %862 = vmatpush1.msra.mxu0 0.0
    %863 = vmatprep.subr.mxu0 0.0
    %864 = vmatpush1.msra.mxu0 0.0
    %865 = vmatprep.subr.mxu0 0.0
    %866 = vmatpush1.msra.mxu0 0.0
    %867 = vmatprep.subr.mxu0 0.0
    %868 = vmatpush1.msra.mxu0 0.0
    %869 = vmatprep.subr.mxu0 0.0
    %870 = vmatpush1.msra.mxu0 0.0
    %871 = vmatprep.subr.mxu0 0.0
    %872 = vmatpush1.msra.mxu0 0.0
    %873 = vmatprep.subr.mxu0 0.0
    %874 = vmatpush1.msra.mxu0 0.0
    %875 = vmatprep.subr.mxu0 0.0
    %876 = vmatpush1.msra.mxu0 0.0
    %877 = vmatprep.subr.mxu0 0.0
    %878 = vmatpush1.msra.mxu0 0.0
    %879 = vmatprep.subr.mxu0 0.0
    %880 = vmatpush1.msra.mxu0 0.0
    %881 = vmatprep.subr.mxu0 0.0
    %882 = vmatpush1.msra.mxu0 0.0
    %883 = vmatprep.subr.mxu0 0.0
    %884 = vmatpush1.msra.mxu0 0.0
    %885 = vmatprep.subr.mxu0 0.0
    %886 = vmatpush1.msra.mxu0 0.0
    %887 = vmatprep.subr.mxu0 0.0
    %888 = vmatpush1.msra.mxu0 0.0
    %889 = vmatprep.subr.mxu0 0.0
    %890 = vmatpush1.msra.mxu0 0.0
    %891 = vmatprep.subr.mxu0 0.0
    %892 = vmatpush1.msra.mxu0 0.0
    %893 = vmatprep.subr.mxu0 0.0
    %894 = vmatpush1.msra.mxu0 0.0
    %895 = vmatprep.subr.mxu0 0.0
    %896 = vmatpush1.msra.mxu0 0.0
    %897 = vmatprep.subr.mxu0 0.0
    %898 = vmatpush1.msra.mxu0 0.0
    %899 = vmatprep.subr.mxu0 0.0
    %900 = vmatpush1.msra.mxu0 0.0
    %901 = vmatprep.subr.mxu0 0.0
    %902 = vmatpush1.msra.mxu0 0.0
    %903 = vmatprep.subr.mxu0 0.0
    %904 = vmatpush1.msra.mxu0 0.0
    %905 = vmatprep.subr.mxu0 0.0
    %906 = vmatpush1.msra.mxu0 0.0
    %907 = vmatprep.subr.mxu0 0.0
    %908 = vmatpush1.msra.mxu0 0.0
    %909 = vmatprep.subr.mxu0 0.0
    %910 = vmatpush1.msra.mxu0 0.0
    %911 = vmatprep.subr.mxu0 0.0
    %912 = vmatpush1.msra.mxu0 0.0
    %913 = vmatprep.mubr.f32.mxu0 0.0
    %914 = vmatmul.mubr.f32.gmra.mrb[0].mxu0 %v847
    %v915 = vpop.f32.mrb[0].mxu0
    %v916 = vadd.f32 0.0, %v915
    %v917 = vpop.f32.mrb[0].mxu0
    %918 = vdwg.mxu0
    %919 = vrot.lane.b32.xlu0 %v248, 112
    %v920 = vpop.permute.xlu0 %919
    %921 = vrot.lane.b32.xlu0 %v248, 80
    %v922 = vpop.permute.xlu0 %921
    %v923 = vsel %vm259, %v920, 0
    %v925 = vsel %vm259, %v922, 0
    %927 = vmatprep.subr.mxu0 0.0
    %928 = vmatpush1.xpose.msra.mxu0 %v925
    %929 = vmatprep.subr.mxu0 0.0
    %930 = vmatpush1.xpose.msra.mxu0 0.0
    %931 = vmatprep.subr.mxu0 0.0
    %932 = vmatpush1.xpose.msra.mxu0 0.0
    %933 = vmatprep.subr.mxu0 0.0
    %934 = vmatpush1.xpose.msra.mxu0 0.0
    %935 = vmatprep.subr.mxu0 0.0
    %936 = vmatpush1.xpose.msra.mxu0 0.0
    %937 = vmatprep.subr.mxu0 0.0
    %938 = vmatpush1.xpose.msra.mxu0 0.0
    %939 = vmatprep.subr.mxu0 0.0
    %940 = vmatpush1.xpose.msra.mxu0 0.0
    %941 = vmatprep.subr.mxu0 0.0
    %942 = vmatpush1.xpose.msra.mxu0 0.0
    %943 = vmatprep.subr.mxu0 0.0
    %944 = vmatpush1.xpose.msra.mxu0 0.0
    %945 = vmatprep.subr.mxu0 0.0
    %946 = vmatpush1.xpose.msra.mxu0 0.0
    %947 = vmatprep.subr.mxu0 0.0
    %948 = vmatpush1.xpose.msra.mxu0 0.0
    %949 = vmatprep.subr.mxu0 0.0
    %950 = vmatpush1.xpose.msra.mxu0 0.0
    %951 = vmatprep.subr.mxu0 0.0
    %952 = vmatpush1.xpose.msra.mxu0 0.0
    %953 = vmatprep.subr.mxu0 0.0
    %954 = vmatpush1.xpose.msra.mxu0 0.0
    %955 = vmatprep.subr.mxu0 0.0
    %956 = vmatpush1.xpose.msra.mxu0 0.0
    %957 = vmatprep.subr.mxu0 0.0
    %958 = vmatpush1.xpose.msra.mxu0 0.0
    %959 = vmatprep.subr.mxu0 0.0
    %960 = vmatpush1.xpose.msra.mxu0 0.0
    %961 = vmatprep.subr.mxu0 0.0
    %962 = vmatpush1.xpose.msra.mxu0 0.0
    %963 = vmatprep.subr.mxu0 0.0
    %964 = vmatpush1.xpose.msra.mxu0 0.0
    %965 = vmatprep.subr.mxu0 0.0
    %966 = vmatpush1.xpose.msra.mxu0 0.0
    %967 = vmatprep.subr.mxu0 0.0
    %968 = vmatpush1.xpose.msra.mxu0 0.0
    %969 = vmatprep.subr.mxu0 0.0
    %970 = vmatpush1.xpose.msra.mxu0 0.0
    %971 = vmatprep.subr.mxu0 0.0
    %972 = vmatpush1.xpose.msra.mxu0 0.0
    %973 = vmatprep.subr.mxu0 0.0
    %974 = vmatpush1.xpose.msra.mxu0 0.0
    %975 = vmatprep.subr.mxu0 0.0
    %976 = vmatpush1.xpose.msra.mxu0 0.0
    %977 = vmatprep.subr.mxu0 0.0
    %978 = vmatpush1.xpose.msra.mxu0 0.0
    %979 = vmatprep.subr.mxu0 0.0
    %980 = vmatpush1.xpose.msra.mxu0 0.0
    %981 = vmatprep.subr.mxu0 0.0
    %982 = vmatpush1.xpose.msra.mxu0 0.0
    %983 = vmatprep.subr.mxu0 0.0
    %984 = vmatpush1.xpose.msra.mxu0 0.0
    %985 = vmatprep.subr.mxu0 0.0
    %986 = vmatpush1.xpose.msra.mxu0 0.0
    %987 = vmatprep.subr.mxu0 0.0
    %988 = vmatpush1.xpose.msra.mxu0 0.0
    %989 = vmatprep.subr.mxu0 0.0
    %990 = vmatpush1.xpose.msra.mxu0 0.0
    %991 = vmatprep.mubr.f32.mxu0 0.0
    %992 = vmatmul.mubr.f32.gmra.mrb[0].mxu0 %v923
    %v993 = vpop.f32.mrb[0].mxu0
    %v994 = vadd.f32 0.0, %v993
    %v995 = vpop.f32.mrb[0].mxu0
    %996 = vdwg.mxu0
    %997 = vrot.lane.b32.xlu0 %v253, 112
    %v998 = vpop.permute.xlu0 %997
    %999 = vrot.lane.b32.xlu0 %v253, 80
    %v1000 = vpop.permute.xlu0 %999
    %v1001 = vsel %vm259, %v998, 0
    %v1003 = vsel %vm259, %v1000, 0
    %1005 = vmatprep.subr.mxu0 0.0
    %1006 = vmatpush1.xpose.msra.mxu0 %v1003
    %1007 = vmatprep.subr.mxu0 0.0
    %1008 = vmatpush1.xpose.msra.mxu0 0.0
    %1009 = vmatprep.subr.mxu0 0.0
    %1010 = vmatpush1.xpose.msra.mxu0 0.0
    %1011 = vmatprep.subr.mxu0 0.0
    %1012 = vmatpush1.xpose.msra.mxu0 0.0
    %1013 = vmatprep.subr.mxu0 0.0
    %1014 = vmatpush1.xpose.msra.mxu0 0.0
    %1015 = vmatprep.subr.mxu0 0.0
    %1016 = vmatpush1.xpose.msra.mxu0 0.0
    %1017 = vmatprep.subr.mxu0 0.0
    %1018 = vmatpush1.xpose.msra.mxu0 0.0
    %1019 = vmatprep.subr.mxu0 0.0
    %1020 = vmatpush1.xpose.msra.mxu0 0.0
    %1021 = vmatprep.subr.mxu0 0.0
    %1022 = vmatpush1.xpose.msra.mxu0 0.0
    %1023 = vmatprep.subr.mxu0 0.0
    %1024 = vmatpush1.xpose.msra.mxu0 0.0
    %1025 = vmatprep.subr.mxu0 0.0
    %1026 = vmatpush1.xpose.msra.mxu0 0.0
    %1027 = vmatprep.subr.mxu0 0.0
    %1028 = vmatpush1.xpose.msra.mxu0 0.0
    %1029 = vmatprep.subr.mxu0 0.0
    %1030 = vmatpush1.xpose.msra.mxu0 0.0
    %1031 = vmatprep.subr.mxu0 0.0
    %1032 = vmatpush1.xpose.msra.mxu0 0.0
    %1033 = vmatprep.subr.mxu0 0.0
    %1034 = vmatpush1.xpose.msra.mxu0 0.0
    %1035 = vmatprep.subr.mxu0 0.0
    %1036 = vmatpush1.xpose.msra.mxu0 0.0
    %1037 = vmatprep.subr.mxu0 0.0
    %1038 = vmatpush1.xpose.msra.mxu0 0.0
    %1039 = vmatprep.subr.mxu0 0.0
    %1040 = vmatpush1.xpose.msra.mxu0 0.0
    %1041 = vmatprep.subr.mxu0 0.0
    %1042 = vmatpush1.xpose.msra.mxu0 0.0
    %1043 = vmatprep.subr.mxu0 0.0
    %1044 = vmatpush1.xpose.msra.mxu0 0.0
    %1045 = vmatprep.subr.mxu0 0.0
    %1046 = vmatpush1.xpose.msra.mxu0 0.0
    %1047 = vmatprep.subr.mxu0 0.0
    %1048 = vmatpush1.xpose.msra.mxu0 0.0
    %1049 = vmatprep.subr.mxu0 0.0
    %1050 = vmatpush1.xpose.msra.mxu0 0.0
    %1051 = vmatprep.subr.mxu0 0.0
    %1052 = vmatpush1.xpose.msra.mxu0 0.0
    %1053 = vmatprep.subr.mxu0 0.0
    %1054 = vmatpush1.xpose.msra.mxu0 0.0
    %1055 = vmatprep.subr.mxu0 0.0
    %1056 = vmatpush1.xpose.msra.mxu0 0.0
    %1057 = vmatprep.subr.mxu0 0.0
    %1058 = vmatpush1.xpose.msra.mxu0 0.0
    %1059 = vmatprep.subr.mxu0 0.0
    %1060 = vmatpush1.xpose.msra.mxu0 0.0
    %1061 = vmatprep.subr.mxu0 0.0
    %1062 = vmatpush1.xpose.msra.mxu0 0.0
    %1063 = vmatprep.subr.mxu0 0.0
    %1064 = vmatpush1.xpose.msra.mxu0 0.0
    %1065 = vmatprep.subr.mxu0 0.0
    %1066 = vmatpush1.xpose.msra.mxu0 0.0
    %1067 = vmatprep.subr.mxu0 0.0
    %1068 = vmatpush1.xpose.msra.mxu0 0.0
    %1069 = vmatprep.mubr.f32.mxu0 0.0
    %1070 = vmatmul.mubr.f32.gmra.mrb[0].mxu0 %v1001
    %v1071 = vpop.f32.mrb[0].mxu0
    %v1072 = vadd.f32 0.0, %v1071
    %v1073 = vpop.f32.mrb[0].mxu0
    %1074 = vdwg.mxu0
    %v1075 = vmul.f32 %v994, 0.35355338
    %v1076 = vmul.f32 %v1072, 0.35355338
    %v1077 = vsel %vm259, %v1075, -inf
    %1078 = vmax.xlane.f32.xlu0 %v1077
    %v1079 = vpop.xlane.xlu0 %1078
    %v1080 = vsel %vm259, %v1076, -inf
    %1081 = vmax.xlane.f32.xlu0 %v1080
    %v1082 = vpop.xlane.xlu0 %1081
    %v1083 = vsub.f32 %v1075, %v1079
    %v1084 = vsub.f32 %v1076, %v1082
    %v1085 = vmul.f32 %v1083, 1.442695
    %v1086 = vpow.pop %v1085
    %v1087 = vmul.f32 %v1084, 1.442695
    %v1088 = vpow.pop %v1087
    %v1089 = vsel %vm259, %v1086, 0.0
    %1090 = vadd.xlane.f32.xlu0 %v1089
    %v1091 = vpop.xlane.xlu0 %1090
    %v1092 = vsel %vm259, %v1088, 0.0
    %1093 = vadd.xlane.f32.xlu0 %v1092
    %v1094 = vpop.xlane.xlu0 %1093
    %v1095 = vrcp.pop %v1091
    %v1096 = vmul.f32 %v1086, %v1095
    %v1097 = vrcp.pop %v1094
    %v1098 = vmul.f32 %v1088, %v1097
    %1099 = vrot.lane.b32.xlu0 %v248, 48
    %v1100 = vpop.permute.xlu0 %1099
    %v1103 = vsel %vm259, %v1096, 0
    %1105 = vmatprep.subr.mxu0 0.0
    %1106 = vmatpush1.msra.mxu0 %v1100
    %1107 = vmatprep.subr.mxu0 0.0
    %1108 = vmatpush1.msra.mxu0 0.0
    %1109 = vmatprep.subr.mxu0 0.0
    %1110 = vmatpush1.msra.mxu0 0.0
    %1111 = vmatprep.subr.mxu0 0.0
    %1112 = vmatpush1.msra.mxu0 0.0
    %1113 = vmatprep.subr.mxu0 0.0
    %1114 = vmatpush1.msra.mxu0 0.0
    %1115 = vmatprep.subr.mxu0 0.0
    %1116 = vmatpush1.msra.mxu0 0.0
    %1117 = vmatprep.subr.mxu0 0.0
    %1118 = vmatpush1.msra.mxu0 0.0
    %1119 = vmatprep.subr.mxu0 0.0
    %1120 = vmatpush1.msra.mxu0 0.0
    %1121 = vmatprep.subr.mxu0 0.0
    %1122 = vmatpush1.msra.mxu0 0.0
    %1123 = vmatprep.subr.mxu0 0.0
    %1124 = vmatpush1.msra.mxu0 0.0
    %1125 = vmatprep.subr.mxu0 0.0
    %1126 = vmatpush1.msra.mxu0 0.0
    %1127 = vmatprep.subr.mxu0 0.0
    %1128 = vmatpush1.msra.mxu0 0.0
    %1129 = vmatprep.subr.mxu0 0.0
    %1130 = vmatpush1.msra.mxu0 0.0
    %1131 = vmatprep.subr.mxu0 0.0
    %1132 = vmatpush1.msra.mxu0 0.0
    %1133 = vmatprep.subr.mxu0 0.0
    %1134 = vmatpush1.msra.mxu0 0.0
    %1135 = vmatprep.subr.mxu0 0.0
    %1136 = vmatpush1.msra.mxu0 0.0
    %1137 = vmatprep.subr.mxu0 0.0
    %1138 = vmatpush1.msra.mxu0 0.0
    %1139 = vmatprep.subr.mxu0 0.0
    %1140 = vmatpush1.msra.mxu0 0.0
    %1141 = vmatprep.subr.mxu0 0.0
    %1142 = vmatpush1.msra.mxu0 0.0
    %1143 = vmatprep.subr.mxu0 0.0
    %1144 = vmatpush1.msra.mxu0 0.0
    %1145 = vmatprep.subr.mxu0 0.0
    %1146 = vmatpush1.msra.mxu0 0.0
    %1147 = vmatprep.subr.mxu0 0.0
    %1148 = vmatpush1.msra.mxu0 0.0
    %1149 = vmatprep.subr.mxu0 0.0
    %1150 = vmatpush1.msra.mxu0 0.0
    %1151 = vmatprep.subr.mxu0 0.0
    %1152 = vmatpush1.msra.mxu0 0.0
    %1153 = vmatprep.subr.mxu0 0.0
    %1154 = vmatpush1.msra.mxu0 0.0
    %1155 = vmatprep.subr.mxu0 0.0
    %1156 = vmatpush1.msra.mxu0 0.0
    %1157 = vmatprep.subr.mxu0 0.0
    %1158 = vmatpush1.msra.mxu0 0.0
    %1159 = vmatprep.subr.mxu0 0.0
    %1160 = vmatpush1.msra.mxu0 0.0
    %1161 = vmatprep.subr.mxu0 0.0
    %1162 = vmatpush1.msra.mxu0 0.0
    %1163 = vmatprep.subr.mxu0 0.0
    %1164 = vmatpush1.msra.mxu0 0.0
    %1165 = vmatprep.subr.mxu0 0.0
    %1166 = vmatpush1.msra.mxu0 0.0
    %1167 = vmatprep.subr.mxu0 0.0
    %1168 = vmatpush1.msra.mxu0 0.0
    %1169 = vmatprep.mubr.f32.mxu0 0.0
    %1170 = vmatmul.mubr.f32.gmra.mrb[0].mxu0 %v1103
    %v1171 = vpop.f32.mrb[0].mxu0
    %v1172 = vadd.f32 0.0, %v1171
    %v1173 = vpop.f32.mrb[0].mxu0
    %1174 = vdwg.mxu0
    %1175 = vrot.lane.b32.xlu0 %v253, 48
    %v1176 = vpop.permute.xlu0 %1175
    %v1179 = vsel %vm259, %v1098, 0
    %1181 = vmatprep.subr.mxu0 0.0
    %1182 = vmatpush1.msra.mxu0 %v1176
    %1183 = vmatprep.subr.mxu0 0.0
    %1184 = vmatpush1.msra.mxu0 0.0
    %1185 = vmatprep.subr.mxu0 0.0
    %1186 = vmatpush1.msra.mxu0 0.0
    %1187 = vmatprep.subr.mxu0 0.0
    %1188 = vmatpush1.msra.mxu0 0.0
    %1189 = vmatprep.subr.mxu0 0.0
    %1190 = vmatpush1.msra.mxu0 0.0
    %1191 = vmatprep.subr.mxu0 0.0
    %1192 = vmatpush1.msra.mxu0 0.0
    %1193 = vmatprep.subr.mxu0 0.0
    %1194 = vmatpush1.msra.mxu0 0.0
    %1195 = vmatprep.subr.mxu0 0.0
    %1196 = vmatpush1.msra.mxu0 0.0
    %1197 = vmatprep.subr.mxu0 0.0
    %1198 = vmatpush1.msra.mxu0 0.0
    %1199 = vmatprep.subr.mxu0 0.0
    %1200 = vmatpush1.msra.mxu0 0.0
    %1201 = vmatprep.subr.mxu0 0.0
    %1202 = vmatpush1.msra.mxu0 0.0
    %1203 = vmatprep.subr.mxu0 0.0
    %1204 = vmatpush1.msra.mxu0 0.0
    %1205 = vmatprep.subr.mxu0 0.0
    %1206 = vmatpush1.msra.mxu0 0.0
    %1207 = vmatprep.subr.mxu0 0.0
    %1208 = vmatpush1.msra.mxu0 0.0
    %1209 = vmatprep.subr.mxu0 0.0
    %1210 = vmatpush1.msra.mxu0 0.0
    %1211 = vmatprep.subr.mxu0 0.0
    %1212 = vmatpush1.msra.mxu0 0.0
    %1213 = vmatprep.subr.mxu0 0.0
    %1214 = vmatpush1.msra.mxu0 0.0
    %1215 = vmatprep.subr.mxu0 0.0
    %1216 = vmatpush1.msra.mxu0 0.0
    %1217 = vmatprep.subr.mxu0 0.0
    %1218 = vmatpush1.msra.mxu0 0.0
    %1219 = vmatprep.subr.mxu0 0.0
    %1220 = vmatpush1.msra.mxu0 0.0
    %1221 = vmatprep.subr.mxu0 0.0
    %1222 = vmatpush1.msra.mxu0 0.0
    %1223 = vmatprep.subr.mxu0 0.0
    %1224 = vmatpush1.msra.mxu0 0.0
    %1225 = vmatprep.subr.mxu0 0.0
    %1226 = vmatpush1.msra.mxu0 0.0
    %1227 = vmatprep.subr.mxu0 0.0
    %1228 = vmatpush1.msra.mxu0 0.0
    %1229 = vmatprep.subr.mxu0 0.0
    %1230 = vmatpush1.msra.mxu0 0.0
    %1231 = vmatprep.subr.mxu0 0.0
    %1232 = vmatpush1.msra.mxu0 0.0
    %1233 = vmatprep.subr.mxu0 0.0
    %1234 = vmatpush1.msra.mxu0 0.0
    %1235 = vmatprep.subr.mxu0 0.0
    %1236 = vmatpush1.msra.mxu0 0.0
    %1237 = vmatprep.subr.mxu0 0.0
    %1238 = vmatpush1.msra.mxu0 0.0
    %1239 = vmatprep.subr.mxu0 0.0
    %1240 = vmatpush1.msra.mxu0 0.0
    %1241 = vmatprep.subr.mxu0 0.0
    %1242 = vmatpush1.msra.mxu0 0.0
    %1243 = vmatprep.subr.mxu0 0.0
    %1244 = vmatpush1.msra.mxu0 0.0
    %1245 = vmatprep.mubr.f32.mxu0 0.0
    %1246 = vmatmul.mubr.f32.gmra.mrb[0].mxu0 %v1179
    %v1247 = vpop.f32.mrb[0].mxu0
    %v1248 = vadd.f32 0.0, %v1247
    %v1249 = vpop.f32.mrb[0].mxu0
    %1250 = vdwg.mxu0
    %1251 = vrot.lane.b32.xlu0 %v248, 104
    %v1252 = vpop.permute.xlu0 %1251
    %1253 = vrot.lane.b32.xlu0 %v248, 72
    %v1254 = vpop.permute.xlu0 %1253
    %v1255 = vsel %vm259, %v1252, 0
    %v1257 = vsel %vm259, %v1254, 0
    %1259 = vmatprep.subr.mxu0 0.0
    %1260 = vmatpush1.xpose.msra.mxu0 %v1257
    %1261 = vmatprep.subr.mxu0 0.0
    %1262 = vmatpush1.xpose.msra.mxu0 0.0
    %1263 = vmatprep.subr.mxu0 0.0
    %1264 = vmatpush1.xpose.msra.mxu0 0.0
    %1265 = vmatprep.subr.mxu0 0.0
    %1266 = vmatpush1.xpose.msra.mxu0 0.0
    %1267 = vmatprep.subr.mxu0 0.0
    %1268 = vmatpush1.xpose.msra.mxu0 0.0
    %1269 = vmatprep.subr.mxu0 0.0
    %1270 = vmatpush1.xpose.msra.mxu0 0.0
    %1271 = vmatprep.subr.mxu0 0.0
    %1272 = vmatpush1.xpose.msra.mxu0 0.0
    %1273 = vmatprep.subr.mxu0 0.0
    %1274 = vmatpush1.xpose.msra.mxu0 0.0
    %1275 = vmatprep.subr.mxu0 0.0
    %1276 = vmatpush1.xpose.msra.mxu0 0.0
    %1277 = vmatprep.subr.mxu0 0.0
    %1278 = vmatpush1.xpose.msra.mxu0 0.0
    %1279 = vmatprep.subr.mxu0 0.0
    %1280 = vmatpush1.xpose.msra.mxu0 0.0
    %1281 = vmatprep.subr.mxu0 0.0
    %1282 = vmatpush1.xpose.msra.mxu0 0.0
    %1283 = vmatprep.subr.mxu0 0.0
    %1284 = vmatpush1.xpose.msra.mxu0 0.0
    %1285 = vmatprep.subr.mxu0 0.0
    %1286 = vmatpush1.xpose.msra.mxu0 0.0
    %1287 = vmatprep.subr.mxu0 0.0
    %1288 = vmatpush1.xpose.msra.mxu0 0.0
    %1289 = vmatprep.subr.mxu0 0.0
    %1290 = vmatpush1.xpose.msra.mxu0 0.0
    %1291 = vmatprep.subr.mxu0 0.0
    %1292 = vmatpush1.xpose.msra.mxu0 0.0
    %1293 = vmatprep.subr.mxu0 0.0
    %1294 = vmatpush1.xpose.msra.mxu0 0.0
    %1295 = vmatprep.subr.mxu0 0.0
    %1296 = vmatpush1.xpose.msra.mxu0 0.0
    %1297 = vmatprep.subr.mxu0 0.0
    %1298 = vmatpush1.xpose.msra.mxu0 0.0
    %1299 = vmatprep.subr.mxu0 0.0
    %1300 = vmatpush1.xpose.msra.mxu0 0.0
    %1301 = vmatprep.subr.mxu0 0.0
    %1302 = vmatpush1.xpose.msra.mxu0 0.0
    %1303 = vmatprep.subr.mxu0 0.0
    %1304 = vmatpush1.xpose.msra.mxu0 0.0
    %1305 = vmatprep.subr.mxu0 0.0
    %1306 = vmatpush1.xpose.msra.mxu0 0.0
    %1307 = vmatprep.subr.mxu0 0.0
    %1308 = vmatpush1.xpose.msra.mxu0 0.0
    %1309 = vmatprep.subr.mxu0 0.0
    %1310 = vmatpush1.xpose.msra.mxu0 0.0
    %1311 = vmatprep.subr.mxu0 0.0
    %1312 = vmatpush1.xpose.msra.mxu0 0.0
    %1313 = vmatprep.subr.mxu0 0.0
    %1314 = vmatpush1.xpose.msra.mxu0 0.0
    %1315 = vmatprep.subr.mxu0 0.0
    %1316 = vmatpush1.xpose.msra.mxu0 0.0
    %1317 = vmatprep.subr.mxu0 0.0
    %1318 = vmatpush1.xpose.msra.mxu0 0.0
    %1319 = vmatprep.subr.mxu0 0.0
    %1320 = vmatpush1.xpose.msra.mxu0 0.0
    %1321 = vmatprep.subr.mxu0 0.0
    %1322 = vmatpush1.xpose.msra.mxu0 0.0
    %1323 = vmatprep.mubr.f32.mxu0 0.0
    %1324 = vmatmul.mubr.f32.gmra.mrb[0].mxu0 %v1255
    %v1325 = vpop.f32.mrb[0].mxu0
    %v1326 = vadd.f32 0.0, %v1325
    %v1327 = vpop.f32.mrb[0].mxu0
    %1328 = vdwg.mxu0
    %1329 = vrot.lane.b32.xlu0 %v253, 104
    %v1330 = vpop.permute.xlu0 %1329
    %1331 = vrot.lane.b32.xlu0 %v253, 72
    %v1332 = vpop.permute.xlu0 %1331
    %v1333 = vsel %vm259, %v1330, 0
    %v1335 = vsel %vm259, %v1332, 0
    %1337 = vmatprep.subr.mxu0 0.0
    %1338 = vmatpush1.xpose.msra.mxu0 %v1335
    %1339 = vmatprep.subr.mxu0 0.0
    %1340 = vmatpush1.xpose.msra.mxu0 0.0
    %1341 = vmatprep.subr.mxu0 0.0
    %1342 = vmatpush1.xpose.msra.mxu0 0.0
    %1343 = vmatprep.subr.mxu0 0.0
    %1344 = vmatpush1.xpose.msra.mxu0 0.0
    %1345 = vmatprep.subr.mxu0 0.0
    %1346 = vmatpush1.xpose.msra.mxu0 0.0
    %1347 = vmatprep.subr.mxu0 0.0
    %1348 = vmatpush1.xpose.msra.mxu0 0.0
    %1349 = vmatprep.subr.mxu0 0.0
    %1350 = vmatpush1.xpose.msra.mxu0 0.0
    %1351 = vmatprep.subr.mxu0 0.0
    %1352 = vmatpush1.xpose.msra.mxu0 0.0
    %1353 = vmatprep.subr.mxu0 0.0
    %1354 = vmatpush1.xpose.msra.mxu0 0.0
    %1355 = vmatprep.subr.mxu0 0.0
    %1356 = vmatpush1.xpose.msra.mxu0 0.0
    %1357 = vmatprep.subr.mxu0 0.0
    %1358 = vmatpush1.xpose.msra.mxu0 0.0
    %1359 = vmatprep.subr.mxu0 0.0
    %1360 = vmatpush1.xpose.msra.mxu0 0.0
    %1361 = vmatprep.subr.mxu0 0.0
    %1362 = vmatpush1.xpose.msra.mxu0 0.0
    %1363 = vmatprep.subr.mxu0 0.0
    %1364 = vmatpush1.xpose.msra.mxu0 0.0
    %1365 = vmatprep.subr.mxu0 0.0
    %1366 = vmatpush1.xpose.msra.mxu0 0.0
    %1367 = vmatprep.subr.mxu0 0.0
    %1368 = vmatpush1.xpose.msra.mxu0 0.0
    %1369 = vmatprep.subr.mxu0 0.0
    %1370 = vmatpush1.xpose.msra.mxu0 0.0
    %1371 = vmatprep.subr.mxu0 0.0
    %1372 = vmatpush1.xpose.msra.mxu0 0.0
    %1373 = vmatprep.subr.mxu0 0.0
    %1374 = vmatpush1.xpose.msra.mxu0 0.0
    %1375 = vmatprep.subr.mxu0 0.0
    %1376 = vmatpush1.xpose.msra.mxu0 0.0
    %1377 = vmatprep.subr.mxu0 0.0
    %1378 = vmatpush1.xpose.msra.mxu0 0.0
    %1379 = vmatprep.subr.mxu0 0.0
    %1380 = vmatpush1.xpose.msra.mxu0 0.0
    %1381 = vmatprep.subr.mxu0 0.0
    %1382 = vmatpush1.xpose.msra.mxu0 0.0
    %1383 = vmatprep.subr.mxu0 0.0
    %1384 = vmatpush1.xpose.msra.mxu0 0.0
    %1385 = vmatprep.subr.mxu0 0.0
    %1386 = vmatpush1.xpose.msra.mxu0 0.0
    %1387 = vmatprep.subr.mxu0 0.0
    %1388 = vmatpush1.xpose.msra.mxu0 0.0
    %1389 = vmatprep.subr.mxu0 0.0
    %1390 = vmatpush1.xpose.msra.mxu0 0.0
    %1391 = vmatprep.subr.mxu0 0.0
    %1392 = vmatpush1.xpose.msra.mxu0 0.0
    %1393 = vmatprep.subr.mxu0 0.0
    %1394 = vmatpush1.xpose.msra.mxu0 0.0
    %1395 = vmatprep.subr.mxu0 0.0
    %1396 = vmatpush1.xpose.msra.mxu0 0.0
    %1397 = vmatprep.subr.mxu0 0.0
    %1398 = vmatpush1.xpose.msra.mxu0 0.0
    %1399 = vmatprep.subr.mxu0 0.0
    %1400 = vmatpush1.xpose.msra.mxu0 0.0
    %1401 = vmatprep.mubr.f32.mxu0 0.0
    %1402 = vmatmul.mubr.f32.gmra.mrb[0].mxu0 %v1333
    %v1403 = vpop.f32.mrb[0].mxu0
    %v1404 = vadd.f32 0.0, %v1403
    %v1405 = vpop.f32.mrb[0].mxu0
    %1406 = vdwg.mxu0
    %v1407 = vmul.f32 %v1326, 0.35355338
    %v1408 = vmul.f32 %v1404, 0.35355338
    %v1409 = vsel %vm259, %v1407, -inf
    %1410 = vmax.xlane.f32.xlu0 %v1409
    %v1411 = vpop.xlane.xlu0 %1410
    %v1412 = vsel %vm259, %v1408, -inf
    %1413 = vmax.xlane.f32.xlu0 %v1412
    %v1414 = vpop.xlane.xlu0 %1413
    %v1415 = vsub.f32 %v1407, %v1411
    %v1416 = vsub.f32 %v1408, %v1414
    %v1417 = vmul.f32 %v1415, 1.442695
    %v1418 = vpow.pop %v1417
    %v1419 = vmul.f32 %v1416, 1.442695
    %v1420 = vpow.pop %v1419
    %v1421 = vsel %vm259, %v1418, 0.0
    %1422 = vadd.xlane.f32.xlu0 %v1421
    %v1423 = vpop.xlane.xlu0 %1422
    %v1424 = vsel %vm259, %v1420, 0.0
    %1425 = vadd.xlane.f32.xlu0 %v1424
    %v1426 = vpop.xlane.xlu0 %1425
    %v1427 = vrcp.pop %v1423
    %v1428 = vmul.f32 %v1418, %v1427
    %v1429 = vrcp.pop %v1426
    %v1430 = vmul.f32 %v1420, %v1429
    %1431 = vrot.lane.b32.xlu0 %v248, 40
    %v1432 = vpop.permute.xlu0 %1431
    %v1435 = vsel %vm259, %v1428, 0
    %1437 = vmatprep.subr.mxu0 0.0
    %1438 = vmatpush1.msra.mxu0 %v1432
    %1439 = vmatprep.subr.mxu0 0.0
    %1440 = vmatpush1.msra.mxu0 0.0
    %1441 = vmatprep.subr.mxu0 0.0
    %1442 = vmatpush1.msra.mxu0 0.0
    %1443 = vmatprep.subr.mxu0 0.0
    %1444 = vmatpush1.msra.mxu0 0.0
    %1445 = vmatprep.subr.mxu0 0.0
    %1446 = vmatpush1.msra.mxu0 0.0
    %1447 = vmatprep.subr.mxu0 0.0
    %1448 = vmatpush1.msra.mxu0 0.0
    %1449 = vmatprep.subr.mxu0 0.0
    %1450 = vmatpush1.msra.mxu0 0.0
    %1451 = vmatprep.subr.mxu0 0.0
    %1452 = vmatpush1.msra.mxu0 0.0
    %1453 = vmatprep.subr.mxu0 0.0
    %1454 = vmatpush1.msra.mxu0 0.0
    %1455 = vmatprep.subr.mxu0 0.0
    %1456 = vmatpush1.msra.mxu0 0.0
    %1457 = vmatprep.subr.mxu0 0.0
    %1458 = vmatpush1.msra.mxu0 0.0
    %1459 = vmatprep.subr.mxu0 0.0
    %1460 = vmatpush1.msra.mxu0 0.0
    %1461 = vmatprep.subr.mxu0 0.0
    %1462 = vmatpush1.msra.mxu0 0.0
    %1463 = vmatprep.subr.mxu0 0.0
    %1464 = vmatpush1.msra.mxu0 0.0
    %1465 = vmatprep.subr.mxu0 0.0
    %1466 = vmatpush1.msra.mxu0 0.0
    %1467 = vmatprep.subr.mxu0 0.0
    %1468 = vmatpush1.msra.mxu0 0.0
    %1469 = vmatprep.subr.mxu0 0.0
    %1470 = vmatpush1.msra.mxu0 0.0
    %1471 = vmatprep.subr.mxu0 0.0
    %1472 = vmatpush1.msra.mxu0 0.0
    %1473 = vmatprep.subr.mxu0 0.0
    %1474 = vmatpush1.msra.mxu0 0.0
    %1475 = vmatprep.subr.mxu0 0.0
    %1476 = vmatpush1.msra.mxu0 0.0
    %1477 = vmatprep.subr.mxu0 0.0
    %1478 = vmatpush1.msra.mxu0 0.0
    %1479 = vmatprep.subr.mxu0 0.0
    %1480 = vmatpush1.msra.mxu0 0.0
    %1481 = vmatprep.subr.mxu0 0.0
    %1482 = vmatpush1.msra.mxu0 0.0
    %1483 = vmatprep.subr.mxu0 0.0
    %1484 = vmatpush1.msra.mxu0 0.0
    %1485 = vmatprep.subr.mxu0 0.0
    %1486 = vmatpush1.msra.mxu0 0.0
    %1487 = vmatprep.subr.mxu0 0.0
    %1488 = vmatpush1.msra.mxu0 0.0
    %1489 = vmatprep.subr.mxu0 0.0
    %1490 = vmatpush1.msra.mxu0 0.0
    %1491 = vmatprep.subr.mxu0 0.0
    %1492 = vmatpush1.msra.mxu0 0.0
    %1493 = vmatprep.subr.mxu0 0.0
    %1494 = vmatpush1.msra.mxu0 0.0
    %1495 = vmatprep.subr.mxu0 0.0
    %1496 = vmatpush1.msra.mxu0 0.0
    %1497 = vmatprep.subr.mxu0 0.0
    %1498 = vmatpush1.msra.mxu0 0.0
    %1499 = vmatprep.subr.mxu0 0.0
    %1500 = vmatpush1.msra.mxu0 0.0
    %1501 = vmatprep.mubr.f32.mxu0 0.0
    %1502 = vmatmul.mubr.f32.gmra.mrb[0].mxu0 %v1435
    %v1503 = vpop.f32.mrb[0].mxu0
    %v1504 = vadd.f32 0.0, %v1503
    %v1505 = vpop.f32.mrb[0].mxu0
    %1506 = vdwg.mxu0
    %1507 = vrot.lane.b32.xlu0 %v253, 40
    %v1508 = vpop.permute.xlu0 %1507
    %v1511 = vsel %vm259, %v1430, 0
    %1513 = vmatprep.subr.mxu0 0.0
    %1514 = vmatpush1.msra.mxu0 %v1508
    %1515 = vmatprep.subr.mxu0 0.0
    %1516 = vmatpush1.msra.mxu0 0.0
    %1517 = vmatprep.subr.mxu0 0.0
    %1518 = vmatpush1.msra.mxu0 0.0
    %1519 = vmatprep.subr.mxu0 0.0
    %1520 = vmatpush1.msra.mxu0 0.0
    %1521 = vmatprep.subr.mxu0 0.0
    %1522 = vmatpush1.msra.mxu0 0.0
    %1523 = vmatprep.subr.mxu0 0.0
    %1524 = vmatpush1.msra.mxu0 0.0
    %1525 = vmatprep.subr.mxu0 0.0
    %1526 = vmatpush1.msra.mxu0 0.0
    %1527 = vmatprep.subr.mxu0 0.0
    %1528 = vmatpush1.msra.mxu0 0.0
    %1529 = vmatprep.subr.mxu0 0.0
    %1530 = vmatpush1.msra.mxu0 0.0
    %1531 = vmatprep.subr.mxu0 0.0
    %1532 = vmatpush1.msra.mxu0 0.0
    %1533 = vmatprep.subr.mxu0 0.0
    %1534 = vmatpush1.msra.mxu0 0.0
    %1535 = vmatprep.subr.mxu0 0.0
    %1536 = vmatpush1.msra.mxu0 0.0
    %1537 = vmatprep.subr.mxu0 0.0
    %1538 = vmatpush1.msra.mxu0 0.0
    %1539 = vmatprep.subr.mxu0 0.0
    %1540 = vmatpush1.msra.mxu0 0.0
    %1541 = vmatprep.subr.mxu0 0.0
    %1542 = vmatpush1.msra.mxu0 0.0
    %1543 = vmatprep.subr.mxu0 0.0
    %1544 = vmatpush1.msra.mxu0 0.0
    %1545 = vmatprep.subr.mxu0 0.0
    %1546 = vmatpush1.msra.mxu0 0.0
    %1547 = vmatprep.subr.mxu0 0.0
    %1548 = vmatpush1.msra.mxu0 0.0
    %1549 = vmatprep.subr.mxu0 0.0
    %1550 = vmatpush1.msra.mxu0 0.0
    %1551 = vmatprep.subr.mxu0 0.0
    %1552 = vmatpush1.msra.mxu0 0.0
    %1553 = vmatprep.subr.mxu0 0.0
    %1554 = vmatpush1.msra.mxu0 0.0
    %1555 = vmatprep.subr.mxu0 0.0
    %1556 = vmatpush1.msra.mxu0 0.0
    %1557 = vmatprep.subr.mxu0 0.0
    %1558 = vmatpush1.msra.mxu0 0.0
    %1559 = vmatprep.subr.mxu0 0.0
    %1560 = vmatpush1.msra.mxu0 0.0
    %1561 = vmatprep.subr.mxu0 0.0
    %1562 = vmatpush1.msra.mxu0 0.0
    %1563 = vmatprep.subr.mxu0 0.0
    %1564 = vmatpush1.msra.mxu0 0.0
    %1565 = vmatprep.subr.mxu0 0.0
    %1566 = vmatpush1.msra.mxu0 0.0
    %1567 = vmatprep.subr.mxu0 0.0
    %1568 = vmatpush1.msra.mxu0 0.0
    %1569 = vmatprep.subr.mxu0 0.0
    %1570 = vmatpush1.msra.mxu0 0.0
    %1571 = vmatprep.subr.mxu0 0.0
    %1572 = vmatpush1.msra.mxu0 0.0
    %1573 = vmatprep.subr.mxu0 0.0
    %1574 = vmatpush1.msra.mxu0 0.0
    %1575 = vmatprep.subr.mxu0 0.0
    %1576 = vmatpush1.msra.mxu0 0.0
    %1577 = vmatprep.mubr.f32.mxu0 0.0
    %1578 = vmatmul.mubr.f32.gmra.mrb[0].mxu0 %v1511
    %v1579 = vpop.f32.mrb[0].mxu0
    %v1580 = vadd.f32 0.0, %v1579
    %v1581 = vpop.f32.mrb[0].mxu0
    %1582 = vdwg.mxu0
    %1585 = vrot.lane.b32.xlu0 %v840, 8
    %v1586 = vpop.permute.xlu0 %1585
    %1587 = vrot.lane.b32.xlu0 %v916, 8
    %v1588 = vpop.permute.xlu0 %1587
    %1593 = vrot.lane.b32.xlu0 %v1172, 16
    %v1594 = vpop.permute.xlu0 %1593
    %1595 = vrot.lane.b32.xlu0 %v1248, 16
    %v1596 = vpop.permute.xlu0 %1595
    %1601 = vrot.lane.b32.xlu0 %v1504, 24
    %v1602 = vpop.permute.xlu0 %1601
    %1603 = vrot.lane.b32.xlu0 %v1580, 24
    %v1604 = vpop.permute.xlu0 %1603
    %v1607 = vsel %vm259, %v508, %v1586
    %v1608 = vsel %vm259, %v584, %v1588
    %v1609 = vsel %vm80, %v1607, %v1594
    %v1610 = vsel %vm80, %v1608, %v1596
    %vm1611 = vcmask 195584
    %v1612 = vsel %vm1611, %v1609, %v1602
    %v1613 = vsel %vm1611, %v1610, %v1604
    %v1614 = vld [vmem:[#allocation8 + $0x20] sm:$0xff]
    %v1615 = vld [vmem:[#allocation8 + $0x28] sm:$0xff]
    %v1616 = vld [vmem:[#allocation8 + $0x30] sm:$0xff]
    %v1617 = vld [vmem:[#allocation8 + $0x38] sm:$0xff]
    %v1618 = vld [vmem:[#allocation8 + $0xa1] sm:$0x1]
    %v1619 = vlaneseq
    %v1620 = vshrl.u32 %v1619, 7
    %v1621 = vsub.s32 0, %v1620
    %v1622 = vrot.slane %v1618, %v1621
    %v1624 = vsel %vm174, %v1612, 0
    %v1627 = vsel %vm174, %v1613, 0
    %1629 = vmatprep.subr.mxu0 0.0
    %1630 = vmatpush1.msra.mxu0 %v1614
    %1631 = vmatprep.subr.mxu0 0.0
    %1632 = vmatpush1.msra.mxu0 %v1615
    %1633 = vmatprep.subr.mxu0 0.0
    %1634 = vmatpush1.msra.mxu0 %v1616
    %1635 = vmatprep.subr.mxu0 0.0
    %1636 = vmatpush1.msra.mxu0 %v1617
    %1637 = vmatprep.subr.mxu0 0.0
    %1638 = vmatpush1.msra.mxu0 0.0
    %1639 = vmatprep.subr.mxu0 0.0
    %1640 = vmatpush1.msra.mxu0 0.0
    %1641 = vmatprep.subr.mxu0 0.0
    %1642 = vmatpush1.msra.mxu0 0.0
    %1643 = vmatprep.subr.mxu0 0.0
    %1644 = vmatpush1.msra.mxu0 0.0
    %1645 = vmatprep.subr.mxu0 0.0
    %1646 = vmatpush1.msra.mxu0 0.0
    %1647 = vmatprep.subr.mxu0 0.0
    %1648 = vmatpush1.msra.mxu0 0.0
    %1649 = vmatprep.subr.mxu0 0.0
    %1650 = vmatpush1.msra.mxu0 0.0
    %1651 = vmatprep.subr.mxu0 0.0
    %1652 = vmatpush1.msra.mxu0 0.0
    %1653 = vmatprep.subr.mxu0 0.0
    %1654 = vmatpush1.msra.mxu0 0.0
    %1655 = vmatprep.subr.mxu0 0.0
    %1656 = vmatpush1.msra.mxu0 0.0
    %1657 = vmatprep.subr.mxu0 0.0
    %1658 = vmatpush1.msra.mxu0 0.0
    %1659 = vmatprep.subr.mxu0 0.0
    %1660 = vmatpush1.msra.mxu0 0.0
    %1661 = vmatprep.subr.mxu0 0.0
    %1662 = vmatpush1.msra.mxu0 0.0
    %1663 = vmatprep.subr.mxu0 0.0
    %1664 = vmatpush1.msra.mxu0 0.0
    %1665 = vmatprep.subr.mxu0 0.0
    %1666 = vmatpush1.msra.mxu0 0.0
    %1667 = vmatprep.subr.mxu0 0.0
    %1668 = vmatpush1.msra.mxu0 0.0
    %1669 = vmatprep.subr.mxu0 0.0
    %1670 = vmatpush1.msra.mxu0 0.0
    %1671 = vmatprep.subr.mxu0 0.0
    %1672 = vmatpush1.msra.mxu0 0.0
    %1673 = vmatprep.subr.mxu0 0.0
    %1674 = vmatpush1.msra.mxu0 0.0
    %1675 = vmatprep.subr.mxu0 0.0
    %1676 = vmatpush1.msra.mxu0 0.0
    %1677 = vmatprep.subr.mxu0 0.0
    %1678 = vmatpush1.msra.mxu0 0.0
    %1679 = vmatprep.subr.mxu0 0.0
    %1680 = vmatpush1.msra.mxu0 0.0
    %1681 = vmatprep.subr.mxu0 0.0
    %1682 = vmatpush1.msra.mxu0 0.0
    %1683 = vmatprep.subr.mxu0 0.0
    %1684 = vmatpush1.msra.mxu0 0.0
    %1685 = vmatprep.subr.mxu0 0.0
    %1686 = vmatpush1.msra.mxu0 0.0
    %1687 = vmatprep.subr.mxu0 0.0
    %1688 = vmatpush1.msra.mxu0 0.0
    %1689 = vmatprep.subr.mxu0 0.0
    %1690 = vmatpush1.msra.mxu0 0.0
    %1691 = vmatprep.subr.mxu0 0.0
    %1692 = vmatpush1.msra.mxu0 0.0
    %1693 = vmatprep.mubr.f32.mxu0 0.0
    %1694 = vmatmul.mubr.f32.gmra.mrb[0].mxu0 %v1624
    %v1695 = vpop.f32.mrb[0].mxu0
    %v1696 = vadd.f32 %v1622, %v1695
    %v1697 = vpop.f32.mrb[0].mxu0
    %1698 = vmatprep.mubr.f32.mxu0 0.0
    %1699 = vmatmul.mubr.f32.gmra.mrb[0].mxu0 %v1627
    %v1700 = vpop.f32.mrb[0].mxu0
    %v1701 = vadd.f32 %v1622, %v1700
    %v1702 = vpop.f32.mrb[0].mxu0
    %1703 = vdwg.mxu0
    %v1704 = vadd.f32 %v163, %v1696
    %v1705 = vadd.f32 %v164, %v1701
    %v1706 = vld [vmem:[#allocation8 + $0xa2] sm:$0x1]
    %v1707 = vld [vmem:[#allocation8 + $0xa3] sm:$0x1]
    %v1708 = vsel %vm174, %v1704, 0.0
    %1709 = vadd.xlane.f32.xlu0 %v1708
    %v1710 = vpop.xlane.xlu0 %1709
    %v1711 = vsel %vm174, %v1705, 0.0
    %1712 = vadd.xlane.f32.xlu0 %v1711
    %v1713 = vpop.xlane.xlu0 %1712
    %v1714 = vrcp.pop 32.0
    %v1715 = vmul.f32 %v1710, %v1714
    %v1716 = vmul.f32 %v1713, %v1714
    %v1717 = vsub.f32 %v1704, %v1715
    %v1718 = vsub.f32 %v1705, %v1716
    %v1719 = vmul.f32 %v1717, %v1717
    %v1720 = vmul.f32 %v1718, %v1718
    %v1721 = vsel %vm174, %v1719, 0.0
    %1722 = vadd.xlane.f32.xlu0 %v1721
    %v1723 = vpop.xlane.xlu0 %1722
    %v1724 = vsel %vm174, %v1720, 0.0
    %1725 = vadd.xlane.f32.xlu0 %v1724
    %v1726 = vpop.xlane.xlu0 %1725
    %v1727 = vmul.f32 %v1723, %v1714
    %v1728 = vmul.f32 %v1726, %v1714
    %v1729 = vadd.f32 %v1727, 1e-05
    %v1730 = vadd.f32 %v1728, 1e-05
    %v1731 = vrsqrt.pop %v1729
    %v1732 = vrsqrt.pop %v1730
    %v1733 = vmul.f32 %v1717, %v1731
    %v1734 = vmul.f32 %v1718, %v1732
    %v1735 = vlaneseq
    %v1736 = vshrl.u32 %v1735, 7
    %v1737 = vsub.s32 0, %v1736
    %v1738 = vrot.slane %v1706, %v1737
    %v1739 = vmul.f32 %v1733, %v1738
    %v1740 = vmul.f32 %v1734, %v1738
    %v1741 = vlaneseq
    %v1742 = vshrl.u32 %v1741, 7
    %v1743 = vsub.s32 0, %v1742
    %v1744 = vrot.slane %v1707, %v1743
    %v1745 = vadd.f32 %v1739, %v1744
    %v1746 = vadd.f32 %v1740, %v1744
    %v1747 = vld [vmem:[#allocation8 + $0x40] sm:$0xff]
    %v1748 = vld [vmem:[#allocation8 + $0x48] sm:$0xff]
    %v1749 = vld [vmem:[#allocation8 + $0x50] sm:$0xff]
    %v1750 = vld [vmem:[#allocation8 + $0x58] sm:$0xff]
    %v1751 = vld [vmem:[#allocation8 + $0xa4] sm:$0x1]
    %v1752 = vlaneseq
    %v1753 = vshrl.u32 %v1752, 7
    %v1754 = vsub.s32 0, %v1753
    %v1755 = vrot.slane %v1751, %v1754
    %v1757 = vsel %vm174, %v1745, 0
    %v1760 = vsel %vm174, %v1746, 0
    %1762 = vmatprep.subr.mxu0 0.0
    %1763 = vmatpush1.msra.mxu0 %v1747
    %1764 = vmatprep.subr.mxu0 0.0
    %1765 = vmatpush1.msra.mxu0 %v1748
    %1766 = vmatprep.subr.mxu0 0.0
    %1767 = vmatpush1.msra.mxu0 %v1749
    %1768 = vmatprep.subr.mxu0 0.0
    %1769 = vmatpush1.msra.mxu0 %v1750
    %1770 = vmatprep.subr.mxu0 0.0
    %1771 = vmatpush1.msra.mxu0 0.0
    %1772 = vmatprep.subr.mxu0 0.0
    %1773 = vmatpush1.msra.mxu0 0.0
    %1774 = vmatprep.subr.mxu0 0.0
    %1775 = vmatpush1.msra.mxu0 0.0
    %1776 = vmatprep.subr.mxu0 0.0
    %1777 = vmatpush1.msra.mxu0 0.0
    %1778 = vmatprep.subr.mxu0 0.0
    %1779 = vmatpush1.msra.mxu0 0.0
    %1780 = vmatprep.subr.mxu0 0.0
    %1781 = vmatpush1.msra.mxu0 0.0
    %1782 = vmatprep.subr.mxu0 0.0
    %1783 = vmatpush1.msra.mxu0 0.0
    %1784 = vmatprep.subr.mxu0 0.0
    %1785 = vmatpush1.msra.mxu0 0.0
    %1786 = vmatprep.subr.mxu0 0.0
    %1787 = vmatpush1.msra.mxu0 0.0
    %1788 = vmatprep.subr.mxu0 0.0
    %1789 = vmatpush1.msra.mxu0 0.0
    %1790 = vmatprep.subr.mxu0 0.0
    %1791 = vmatpush1.msra.mxu0 0.0
    %1792 = vmatprep.subr.mxu0 0.0
    %1793 = vmatpush1.msra.mxu0 0.0
    %1794 = vmatprep.subr.mxu0 0.0
    %1795 = vmatpush1.msra.mxu0 0.0
    %1796 = vmatprep.subr.mxu0 0.0
    %1797 = vmatpush1.msra.mxu0 0.0
    %1798 = vmatprep.subr.mxu0 0.0
    %1799 = vmatpush1.msra.mxu0 0.0
    %1800 = vmatprep.subr.mxu0 0.0
    %1801 = vmatpush1.msra.mxu0 0.0
    %1802 = vmatprep.subr.mxu0 0.0
    %1803 = vmatpush1.msra.mxu0 0.0
    %1804 = vmatprep.subr.mxu0 0.0
    %1805 = vmatpush1.msra.mxu0 0.0
    %1806 = vmatprep.subr.mxu0 0.0
    %1807 = vmatpush1.msra.mxu0 0.0
    %1808 = vmatprep.subr.mxu0 0.0
    %1809 = vmatpush1.msra.mxu0 0.0
    %1810 = vmatprep.subr.mxu0 0.0
    %1811 = vmatpush1.msra.mxu0 0.0
    %1812 = vmatprep.subr.mxu0 0.0
    %1813 = vmatpush1.msra.mxu0 0.0
    %1814 = vmatprep.subr.mxu0 0.0
    %1815 = vmatpush1.msra.mxu0 0.0
    %1816 = vmatprep.subr.mxu0 0.0
    %1817 = vmatpush1.msra.mxu0 0.0
    %1818 = vmatprep.subr.mxu0 0.0
    %1819 = vmatpush1.msra.mxu0 0.0
    %1820 = vmatprep.subr.mxu0 0.0
    %1821 = vmatpush1.msra.mxu0 0.0
    %1822 = vmatprep.subr.mxu0 0.0
    %1823 = vmatpush1.msra.mxu0 0.0
    %1824 = vmatprep.subr.mxu0 0.0
    %1825 = vmatpush1.msra.mxu0 0.0
    %1826 = vmatprep.mubr.f32.mxu0 0.0
    %1827 = vmatmul.mubr.f32.gmra.mrb[0].mxu0 %v1757
    %v1828 = vpop.f32.mrb[0].mxu0
    %v1829 = vadd.f32 %v1755, %v1828
    %v1830 = vpop.f32.mrb[0].mxu0
    %1831 = vmatprep.mubr.f32.mxu0 0.0
    %1832 = vmatmul.mubr.f32.gmra.mrb[0].mxu0 %v1760
    %v1833 = vpop.f32.mrb[0].mxu0
    %v1834 = vadd.f32 %v1755, %v1833
    %v1835 = vpop.f32.mrb[0].mxu0
    %1836 = vdwg.mxu0
    %v1837 = vmax.f32 %v1829, 0.0
    %v1838 = vmax.f32 %v1834, 0.0
    %v1839 = vld [vmem:[#allocation8 + $0x60] sm:$0xff]
    %v1840 = vld [vmem:[#allocation8 + $0x68] sm:$0xff]
    %v1841 = vld [vmem:[#allocation8 + $0x70] sm:$0xff]
    %v1842 = vld [vmem:[#allocation8 + $0x78] sm:$0xff]
    %v1843 = vld [vmem:[#allocation8 + $0x80] sm:$0xff]
    %v1844 = vld [vmem:[#allocation8 + $0x88] sm:$0xff]
    %v1845 = vld [vmem:[#allocation8 + $0x90] sm:$0xff]
    %v1846 = vld [vmem:[#allocation8 + $0x98] sm:$0xff]
    %v1847 = vld [vmem:[#allocation8 + $0xa5] sm:$0x1]
    %v1848 = vlaneseq
    %v1849 = vshrl.u32 %v1848, 7
    %v1850 = vsub.s32 0, %v1849
    %v1851 = vrot.slane %v1847, %v1850
    %vm1852 = vcmask 523264
    %v1854 = vsel %vm1852, %v1837, 0
    %v1857 = vsel %vm1852, %v1838, 0
    %1859 = vmatprep.subr.mxu0 0.0
    %1860 = vmatpush1.msra.mxu0 %v1839
    %1861 = vmatprep.subr.mxu0 0.0
    %1862 = vmatpush1.msra.mxu0 %v1840
    %1863 = vmatprep.subr.mxu0 0.0
    %1864 = vmatpush1.msra.mxu0 %v1841
    %1865 = vmatprep.subr.mxu0 0.0
    %1866 = vmatpush1.msra.mxu0 %v1842
    %1867 = vmatprep.subr.mxu0 0.0
    %1868 = vmatpush1.msra.mxu0 %v1843
    %1869 = vmatprep.subr.mxu0 0.0
    %1870 = vmatpush1.msra.mxu0 %v1844
    %1871 = vmatprep.subr.mxu0 0.0
    %1872 = vmatpush1.msra.mxu0 %v1845
    %1873 = vmatprep.subr.mxu0 0.0
    %1874 = vmatpush1.msra.mxu0 %v1846
    %1875 = vmatprep.subr.mxu0 0.0
    %1876 = vmatpush1.msra.mxu0 0.0
    %1877 = vmatprep.subr.mxu0 0.0
    %1878 = vmatpush1.msra.mxu0 0.0
    %1879 = vmatprep.subr.mxu0 0.0
    %1880 = vmatpush1.msra.mxu0 0.0
    %1881 = vmatprep.subr.mxu0 0.0
    %1882 = vmatpush1.msra.mxu0 0.0
    %1883 = vmatprep.subr.mxu0 0.0
    %1884 = vmatpush1.msra.mxu0 0.0
    %1885 = vmatprep.subr.mxu0 0.0
    %1886 = vmatpush1.msra.mxu0 0.0
    %1887 = vmatprep.subr.mxu0 0.0
    %1888 = vmatpush1.msra.mxu0 0.0
    %1889 = vmatprep.subr.mxu0 0.0
    %1890 = vmatpush1.msra.mxu0 0.0
    %1891 = vmatprep.subr.mxu0 0.0
    %1892 = vmatpush1.msra.mxu0 0.0
    %1893 = vmatprep.subr.mxu0 0.0
    %1894 = vmatpush1.msra.mxu0 0.0
    %1895 = vmatprep.subr.mxu0 0.0
    %1896 = vmatpush1.msra.mxu0 0.0
    %1897 = vmatprep.subr.mxu0 0.0
    %1898 = vmatpush1.msra.mxu0 0.0
    %1899 = vmatprep.subr.mxu0 0.0
    %1900 = vmatpush1.msra.mxu0 0.0
    %1901 = vmatprep.subr.mxu0 0.0
    %1902 = vmatpush1.msra.mxu0 0.0
    %1903 = vmatprep.subr.mxu0 0.0
    %1904 = vmatpush1.msra.mxu0 0.0
    %1905 = vmatprep.subr.mxu0 0.0
    %1906 = vmatpush1.msra.mxu0 0.0
    %1907 = vmatprep.subr.mxu0 0.0
    %1908 = vmatpush1.msra.mxu0 0.0
    %1909 = vmatprep.subr.mxu0 0.0
    %1910 = vmatpush1.msra.mxu0 0.0
    %1911 = vmatprep.subr.mxu0 0.0
    %1912 = vmatpush1.msra.mxu0 0.0
    %1913 = vmatprep.subr.mxu0 0.0
    %1914 = vmatpush1.msra.mxu0 0.0
    %1915 = vmatprep.subr.mxu0 0.0
    %1916 = vmatpush1.msra.mxu0 0.0
    %1917 = vmatprep.subr.mxu0 0.0
    %1918 = vmatpush1.msra.mxu0 0.0
    %1919 = vmatprep.subr.mxu0 0.0
    %1920 = vmatpush1.msra.mxu0 0.0
    %1921 = vmatprep.subr.mxu0 0.0
    %1922 = vmatpush1.msra.mxu0 0.0
    %1923 = vmatprep.mubr.f32.mxu0 0.0
    %1924 = vmatmul.mubr.f32.gmra.mrb[0].mxu0 %v1854
    %v1925 = vpop.f32.mrb[0].mxu0
    %v1926 = vadd.f32 %v1851, %v1925
    %v1927 = vpop.f32.mrb[0].mxu0
    %1928 = vmatprep.mubr.f32.mxu0 0.0
    %1929 = vmatmul.mubr.f32.gmra.mrb[0].mxu0 %v1857
    %v1930 = vpop.f32.mrb[0].mxu0
    %v1931 = vadd.f32 %v1851, %v1930
    %v1932 = vpop.f32.mrb[0].mxu0
    %1933 = vdwg.mxu0
    %v1934 = vadd.f32 %v1745, %v1926
    %v1935 = vadd.f32 %v1746, %v1931
    %v1936 = vld [vmem:[#allocation8 + $0xa6] sm:$0x1]
    %v1937 = vld [vmem:[#allocation8 + $0xa7] sm:$0x1]
    %v1938 = vsel %vm174, %v1934, 0.0
    %1939 = vadd.xlane.f32.xlu0 %v1938
    %v1940 = vpop.xlane.xlu0 %1939
    %v1941 = vsel %vm174, %v1935, 0.0
    %1942 = vadd.xlane.f32.xlu0 %v1941
    %v1943 = vpop.xlane.xlu0 %1942
    %v1944 = vmul.f32 %v1940, %v1714
    %v1945 = vmul.f32 %v1943, %v1714
    %v1946 = vsub.f32 %v1934, %v1944
    %v1947 = vsub.f32 %v1935, %v1945
    %v1948 = vmul.f32 %v1946, %v1946
    %v1949 = vmul.f32 %v1947, %v1947
    %v1950 = vsel %vm174, %v1948, 0.0
    %1951 = vadd.xlane.f32.xlu0 %v1950
    %v1952 = vpop.xlane.xlu0 %1951
    %v1953 = vsel %vm174, %v1949, 0.0
    %1954 = vadd.xlane.f32.xlu0 %v1953
    %v1955 = vpop.xlane.xlu0 %1954
    %v1956 = vmul.f32 %v1952, %v1714
    %v1957 = vmul.f32 %v1955, %v1714
    %v1958 = vadd.f32 %v1956, 1e-05
    %v1959 = vadd.f32 %v1957, 1e-05
    %v1960 = vrsqrt.pop %v1958
    %v1961 = vrsqrt.pop %v1959
    %v1962 = vmul.f32 %v1946, %v1960
    %v1963 = vmul.f32 %v1947, %v1961
    %v1964 = vlaneseq
    %v1965 = vshrl.u32 %v1964, 7
    %v1966 = vsub.s32 0, %v1965
    %v1967 = vrot.slane %v1936, %v1966
    %v1968 = vmul.f32 %v1962, %v1967
    %v1969 = vmul.f32 %v1963, %v1967
    %v1970 = vlaneseq
    %v1971 = vshrl.u32 %v1970, 7
    %v1972 = vsub.s32 0, %v1971
    %v1973 = vrot.slane %v1937, %v1972
    %v1974 = vadd.f32 %v1968, %v1973
    %v1975 = vadd.f32 %v1969, %v1973
    %s1976 = scalar_lea.vmem [#allocation8], 168
    %v1977 = vld [vmem:[%s1976] sm:$0xff]
    %v1978 = vld [vmem:[%s1976 + $0x8] sm:$0xff]
    %v1979 = vld [vmem:[%s1976 + $0x10] sm:$0xff]
    %v1980 = vld [vmem:[%s1976 + $0x18] sm:$0xff]
    %v1981 = vld [vmem:[%s1976 + $0xa0] sm:$0x1]
    %v1982 = vlaneseq
    %v1983 = vshrl.u32 %v1982, 7
    %v1984 = vsub.s32 0, %v1983
    %v1985 = vrot.slane %v1981, %v1984
    %v1987 = vsel %vm174, %v1974, 0
    %v1990 = vsel %vm174, %v1975, 0
    %1992 = vmatprep.subr.mxu0 0.0
    %1993 = vmatpush1.msra.mxu0 %v1977
    %1994 = vmatprep.subr.mxu0 0.0
    %1995 = vmatpush1.msra.mxu0 %v1978
    %1996 = vmatprep.subr.mxu0 0.0
    %1997 = vmatpush1.msra.mxu0 %v1979
    %1998 = vmatprep.subr.mxu0 0.0
    %1999 = vmatpush1.msra.mxu0 %v1980
    %2000 = vmatprep.subr.mxu0 0.0
    %2001 = vmatpush1.msra.mxu0 0.0
    %2002 = vmatprep.subr.mxu0 0.0
    %2003 = vmatpush1.msra.mxu0 0.0
    %2004 = vmatprep.subr.mxu0 0.0
    %2005 = vmatpush1.msra.mxu0 0.0
    %2006 = vmatprep.subr.mxu0 0.0
    %2007 = vmatpush1.msra.mxu0 0.0
    %2008 = vmatprep.subr.mxu0 0.0
    %2009 = vmatpush1.msra.mxu0 0.0
    %2010 = vmatprep.subr.mxu0 0.0
    %2011 = vmatpush1.msra.mxu0 0.0
    %2012 = vmatprep.subr.mxu0 0.0
    %2013 = vmatpush1.msra.mxu0 0.0
    %2014 = vmatprep.subr.mxu0 0.0
    %2015 = vmatpush1.msra.mxu0 0.0
    %2016 = vmatprep.subr.mxu0 0.0
    %2017 = vmatpush1.msra.mxu0 0.0
    %2018 = vmatprep.subr.mxu0 0.0
    %2019 = vmatpush1.msra.mxu0 0.0
    %2020 = vmatprep.subr.mxu0 0.0
    %2021 = vmatpush1.msra.mxu0 0.0
    %2022 = vmatprep.subr.mxu0 0.0
    %2023 = vmatpush1.msra.mxu0 0.0
    %2024 = vmatprep.subr.mxu0 0.0
    %2025 = vmatpush1.msra.mxu0 0.0
    %2026 = vmatprep.subr.mxu0 0.0
    %2027 = vmatpush1.msra.mxu0 0.0
    %2028 = vmatprep.subr.mxu0 0.0
    %2029 = vmatpush1.msra.mxu0 0.0
    %2030 = vmatprep.subr.mxu0 0.0
    %2031 = vmatpush1.msra.mxu0 0.0
    %2032 = vmatprep.subr.mxu0 0.0
    %2033 = vmatpush1.msra.mxu0 0.0
    %2034 = vmatprep.subr.mxu0 0.0
    %2035 = vmatpush1.msra.mxu0 0.0
    %2036 = vmatprep.subr.mxu0 0.0
    %2037 = vmatpush1.msra.mxu0 0.0
    %2038 = vmatprep.subr.mxu0 0.0
    %2039 = vmatpush1.msra.mxu0 0.0
    %2040 = vmatprep.subr.mxu0 0.0
    %2041 = vmatpush1.msra.mxu0 0.0
    %2042 = vmatprep.subr.mxu0 0.0
    %2043 = vmatpush1.msra.mxu0 0.0
    %2044 = vmatprep.subr.mxu0 0.0
    %2045 = vmatpush1.msra.mxu0 0.0
    %2046 = vmatprep.subr.mxu0 0.0
    %2047 = vmatpush1.msra.mxu0 0.0
    %2048 = vmatprep.subr.mxu0 0.0
    %2049 = vmatpush1.msra.mxu0 0.0
    %2050 = vmatprep.subr.mxu0 0.0
    %2051 = vmatpush1.msra.mxu0 0.0
    %2052 = vmatprep.subr.mxu0 0.0
    %2053 = vmatpush1.msra.mxu0 0.0
    %2054 = vmatprep.subr.mxu0 0.0
    %2055 = vmatpush1.msra.mxu0 0.0
    %2056 = vmatprep.mubr.f32.mxu0 0.0
    %2057 = vmatmul.mubr.f32.gmra.mrb[0].mxu0 %v1987
    %v2058 = vpop.f32.mrb[0].mxu0
    %v2059 = vadd.f32 %v1985, %v2058
    %v2060 = vpop.f32.mrb[0].mxu0
    %2061 = vmatprep.mubr.f32.mxu0 0.0
    %2062 = vmatmul.mubr.f32.gmra.mrb[0].mxu0 %v1990
    %v2063 = vpop.f32.mrb[0].mxu0
    %v2064 = vadd.f32 %v1985, %v2063
    %v2065 = vpop.f32.mrb[0].mxu0
    %2066 = vdwg.mxu0
    %2068 = vrot.lane.b32.xlu0 %v2059, 96
    %v2069 = vpop.permute.xlu0 %2068
    %v2070 = vsel %vm259, %v2059, 0
    %v2072 = vsel %vm259, %v2069, 0
    %2074 = vmatprep.subr.mxu0 0.0
    %2075 = vmatpush1.xpose.msra.mxu0 %v2072
    %2076 = vmatprep.subr.mxu0 0.0
    %2077 = vmatpush1.xpose.msra.mxu0 0.0
    %2078 = vmatprep.subr.mxu0 0.0
    %2079 = vmatpush1.xpose.msra.mxu0 0.0
    %2080 = vmatprep.subr.mxu0 0.0
    %2081 = vmatpush1.xpose.msra.mxu0 0.0
    %2082 = vmatprep.subr.mxu0 0.0
    %2083 = vmatpush1.xpose.msra.mxu0 0.0
    %2084 = vmatprep.subr.mxu0 0.0
    %2085 = vmatpush1.xpose.msra.mxu0 0.0
    %2086 = vmatprep.subr.mxu0 0.0
    %2087 = vmatpush1.xpose.msra.mxu0 0.0
    %2088 = vmatprep.subr.mxu0 0.0
    %2089 = vmatpush1.xpose.msra.mxu0 0.0
    %2090 = vmatprep.subr.mxu0 0.0
    %2091 = vmatpush1.xpose.msra.mxu0 0.0
    %2092 = vmatprep.subr.mxu0 0.0
    %2093 = vmatpush1.xpose.msra.mxu0 0.0
    %2094 = vmatprep.subr.mxu0 0.0
    %2095 = vmatpush1.xpose.msra.mxu0 0.0
    %2096 = vmatprep.subr.mxu0 0.0
    %2097 = vmatpush1.xpose.msra.mxu0 0.0
    %2098 = vmatprep.subr.mxu0 0.0
    %2099 = vmatpush1.xpose.msra.mxu0 0.0
    %2100 = vmatprep.subr.mxu0 0.0
    %2101 = vmatpush1.xpose.msra.mxu0 0.0
    %2102 = vmatprep.subr.mxu0 0.0
    %2103 = vmatpush1.xpose.msra.mxu0 0.0
    %2104 = vmatprep.subr.mxu0 0.0
    %2105 = vmatpush1.xpose.msra.mxu0 0.0
    %2106 = vmatprep.subr.mxu0 0.0
    %2107 = vmatpush1.xpose.msra.mxu0 0.0
    %2108 = vmatprep.subr.mxu0 0.0
    %2109 = vmatpush1.xpose.msra.mxu0 0.0
    %2110 = vmatprep.subr.mxu0 0.0
    %2111 = vmatpush1.xpose.msra.mxu0 0.0
    %2112 = vmatprep.subr.mxu0 0.0
    %2113 = vmatpush1.xpose.msra.mxu0 0.0
    %2114 = vmatprep.subr.mxu0 0.0
    %2115 = vmatpush1.xpose.msra.mxu0 0.0
    %2116 = vmatprep.subr.mxu0 0.0
    %2117 = vmatpush1.xpose.msra.mxu0 0.0
    %2118 = vmatprep.subr.mxu0 0.0
    %2119 = vmatpush1.xpose.msra.mxu0 0.0
    %2120 = vmatprep.subr.mxu0 0.0
    %2121 = vmatpush1.xpose.msra.mxu0 0.0
    %2122 = vmatprep.subr.mxu0 0.0
    %2123 = vmatpush1.xpose.msra.mxu0 0.0
    %2124 = vmatprep.subr.mxu0 0.0
    %2125 = vmatpush1.xpose.msra.mxu0 0.0
    %2126 = vmatprep.subr.mxu0 0.0
    %2127 = vmatpush1.xpose.msra.mxu0 0.0
    %2128 = vmatprep.subr.mxu0 0.0
    %2129 = vmatpush1.xpose.msra.mxu0 0.0
    %2130 = vmatprep.subr.mxu0 0.0
    %2131 = vmatpush1.xpose.msra.mxu0 0.0
    %2132 = vmatprep.subr.mxu0 0.0
    %2133 = vmatpush1.xpose.msra.mxu0 0.0
    %2134 = vmatprep.subr.mxu0 0.0
    %2135 = vmatpush1.xpose.msra.mxu0 0.0
    %2136 = vmatprep.subr.mxu0 0.0
    %2137 = vmatpush1.xpose.msra.mxu0 0.0
    %2138 = vmatprep.mubr.f32.mxu0 0.0
    %2139 = vmatmul.mubr.f32.gmra.mrb[0].mxu0 %v2070
    %v2140 = vpop.f32.mrb[0].mxu0
    %v2141 = vadd.f32 0.0, %v2140
    %v2142 = vpop.f32.mrb[0].mxu0
    %2143 = vdwg.mxu0
    %2145 = vrot.lane.b32.xlu0 %v2064, 96
    %v2146 = vpop.permute.xlu0 %2145
    %v2147 = vsel %vm259, %v2064, 0
    %v2149 = vsel %vm259, %v2146, 0
    %2151 = vmatprep.subr.mxu0 0.0
    %2152 = vmatpush1.xpose.msra.mxu0 %v2149
    %2153 = vmatprep.subr.mxu0 0.0
    %2154 = vmatpush1.xpose.msra.mxu0 0.0
    %2155 = vmatprep.subr.mxu0 0.0
    %2156 = vmatpush1.xpose.msra.mxu0 0.0
    %2157 = vmatprep.subr.mxu0 0.0
    %2158 = vmatpush1.xpose.msra.mxu0 0.0
    %2159 = vmatprep.subr.mxu0 0.0
    %2160 = vmatpush1.xpose.msra.mxu0 0.0
    %2161 = vmatprep.subr.mxu0 0.0
    %2162 = vmatpush1.xpose.msra.mxu0 0.0
    %2163 = vmatprep.subr.mxu0 0.0
    %2164 = vmatpush1.xpose.msra.mxu0 0.0
    %2165 = vmatprep.subr.mxu0 0.0
    %2166 = vmatpush1.xpose.msra.mxu0 0.0
    %2167 = vmatprep.subr.mxu0 0.0
    %2168 = vmatpush1.xpose.msra.mxu0 0.0
    %2169 = vmatprep.subr.mxu0 0.0
    %2170 = vmatpush1.xpose.msra.mxu0 0.0
    %2171 = vmatprep.subr.mxu0 0.0
    %2172 = vmatpush1.xpose.msra.mxu0 0.0
    %2173 = vmatprep.subr.mxu0 0.0
    %2174 = vmatpush1.xpose.msra.mxu0 0.0
    %2175 = vmatprep.subr.mxu0 0.0
    %2176 = vmatpush1.xpose.msra.mxu0 0.0
    %2177 = vmatprep.subr.mxu0 0.0
    %2178 = vmatpush1.xpose.msra.mxu0 0.0
    %2179 = vmatprep.subr.mxu0 0.0
    %2180 = vmatpush1.xpose.msra.mxu0 0.0
    %2181 = vmatprep.subr.mxu0 0.0
    %2182 = vmatpush1.xpose.msra.mxu0 0.0
    %2183 = vmatprep.subr.mxu0 0.0
    %2184 = vmatpush1.xpose.msra.mxu0 0.0
    %2185 = vmatprep.subr.mxu0 0.0
    %2186 = vmatpush1.xpose.msra.mxu0 0.0
    %2187 = vmatprep.subr.mxu0 0.0
    %2188 = vmatpush1.xpose.msra.mxu0 0.0
    %2189 = vmatprep.subr.mxu0 0.0
    %2190 = vmatpush1.xpose.msra.mxu0 0.0
    %2191 = vmatprep.subr.mxu0 0.0
    %2192 = vmatpush1.xpose.msra.mxu0 0.0
    %2193 = vmatprep.subr.mxu0 0.0
    %2194 = vmatpush1.xpose.msra.mxu0 0.0
    %2195 = vmatprep.subr.mxu0 0.0
    %2196 = vmatpush1.xpose.msra.mxu0 0.0
    %2197 = vmatprep.subr.mxu0 0.0
    %2198 = vmatpush1.xpose.msra.mxu0 0.0
    %2199 = vmatprep.subr.mxu0 0.0
    %2200 = vmatpush1.xpose.msra.mxu0 0.0
    %2201 = vmatprep.subr.mxu0 0.0
    %2202 = vmatpush1.xpose.msra.mxu0 0.0
    %2203 = vmatprep.subr.mxu0 0.0
    %2204 = vmatpush1.xpose.msra.mxu0 0.0
    %2205 = vmatprep.subr.mxu0 0.0
    %2206 = vmatpush1.xpose.msra.mxu0 0.0
    %2207 = vmatprep.subr.mxu0 0.0
    %2208 = vmatpush1.xpose.msra.mxu0 0.0
    %2209 = vmatprep.subr.mxu0 0.0
    %2210 = vmatpush1.xpose.msra.mxu0 0.0
    %2211 = vmatprep.subr.mxu0 0.0
    %2212 = vmatpush1.xpose.msra.mxu0 0.0
    %2213 = vmatprep.subr.mxu0 0.0
    %2214 = vmatpush1.xpose.msra.mxu0 0.0
    %2215 = vmatprep.mubr.f32.mxu0 0.0
    %2216 = vmatmul.mubr.f32.gmra.mrb[0].mxu0 %v2147
    %v2217 = vpop.f32.mrb[0].mxu0
    %v2218 = vadd.f32 0.0, %v2217
    %v2219 = vpop.f32.mrb[0].mxu0
    %2220 = vdwg.mxu0
    %v2221 = vmul.f32 %v2141, 0.35355338
    %v2222 = vmul.f32 %v2218, 0.35355338
    %v2223 = vsel %vm259, %v2221, -inf
    %2224 = vmax.xlane.f32.xlu0 %v2223
    %v2225 = vpop.xlane.xlu0 %2224
    %v2226 = vsel %vm259, %v2222, -inf
    %2227 = vmax.xlane.f32.xlu0 %v2226
    %v2228 = vpop.xlane.xlu0 %2227
    %v2229 = vsub.f32 %v2221, %v2225
    %v2230 = vsub.f32 %v2222, %v2228
    %v2231 = vmul.f32 %v2229, 1.442695
    %v2232 = vpow.pop %v2231
    %v2233 = vmul.f32 %v2230, 1.442695
    %v2234 = vpow.pop %v2233
    %v2235 = vsel %vm259, %v2232, 0.0
    %2236 = vadd.xlane.f32.xlu0 %v2235
    %v2237 = vpop.xlane.xlu0 %2236
    %v2238 = vsel %vm259, %v2234, 0.0
    %2239 = vadd.xlane.f32.xlu0 %v2238
    %v2240 = vpop.xlane.xlu0 %2239
    %v2241 = vrcp.pop %v2237
    %v2242 = vmul.f32 %v2232, %v2241
    %v2243 = vrcp.pop %v2240
    %v2244 = vmul.f32 %v2234, %v2243
    %2245 = vrot.lane.b32.xlu0 %v2059, 64
    %v2246 = vpop.permute.xlu0 %2245
    %v2249 = vsel %vm259, %v2242, 0
    %2251 = vmatprep.subr.mxu0 0.0
    %2252 = vmatpush1.msra.mxu0 %v2246
    %2253 = vmatprep.subr.mxu0 0.0
    %2254 = vmatpush1.msra.mxu0 0.0
    %2255 = vmatprep.subr.mxu0 0.0
    %2256 = vmatpush1.msra.mxu0 0.0
    %2257 = vmatprep.subr.mxu0 0.0
    %2258 = vmatpush1.msra.mxu0 0.0
    %2259 = vmatprep.subr.mxu0 0.0
    %2260 = vmatpush1.msra.mxu0 0.0
    %2261 = vmatprep.subr.mxu0 0.0
    %2262 = vmatpush1.msra.mxu0 0.0
    %2263 = vmatprep.subr.mxu0 0.0
    %2264 = vmatpush1.msra.mxu0 0.0
    %2265 = vmatprep.subr.mxu0 0.0
    %2266 = vmatpush1.msra.mxu0 0.0
    %2267 = vmatprep.subr.mxu0 0.0
    %2268 = vmatpush1.msra.mxu0 0.0
    %2269 = vmatprep.subr.mxu0 0.0
    %2270 = vmatpush1.msra.mxu0 0.0
    %2271 = vmatprep.subr.mxu0 0.0
    %2272 = vmatpush1.msra.mxu0 0.0
    %2273 = vmatprep.subr.mxu0 0.0
    %2274 = vmatpush1.msra.mxu0 0.0
    %2275 = vmatprep.subr.mxu0 0.0
    %2276 = vmatpush1.msra.mxu0 0.0
    %2277 = vmatprep.subr.mxu0 0.0
    %2278 = vmatpush1.msra.mxu0 0.0
    %2279 = vmatprep.subr.mxu0 0.0
    %2280 = vmatpush1.msra.mxu0 0.0
    %2281 = vmatprep.subr.mxu0 0.0
    %2282 = vmatpush1.msra.mxu0 0.0
    %2283 = vmatprep.subr.mxu0 0.0
    %2284 = vmatpush1.msra.mxu0 0.0
    %2285 = vmatprep.subr.mxu0 0.0
    %2286 = vmatpush1.msra.mxu0 0.0
    %2287 = vmatprep.subr.mxu0 0.0
    %2288 = vmatpush1.msra.mxu0 0.0
    %2289 = vmatprep.subr.mxu0 0.0
    %2290 = vmatpush1.msra.mxu0 0.0
    %2291 = vmatprep.subr.mxu0 0.0
    %2292 = vmatpush1.msra.mxu0 0.0
    %2293 = vmatprep.subr.mxu0 0.0
    %2294 = vmatpush1.msra.mxu0 0.0
    %2295 = vmatprep.subr.mxu0 0.0
    %2296 = vmatpush1.msra.mxu0 0.0
    %2297 = vmatprep.subr.mxu0 0.0
    %2298 = vmatpush1.msra.mxu0 0.0
    %2299 = vmatprep.subr.mxu0 0.0
    %2300 = vmatpush1.msra.mxu0 0.0
    %2301 = vmatprep.subr.mxu0 0.0
    %2302 = vmatpush1.msra.mxu0 0.0
    %2303 = vmatprep.subr.mxu0 0.0
    %2304 = vmatpush1.msra.mxu0 0.0
    %2305 = vmatprep.subr.mxu0 0.0
    %2306 = vmatpush1.msra.mxu0 0.0
    %2307 = vmatprep.subr.mxu0 0.0
    %2308 = vmatpush1.msra.mxu0 0.0
    %2309 = vmatprep.subr.mxu0 0.0
    %2310 = vmatpush1.msra.mxu0 0.0
    %2311 = vmatprep.subr.mxu0 0.0
    %2312 = vmatpush1.msra.mxu0 0.0
    %2313 = vmatprep.subr.mxu0 0.0
    %2314 = vmatpush1.msra.mxu0 0.0
    %2315 = vmatprep.mubr.f32.mxu0 0.0
    %2316 = vmatmul.mubr.f32.gmra.mrb[0].mxu0 %v2249
    %v2317 = vpop.f32.mrb[0].mxu0
    %v2318 = vadd.f32 0.0, %v2317
    %v2319 = vpop.f32.mrb[0].mxu0
    %2320 = vdwg.mxu0
    %2321 = vrot.lane.b32.xlu0 %v2064, 64
    %v2322 = vpop.permute.xlu0 %2321
    %v2325 = vsel %vm259, %v2244, 0
    %2327 = vmatprep.subr.mxu0 0.0
    %2328 = vmatpush1.msra.mxu0 %v2322
    %2329 = vmatprep.subr.mxu0 0.0
    %2330 = vmatpush1.msra.mxu0 0.0
    %2331 = vmatprep.subr.mxu0 0.0
    %2332 = vmatpush1.msra.mxu0 0.0
    %2333 = vmatprep.subr.mxu0 0.0
    %2334 = vmatpush1.msra.mxu0 0.0
    %2335 = vmatprep.subr.mxu0 0.0
    %2336 = vmatpush1.msra.mxu0 0.0
    %2337 = vmatprep.subr.mxu0 0.0
    %2338 = vmatpush1.msra.mxu0 0.0
    %2339 = vmatprep.subr.mxu0 0.0
    %2340 = vmatpush1.msra.mxu0 0.0
    %2341 = vmatprep.subr.mxu0 0.0
    %2342 = vmatpush1.msra.mxu0 0.0
    %2343 = vmatprep.subr.mxu0 0.0
    %2344 = vmatpush1.msra.mxu0 0.0
    %2345 = vmatprep.subr.mxu0 0.0
    %2346 = vmatpush1.msra.mxu0 0.0
    %2347 = vmatprep.subr.mxu0 0.0
    %2348 = vmatpush1.msra.mxu0 0.0
    %2349 = vmatprep.subr.mxu0 0.0
    %2350 = vmatpush1.msra.mxu0 0.0
    %2351 = vmatprep.subr.mxu0 0.0
    %2352 = vmatpush1.msra.mxu0 0.0
    %2353 = vmatprep.subr.mxu0 0.0
    %2354 = vmatpush1.msra.mxu0 0.0
    %2355 = vmatprep.subr.mxu0 0.0
    %2356 = vmatpush1.msra.mxu0 0.0
    %2357 = vmatprep.subr.mxu0 0.0
    %2358 = vmatpush1.msra.mxu0 0.0
    %2359 = vmatprep.subr.mxu0 0.0
    %2360 = vmatpush1.msra.mxu0 0.0
    %2361 = vmatprep.subr.mxu0 0.0
    %2362 = vmatpush1.msra.mxu0 0.0
    %2363 = vmatprep.subr.mxu0 0.0
    %2364 = vmatpush1.msra.mxu0 0.0
    %2365 = vmatprep.subr.mxu0 0.0
    %2366 = vmatpush1.msra.mxu0 0.0
    %2367 = vmatprep.subr.mxu0 0.0
    %2368 = vmatpush1.msra.mxu0 0.0
    %2369 = vmatprep.subr.mxu0 0.0
    %2370 = vmatpush1.msra.mxu0 0.0
    %2371 = vmatprep.subr.mxu0 0.0
    %2372 = vmatpush1.msra.mxu0 0.0
    %2373 = vmatprep.subr.mxu0 0.0
    %2374 = vmatpush1.msra.mxu0 0.0
    %2375 = vmatprep.subr.mxu0 0.0
    %2376 = vmatpush1.msra.mxu0 0.0
    %2377 = vmatprep.subr.mxu0 0.0
    %2378 = vmatpush1.msra.mxu0 0.0
    %2379 = vmatprep.subr.mxu0 0.0
    %2380 = vmatpush1.msra.mxu0 0.0
    %2381 = vmatprep.subr.mxu0 0.0
    %2382 = vmatpush1.msra.mxu0 0.0
    %2383 = vmatprep.subr.mxu0 0.0
    %2384 = vmatpush1.msra.mxu0 0.0
    %2385 = vmatprep.subr.mxu0 0.0
    %2386 = vmatpush1.msra.mxu0 0.0
    %2387 = vmatprep.subr.mxu0 0.0
    %2388 = vmatpush1.msra.mxu0 0.0
    %2389 = vmatprep.subr.mxu0 0.0
    %2390 = vmatpush1.msra.mxu0 0.0
    %2391 = vmatprep.mubr.f32.mxu0 0.0
    %2392 = vmatmul.mubr.f32.gmra.mrb[0].mxu0 %v2325
    %v2393 = vpop.f32.mrb[0].mxu0
    %v2394 = vadd.f32 0.0, %v2393
    %v2395 = vpop.f32.mrb[0].mxu0
    %2396 = vdwg.mxu0
    %2397 = vrot.lane.b32.xlu0 %v2059, 120
    %v2398 = vpop.permute.xlu0 %2397
    %2399 = vrot.lane.b32.xlu0 %v2059, 88
    %v2400 = vpop.permute.xlu0 %2399
    %v2401 = vsel %vm259, %v2398, 0
    %v2403 = vsel %vm259, %v2400, 0
    %2405 = vmatprep.subr.mxu0 0.0
    %2406 = vmatpush1.xpose.msra.mxu0 %v2403
    %2407 = vmatprep.subr.mxu0 0.0
    %2408 = vmatpush1.xpose.msra.mxu0 0.0
    %2409 = vmatprep.subr.mxu0 0.0
    %2410 = vmatpush1.xpose.msra.mxu0 0.0
    %2411 = vmatprep.subr.mxu0 0.0
    %2412 = vmatpush1.xpose.msra.mxu0 0.0
    %2413 = vmatprep.subr.mxu0 0.0
    %2414 = vmatpush1.xpose.msra.mxu0 0.0
    %2415 = vmatprep.subr.mxu0 0.0
    %2416 = vmatpush1.xpose.msra.mxu0 0.0
    %2417 = vmatprep.subr.mxu0 0.0
    %2418 = vmatpush1.xpose.msra.mxu0 0.0
    %2419 = vmatprep.subr.mxu0 0.0
    %2420 = vmatpush1.xpose.msra.mxu0 0.0
    %2421 = vmatprep.subr.mxu0 0.0
    %2422 = vmatpush1.xpose.msra.mxu0 0.0
    %2423 = vmatprep.subr.mxu0 0.0
    %2424 = vmatpush1.xpose.msra.mxu0 0.0
    %2425 = vmatprep.subr.mxu0 0.0
    %2426 = vmatpush1.xpose.msra.mxu0 0.0
    %2427 = vmatprep.subr.mxu0 0.0
    %2428 = vmatpush1.xpose.msra.mxu0 0.0
    %2429 = vmatprep.subr.mxu0 0.0
    %2430 = vmatpush1.xpose.msra.mxu0 0.0
    %2431 = vmatprep.subr.mxu0 0.0
    %2432 = vmatpush1.xpose.msra.mxu0 0.0
    %2433 = vmatprep.subr.mxu0 0.0
    %2434 = vmatpush1.xpose.msra.mxu0 0.0
    %2435 = vmatprep.subr.mxu0 0.0
    %2436 = vmatpush1.xpose.msra.mxu0 0.0
    %2437 = vmatprep.subr.mxu0 0.0
    %2438 = vmatpush1.xpose.msra.mxu0 0.0
    %2439 = vmatprep.subr.mxu0 0.0
    %2440 = vmatpush1.xpose.msra.mxu0 0.0
    %2441 = vmatprep.subr.mxu0 0.0
    %2442 = vmatpush1.xpose.msra.mxu0 0.0
    %2443 = vmatprep.subr.mxu0 0.0
    %2444 = vmatpush1.xpose.msra.mxu0 0.0
    %2445 = vmatprep.subr.mxu0 0.0
    %2446 = vmatpush1.xpose.msra.mxu0 0.0
    %2447 = vmatprep.subr.mxu0 0.0
    %2448 = vmatpush1.xpose.msra.mxu0 0.0
    %2449 = vmatprep.subr.mxu0 0.0
    %2450 = vmatpush1.xpose.msra.mxu0 0.0
    %2451 = vmatprep.subr.mxu0 0.0
    %2452 = vmatpush1.xpose.msra.mxu0 0.0
    %2453 = vmatprep.subr.mxu0 0.0
    %2454 = vmatpush1.xpose.msra.mxu0 0.0
    %2455 = vmatprep.subr.mxu0 0.0
    %2456 = vmatpush1.xpose.msra.mxu0 0.0
    %2457 = vmatprep.subr.mxu0 0.0
    %2458 = vmatpush1.xpose.msra.mxu0 0.0
    %2459 = vmatprep.subr.mxu0 0.0
    %2460 = vmatpush1.xpose.msra.mxu0 0.0
    %2461 = vmatprep.subr.mxu0 0.0
    %2462 = vmatpush1.xpose.msra.mxu0 0.0
    %2463 = vmatprep.subr.mxu0 0.0
    %2464 = vmatpush1.xpose.msra.mxu0 0.0
    %2465 = vmatprep.subr.mxu0 0.0
    %2466 = vmatpush1.xpose.msra.mxu0 0.0
    %2467 = vmatprep.subr.mxu0 0.0
    %2468 = vmatpush1.xpose.msra.mxu0 0.0
    %2469 = vmatprep.mubr.f32.mxu0 0.0
    %2470 = vmatmul.mubr.f32.gmra.mrb[0].mxu0 %v2401
    %v2471 = vpop.f32.mrb[0].mxu0
    %v2472 = vadd.f32 0.0, %v2471
    %v2473 = vpop.f32.mrb[0].mxu0
    %2474 = vdwg.mxu0
    %2475 = vrot.lane.b32.xlu0 %v2064, 120
    %v2476 = vpop.permute.xlu0 %2475
    %2477 = vrot.lane.b32.xlu0 %v2064, 88
    %v2478 = vpop.permute.xlu0 %2477
    %v2479 = vsel %vm259, %v2476, 0
    %v2481 = vsel %vm259, %v2478, 0
    %2483 = vmatprep.subr.mxu0 0.0
    %2484 = vmatpush1.xpose.msra.mxu0 %v2481
    %2485 = vmatprep.subr.mxu0 0.0
    %2486 = vmatpush1.xpose.msra.mxu0 0.0
    %2487 = vmatprep.subr.mxu0 0.0
    %2488 = vmatpush1.xpose.msra.mxu0 0.0
    %2489 = vmatprep.subr.mxu0 0.0
    %2490 = vmatpush1.xpose.msra.mxu0 0.0
    %2491 = vmatprep.subr.mxu0 0.0
    %2492 = vmatpush1.xpose.msra.mxu0 0.0
    %2493 = vmatprep.subr.mxu0 0.0
    %2494 = vmatpush1.xpose.msra.mxu0 0.0
    %2495 = vmatprep.subr.mxu0 0.0
    %2496 = vmatpush1.xpose.msra.mxu0 0.0
    %2497 = vmatprep.subr.mxu0 0.0
    %2498 = vmatpush1.xpose.msra.mxu0 0.0
    %2499 = vmatprep.subr.mxu0 0.0
    %2500 = vmatpush1.xpose.msra.mxu0 0.0
    %2501 = vmatprep.subr.mxu0 0.0
    %2502 = vmatpush1.xpose.msra.mxu0 0.0
    %2503 = vmatprep.subr.mxu0 0.0
    %2504 = vmatpush1.xpose.msra.mxu0 0.0
    %2505 = vmatprep.subr.mxu0 0.0
    %2506 = vmatpush1.xpose.msra.mxu0 0.0
    %2507 = vmatprep.subr.mxu0 0.0
    %2508 = vmatpush1.xpose.msra.mxu0 0.0
    %2509 = vmatprep.subr.mxu0 0.0
    %2510 = vmatpush1.xpose.msra.mxu0 0.0
    %2511 = vmatprep.subr.mxu0 0.0
    %2512 = vmatpush1.xpose.msra.mxu0 0.0
    %2513 = vmatprep.subr.mxu0 0.0
    %2514 = vmatpush1.xpose.msra.mxu0 0.0
    %2515 = vmatprep.subr.mxu0 0.0
    %2516 = vmatpush1.xpose.msra.mxu0 0.0
    %2517 = vmatprep.subr.mxu0 0.0
    %2518 = vmatpush1.xpose.msra.mxu0 0.0
    %2519 = vmatprep.subr.mxu0 0.0
    %2520 = vmatpush1.xpose.msra.mxu0 0.0
    %2521 = vmatprep.subr.mxu0 0.0
    %2522 = vmatpush1.xpose.msra.mxu0 0.0
    %2523 = vmatprep.subr.mxu0 0.0
    %2524 = vmatpush1.xpose.msra.mxu0 0.0
    %2525 = vmatprep.subr.mxu0 0.0
    %2526 = vmatpush1.xpose.msra.mxu0 0.0
    %2527 = vmatprep.subr.mxu0 0.0
    %2528 = vmatpush1.xpose.msra.mxu0 0.0
    %2529 = vmatprep.subr.mxu0 0.0
    %2530 = vmatpush1.xpose.msra.mxu0 0.0
    %2531 = vmatprep.subr.mxu0 0.0
    %2532 = vmatpush1.xpose.msra.mxu0 0.0
    %2533 = vmatprep.subr.mxu0 0.0
    %2534 = vmatpush1.xpose.msra.mxu0 0.0
    %2535 = vmatprep.subr.mxu0 0.0
    %2536 = vmatpush1.xpose.msra.mxu0 0.0
    %2537 = vmatprep.subr.mxu0 0.0
    %2538 = vmatpush1.xpose.msra.mxu0 0.0
    %2539 = vmatprep.subr.mxu0 0.0
    %2540 = vmatpush1.xpose.msra.mxu0 0.0
    %2541 = vmatprep.subr.mxu0 0.0
    %2542 = vmatpush1.xpose.msra.mxu0 0.0
    %2543 = vmatprep.subr.mxu0 0.0
    %2544 = vmatpush1.xpose.msra.mxu0 0.0
    %2545 = vmatprep.subr.mxu0 0.0
    %2546 = vmatpush1.xpose.msra.mxu0 0.0
    %2547 = vmatprep.mubr.f32.mxu0 0.0
    %2548 = vmatmul.mubr.f32.gmra.mrb[0].mxu0 %v2479
    %v2549 = vpop.f32.mrb[0].mxu0
    %v2550 = vadd.f32 0.0, %v2549
    %v2551 = vpop.f32.mrb[0].mxu0
    %2552 = vdwg.mxu0
    %v2553 = vmul.f32 %v2472, 0.35355338
    %v2554 = vmul.f32 %v2550, 0.35355338
    %v2555 = vsel %vm259, %v2553, -inf
    %2556 = vmax.xlane.f32.xlu0 %v2555
    %v2557 = vpop.xlane.xlu0 %2556
    %v2558 = vsel %vm259, %v2554, -inf
    %2559 = vmax.xlane.f32.xlu0 %v2558
    %v2560 = vpop.xlane.xlu0 %2559
    %v2561 = vsub.f32 %v2553, %v2557
    %v2562 = vsub.f32 %v2554, %v2560
    %v2563 = vmul.f32 %v2561, 1.442695
    %v2564 = vpow.pop %v2563
    %v2565 = vmul.f32 %v2562, 1.442695
    %v2566 = vpow.pop %v2565
    %v2567 = vsel %vm259, %v2564, 0.0
    %2568 = vadd.xlane.f32.xlu0 %v2567
    %v2569 = vpop.xlane.xlu0 %2568
    %v2570 = vsel %vm259, %v2566, 0.0
    %2571 = vadd.xlane.f32.xlu0 %v2570
    %v2572 = vpop.xlane.xlu0 %2571
    %v2573 = vrcp.pop %v2569
    %v2574 = vmul.f32 %v2564, %v2573
    %v2575 = vrcp.pop %v2572
    %v2576 = vmul.f32 %v2566, %v2575
    %2577 = vrot.lane.b32.xlu0 %v2059, 56
    %v2578 = vpop.permute.xlu0 %2577
    %v2581 = vsel %vm259, %v2574, 0
    %2583 = vmatprep.subr.mxu0 0.0
    %2584 = vmatpush1.msra.mxu0 %v2578
    %2585 = vmatprep.subr.mxu0 0.0
    %2586 = vmatpush1.msra.mxu0 0.0
    %2587 = vmatprep.subr.mxu0 0.0
    %2588 = vmatpush1.msra.mxu0 0.0
    %2589 = vmatprep.subr.mxu0 0.0
    %2590 = vmatpush1.msra.mxu0 0.0
    %2591 = vmatprep.subr.mxu0 0.0
    %2592 = vmatpush1.msra.mxu0 0.0
    %2593 = vmatprep.subr.mxu0 0.0
    %2594 = vmatpush1.msra.mxu0 0.0
    %2595 = vmatprep.subr.mxu0 0.0
    %2596 = vmatpush1.msra.mxu0 0.0
    %2597 = vmatprep.subr.mxu0 0.0
    %2598 = vmatpush1.msra.mxu0 0.0
    %2599 = vmatprep.subr.mxu0 0.0
    %2600 = vmatpush1.msra.mxu0 0.0
    %2601 = vmatprep.subr.mxu0 0.0
    %2602 = vmatpush1.msra.mxu0 0.0
    %2603 = vmatprep.subr.mxu0 0.0
    %2604 = vmatpush1.msra.mxu0 0.0
    %2605 = vmatprep.subr.mxu0 0.0
    %2606 = vmatpush1.msra.mxu0 0.0
    %2607 = vmatprep.subr.mxu0 0.0
    %2608 = vmatpush1.msra.mxu0 0.0
    %2609 = vmatprep.subr.mxu0 0.0
    %2610 = vmatpush1.msra.mxu0 0.0
    %2611 = vmatprep.subr.mxu0 0.0
    %2612 = vmatpush1.msra.mxu0 0.0
    %2613 = vmatprep.subr.mxu0 0.0
    %2614 = vmatpush1.msra.mxu0 0.0
    %2615 = vmatprep.subr.mxu0 0.0
    %2616 = vmatpush1.msra.mxu0 0.0
    %2617 = vmatprep.subr.mxu0 0.0
    %2618 = vmatpush1.msra.mxu0 0.0
    %2619 = vmatprep.subr.mxu0 0.0
    %2620 = vmatpush1.msra.mxu0 0.0
    %2621 = vmatprep.subr.mxu0 0.0
    %2622 = vmatpush1.msra.mxu0 0.0
    %2623 = vmatprep.subr.mxu0 0.0
    %2624 = vmatpush1.msra.mxu0 0.0
    %2625 = vmatprep.subr.mxu0 0.0
    %2626 = vmatpush1.msra.mxu0 0.0
    %2627 = vmatprep.subr.mxu0 0.0
    %2628 = vmatpush1.msra.mxu0 0.0
    %2629 = vmatprep.subr.mxu0 0.0
    %2630 = vmatpush1.msra.mxu0 0.0
    %2631 = vmatprep.subr.mxu0 0.0
    %2632 = vmatpush1.msra.mxu0 0.0
    %2633 = vmatprep.subr.mxu0 0.0
    %2634 = vmatpush1.msra.mxu0 0.0
    %2635 = vmatprep.subr.mxu0 0.0
    %2636 = vmatpush1.msra.mxu0 0.0
    %2637 = vmatprep.subr.mxu0 0.0
    %2638 = vmatpush1.msra.mxu0 0.0
    %2639 = vmatprep.subr.mxu0 0.0
    %2640 = vmatpush1.msra.mxu0 0.0
    %2641 = vmatprep.subr.mxu0 0.0
    %2642 = vmatpush1.msra.mxu0 0.0
    %2643 = vmatprep.subr.mxu0 0.0
    %2644 = vmatpush1.msra.mxu0 0.0
    %2645 = vmatprep.subr.mxu0 0.0
    %2646 = vmatpush1.msra.mxu0 0.0
    %2647 = vmatprep.mubr.f32.mxu0 0.0
    %2648 = vmatmul.mubr.f32.gmra.mrb[0].mxu0 %v2581
    %v2649 = vpop.f32.mrb[0].mxu0
    %v2650 = vadd.f32 0.0, %v2649
    %v2651 = vpop.f32.mrb[0].mxu0
    %2652 = vdwg.mxu0
    %2653 = vrot.lane.b32.xlu0 %v2064, 56
    %v2654 = vpop.permute.xlu0 %2653
    %v2657 = vsel %vm259, %v2576, 0
    %2659 = vmatprep.subr.mxu0 0.0
    %2660 = vmatpush1.msra.mxu0 %v2654
    %2661 = vmatprep.subr.mxu0 0.0
    %2662 = vmatpush1.msra.mxu0 0.0
    %2663 = vmatprep.subr.mxu0 0.0
    %2664 = vmatpush1.msra.mxu0 0.0
    %2665 = vmatprep.subr.mxu0 0.0
    %2666 = vmatpush1.msra.mxu0 0.0
    %2667 = vmatprep.subr.mxu0 0.0
    %2668 = vmatpush1.msra.mxu0 0.0
    %2669 = vmatprep.subr.mxu0 0.0
    %2670 = vmatpush1.msra.mxu0 0.0
    %2671 = vmatprep.subr.mxu0 0.0
    %2672 = vmatpush1.msra.mxu0 0.0
    %2673 = vmatprep.subr.mxu0 0.0
    %2674 = vmatpush1.msra.mxu0 0.0
    %2675 = vmatprep.subr.mxu0 0.0
    %2676 = vmatpush1.msra.mxu0 0.0
    %2677 = vmatprep.subr.mxu0 0.0
    %2678 = vmatpush1.msra.mxu0 0.0
    %2679 = vmatprep.subr.mxu0 0.0
    %2680 = vmatpush1.msra.mxu0 0.0
    %2681 = vmatprep.subr.mxu0 0.0
    %2682 = vmatpush1.msra.mxu0 0.0
    %2683 = vmatprep.subr.mxu0 0.0
    %2684 = vmatpush1.msra.mxu0 0.0
    %2685 = vmatprep.subr.mxu0 0.0
    %2686 = vmatpush1.msra.mxu0 0.0
    %2687 = vmatprep.subr.mxu0 0.0
    %2688 = vmatpush1.msra.mxu0 0.0
    %2689 = vmatprep.subr.mxu0 0.0
    %2690 = vmatpush1.msra.mxu0 0.0
    %2691 = vmatprep.subr.mxu0 0.0
    %2692 = vmatpush1.msra.mxu0 0.0
    %2693 = vmatprep.subr.mxu0 0.0
    %2694 = vmatpush1.msra.mxu0 0.0
    %2695 = vmatprep.subr.mxu0 0.0
    %2696 = vmatpush1.msra.mxu0 0.0
    %2697 = vmatprep.subr.mxu0 0.0
    %2698 = vmatpush1.msra.mxu0 0.0
    %2699 = vmatprep.subr.mxu0 0.0
    %2700 = vmatpush1.msra.mxu0 0.0
    %2701 = vmatprep.subr.mxu0 0.0
    %2702 = vmatpush1.msra.mxu0 0.0
    %2703 = vmatprep.subr.mxu0 0.0
    %2704 = vmatpush1.msra.mxu0 0.0
    %2705 = vmatprep.subr.mxu0 0.0
    %2706 = vmatpush1.msra.mxu0 0.0
    %2707 = vmatprep.subr.mxu0 0.0
    %2708 = vmatpush1.msra.mxu0 0.0
    %2709 = vmatprep.subr.mxu0 0.0
    %2710 = vmatpush1.msra.mxu0 0.0
    %2711 = vmatprep.subr.mxu0 0.0
    %2712 = vmatpush1.msra.mxu0 0.0
    %2713 = vmatprep.subr.mxu0 0.0
    %2714 = vmatpush1.msra.mxu0 0.0
    %2715 = vmatprep.subr.mxu0 0.0
    %2716 = vmatpush1.msra.mxu0 0.0
    %2717 = vmatprep.subr.mxu0 0.0
    %2718 = vmatpush1.msra.mxu0 0.0
    %2719 = vmatprep.subr.mxu0 0.0
    %2720 = vmatpush1.msra.mxu0 0.0
    %2721 = vmatprep.subr.mxu0 0.0
    %2722 = vmatpush1.msra.mxu0 0.0
    %2723 = vmatprep.mubr.f32.mxu0 0.0
    %2724 = vmatmul.mubr.f32.gmra.mrb[0].mxu0 %v2657
    %v2725 = vpop.f32.mrb[0].mxu0
    %v2726 = vadd.f32 0.0, %v2725
    %v2727 = vpop.f32.mrb[0].mxu0
    %2728 = vdwg.mxu0
    %2729 = vrot.lane.b32.xlu0 %v2059, 112
    %v2730 = vpop.permute.xlu0 %2729
    %2731 = vrot.lane.b32.xlu0 %v2059, 80
    %v2732 = vpop.permute.xlu0 %2731
    %v2733 = vsel %vm259, %v2730, 0
    %v2735 = vsel %vm259, %v2732, 0
    %2737 = vmatprep.subr.mxu0 0.0
    %2738 = vmatpush1.xpose.msra.mxu0 %v2735
    %2739 = vmatprep.subr.mxu0 0.0
    %2740 = vmatpush1.xpose.msra.mxu0 0.0
    %2741 = vmatprep.subr.mxu0 0.0
    %2742 = vmatpush1.xpose.msra.mxu0 0.0
    %2743 = vmatprep.subr.mxu0 0.0
    %2744 = vmatpush1.xpose.msra.mxu0 0.0
    %2745 = vmatprep.subr.mxu0 0.0
    %2746 = vmatpush1.xpose.msra.mxu0 0.0
    %2747 = vmatprep.subr.mxu0 0.0
    %2748 = vmatpush1.xpose.msra.mxu0 0.0
    %2749 = vmatprep.subr.mxu0 0.0
    %2750 = vmatpush1.xpose.msra.mxu0 0.0
    %2751 = vmatprep.subr.mxu0 0.0
    %2752 = vmatpush1.xpose.msra.mxu0 0.0
    %2753 = vmatprep.subr.mxu0 0.0
    %2754 = vmatpush1.xpose.msra.mxu0 0.0
    %2755 = vmatprep.subr.mxu0 0.0
    %2756 = vmatpush1.xpose.msra.mxu0 0.0
    %2757 = vmatprep.subr.mxu0 0.0
    %2758 = vmatpush1.xpose.msra.mxu0 0.0
    %2759 = vmatprep.subr.mxu0 0.0
    %2760 = vmatpush1.xpose.msra.mxu0 0.0
    %2761 = vmatprep.subr.mxu0 0.0
    %2762 = vmatpush1.xpose.msra.mxu0 0.0
    %2763 = vmatprep.subr.mxu0 0.0
    %2764 = vmatpush1.xpose.msra.mxu0 0.0
    %2765 = vmatprep.subr.mxu0 0.0
    %2766 = vmatpush1.xpose.msra.mxu0 0.0
    %2767 = vmatprep.subr.mxu0 0.0
    %2768 = vmatpush1.xpose.msra.mxu0 0.0
    %2769 = vmatprep.subr.mxu0 0.0
    %2770 = vmatpush1.xpose.msra.mxu0 0.0
    %2771 = vmatprep.subr.mxu0 0.0
    %2772 = vmatpush1.xpose.msra.mxu0 0.0
    %2773 = vmatprep.subr.mxu0 0.0
    %2774 = vmatpush1.xpose.msra.mxu0 0.0
    %2775 = vmatprep.subr.mxu0 0.0
    %2776 = vmatpush1.xpose.msra.mxu0 0.0
    %2777 = vmatprep.subr.mxu0 0.0
    %2778 = vmatpush1.xpose.msra.mxu0 0.0
    %2779 = vmatprep.subr.mxu0 0.0
    %2780 = vmatpush1.xpose.msra.mxu0 0.0
    %2781 = vmatprep.subr.mxu0 0.0
    %2782 = vmatpush1.xpose.msra.mxu0 0.0
    %2783 = vmatprep.subr.mxu0 0.0
    %2784 = vmatpush1.xpose.msra.mxu0 0.0
    %2785 = vmatprep.subr.mxu0 0.0
    %2786 = vmatpush1.xpose.msra.mxu0 0.0
    %2787 = vmatprep.subr.mxu0 0.0
    %2788 = vmatpush1.xpose.msra.mxu0 0.0
    %2789 = vmatprep.subr.mxu0 0.0
    %2790 = vmatpush1.xpose.msra.mxu0 0.0
    %2791 = vmatprep.subr.mxu0 0.0
    %2792 = vmatpush1.xpose.msra.mxu0 0.0
    %2793 = vmatprep.subr.mxu0 0.0
    %2794 = vmatpush1.xpose.msra.mxu0 0.0
    %2795 = vmatprep.subr.mxu0 0.0
    %2796 = vmatpush1.xpose.msra.mxu0 0.0
    %2797 = vmatprep.subr.mxu0 0.0
    %2798 = vmatpush1.xpose.msra.mxu0 0.0
    %2799 = vmatprep.subr.mxu0 0.0
    %2800 = vmatpush1.xpose.msra.mxu0 0.0
    %2801 = vmatprep.mubr.f32.mxu0 0.0
    %2802 = vmatmul.mubr.f32.gmra.mrb[0].mxu0 %v2733
    %v2803 = vpop.f32.mrb[0].mxu0
    %v2804 = vadd.f32 0.0, %v2803
    %v2805 = vpop.f32.mrb[0].mxu0
    %2806 = vdwg.mxu0
    %2807 = vrot.lane.b32.xlu0 %v2064, 112
    %v2808 = vpop.permute.xlu0 %2807
    %2809 = vrot.lane.b32.xlu0 %v2064, 80
    %v2810 = vpop.permute.xlu0 %2809
    %v2811 = vsel %vm259, %v2808, 0
    %v2813 = vsel %vm259, %v2810, 0
    %2815 = vmatprep.subr.mxu0 0.0
    %2816 = vmatpush1.xpose.msra.mxu0 %v2813
    %2817 = vmatprep.subr.mxu0 0.0
    %2818 = vmatpush1.xpose.msra.mxu0 0.0
    %2819 = vmatprep.subr.mxu0 0.0
    %2820 = vmatpush1.xpose.msra.mxu0 0.0
    %2821 = vmatprep.subr.mxu0 0.0
    %2822 = vmatpush1.xpose.msra.mxu0 0.0
    %2823 = vmatprep.subr.mxu0 0.0
    %2824 = vmatpush1.xpose.msra.mxu0 0.0
    %2825 = vmatprep.subr.mxu0 0.0
    %2826 = vmatpush1.xpose.msra.mxu0 0.0
    %2827 = vmatprep.subr.mxu0 0.0
    %2828 = vmatpush1.xpose.msra.mxu0 0.0
    %2829 = vmatprep.subr.mxu0 0.0
    %2830 = vmatpush1.xpose.msra.mxu0 0.0
    %2831 = vmatprep.subr.mxu0 0.0
    %2832 = vmatpush1.xpose.msra.mxu0 0.0
    %2833 = vmatprep.subr.mxu0 0.0
    %2834 = vmatpush1.xpose.msra.mxu0 0.0
    %2835 = vmatprep.subr.mxu0 0.0
    %2836 = vmatpush1.xpose.msra.mxu0 0.0
    %2837 = vmatprep.subr.mxu0 0.0
    %2838 = vmatpush1.xpose.msra.mxu0 0.0
    %2839 = vmatprep.subr.mxu0 0.0
    %2840 = vmatpush1.xpose.msra.mxu0 0.0
    %2841 = vmatprep.subr.mxu0 0.0
    %2842 = vmatpush1.xpose.msra.mxu0 0.0
    %2843 = vmatprep.subr.mxu0 0.0
    %2844 = vmatpush1.xpose.msra.mxu0 0.0
    %2845 = vmatprep.subr.mxu0 0.0
    %2846 = vmatpush1.xpose.msra.mxu0 0.0
    %2847 = vmatprep.subr.mxu0 0.0
    %2848 = vmatpush1.xpose.msra.mxu0 0.0
    %2849 = vmatprep.subr.mxu0 0.0
    %2850 = vmatpush1.xpose.msra.mxu0 0.0
    %2851 = vmatprep.subr.mxu0 0.0
    %2852 = vmatpush1.xpose.msra.mxu0 0.0
    %2853 = vmatprep.subr.mxu0 0.0
    %2854 = vmatpush1.xpose.msra.mxu0 0.0
    %2855 = vmatprep.subr.mxu0 0.0
    %2856 = vmatpush1.xpose.msra.mxu0 0.0
    %2857 = vmatprep.subr.mxu0 0.0
    %2858 = vmatpush1.xpose.msra.mxu0 0.0
    %2859 = vmatprep.subr.mxu0 0.0
    %2860 = vmatpush1.xpose.msra.mxu0 0.0
    %2861 = vmatprep.subr.mxu0 0.0
    %2862 = vmatpush1.xpose.msra.mxu0 0.0
    %2863 = vmatprep.subr.mxu0 0.0
    %2864 = vmatpush1.xpose.msra.mxu0 0.0
    %2865 = vmatprep.subr.mxu0 0.0
    %2866 = vmatpush1.xpose.msra.mxu0 0.0
    %2867 = vmatprep.subr.mxu0 0.0
    %2868 = vmatpush1.xpose.msra.mxu0 0.0
    %2869 = vmatprep.subr.mxu0 0.0
    %2870 = vmatpush1.xpose.msra.mxu0 0.0
    %2871 = vmatprep.subr.mxu0 0.0
    %2872 = vmatpush1.xpose.msra.mxu0 0.0
    %2873 = vmatprep.subr.mxu0 0.0
    %2874 = vmatpush1.xpose.msra.mxu0 0.0
    %2875 = vmatprep.subr.mxu0 0.0
    %2876 = vmatpush1.xpose.msra.mxu0 0.0
    %2877 = vmatprep.subr.mxu0 0.0
    %2878 = vmatpush1.xpose.msra.mxu0 0.0
    %2879 = vmatprep.mubr.f32.mxu0 0.0
    %2880 = vmatmul.mubr.f32.gmra.mrb[0].mxu0 %v2811
    %v2881 = vpop.f32.mrb[0].mxu0
    %v2882 = vadd.f32 0.0, %v2881
    %v2883 = vpop.f32.mrb[0].mxu0
    %2884 = vdwg.mxu0
    %v2885 = vmul.f32 %v2804, 0.35355338
    %v2886 = vmul.f32 %v2882, 0.35355338
    %v2887 = vsel %vm259, %v2885, -inf
    %2888 = vmax.xlane.f32.xlu0 %v2887
    %v2889 = vpop.xlane.xlu0 %2888
    %v2890 = vsel %vm259, %v2886, -inf
    %2891 = vmax.xlane.f32.xlu0 %v2890
    %v2892 = vpop.xlane.xlu0 %2891
    %v2893 = vsub.f32 %v2885, %v2889
    %v2894 = vsub.f32 %v2886, %v2892
    %v2895 = vmul.f32 %v2893, 1.442695
    %v2896 = vpow.pop %v2895
    %v2897 = vmul.f32 %v2894, 1.442695
    %v2898 = vpow.pop %v2897
    %v2899 = vsel %vm259, %v2896, 0.0
    %2900 = vadd.xlane.f32.xlu0 %v2899
    %v2901 = vpop.xlane.xlu0 %2900
    %v2902 = vsel %vm259, %v2898, 0.0
    %2903 = vadd.xlane.f32.xlu0 %v2902
    %v2904 = vpop.xlane.xlu0 %2903
    %v2905 = vrcp.pop %v2901
    %v2906 = vmul.f32 %v2896, %v2905
    %v2907 = vrcp.pop %v2904
    %v2908 = vmul.f32 %v2898, %v2907
    %2909 = vrot.lane.b32.xlu0 %v2059, 48
    %v2910 = vpop.permute.xlu0 %2909
    %v2913 = vsel %vm259, %v2906, 0
    %2915 = vmatprep.subr.mxu0 0.0
    %2916 = vmatpush1.msra.mxu0 %v2910
    %2917 = vmatprep.subr.mxu0 0.0
    %2918 = vmatpush1.msra.mxu0 0.0
    %2919 = vmatprep.subr.mxu0 0.0
    %2920 = vmatpush1.msra.mxu0 0.0
    %2921 = vmatprep.subr.mxu0 0.0
    %2922 = vmatpush1.msra.mxu0 0.0
    %2923 = vmatprep.subr.mxu0 0.0
    %2924 = vmatpush1.msra.mxu0 0.0
    %2925 = vmatprep.subr.mxu0 0.0
    %2926 = vmatpush1.msra.mxu0 0.0
    %2927 = vmatprep.subr.mxu0 0.0
    %2928 = vmatpush1.msra.mxu0 0.0
    %2929 = vmatprep.subr.mxu0 0.0
    %2930 = vmatpush1.msra.mxu0 0.0
    %2931 = vmatprep.subr.mxu0 0.0
    %2932 = vmatpush1.msra.mxu0 0.0
    %2933 = vmatprep.subr.mxu0 0.0
    %2934 = vmatpush1.msra.mxu0 0.0
    %2935 = vmatprep.subr.mxu0 0.0
    %2936 = vmatpush1.msra.mxu0 0.0
    %2937 = vmatprep.subr.mxu0 0.0
    %2938 = vmatpush1.msra.mxu0 0.0
    %2939 = vmatprep.subr.mxu0 0.0
    %2940 = vmatpush1.msra.mxu0 0.0
    %2941 = vmatprep.subr.mxu0 0.0
    %2942 = vmatpush1.msra.mxu0 0.0
    %2943 = vmatprep.subr.mxu0 0.0
    %2944 = vmatpush1.msra.mxu0 0.0
    %2945 = vmatprep.subr.mxu0 0.0
    %2946 = vmatpush1.msra.mxu0 0.0
    %2947 = vmatprep.subr.mxu0 0.0
    %2948 = vmatpush1.msra.mxu0 0.0
    %2949 = vmatprep.subr.mxu0 0.0
    %2950 = vmatpush1.msra.mxu0 0.0
    %2951 = vmatprep.subr.mxu0 0.0
    %2952 = vmatpush1.msra.mxu0 0.0
    %2953 = vmatprep.subr.mxu0 0.0
    %2954 = vmatpush1.msra.mxu0 0.0
    %2955 = vmatprep.subr.mxu0 0.0
    %2956 = vmatpush1.msra.mxu0 0.0
    %2957 = vmatprep.subr.mxu0 0.0
    %2958 = vmatpush1.msra.mxu0 0.0
    %2959 = vmatprep.subr.mxu0 0.0
    %2960 = vmatpush1.msra.mxu0 0.0
    %2961 = vmatprep.subr.mxu0 0.0
    %2962 = vmatpush1.msra.mxu0 0.0
    %2963 = vmatprep.subr.mxu0 0.0
    %2964 = vmatpush1.msra.mxu0 0.0
    %2965 = vmatprep.subr.mxu0 0.0
    %2966 = vmatpush1.msra.mxu0 0.0
    %2967 = vmatprep.subr.mxu0 0.0
    %2968 = vmatpush1.msra.mxu0 0.0
    %2969 = vmatprep.subr.mxu0 0.0
    %2970 = vmatpush1.msra.mxu0 0.0
    %2971 = vmatprep.subr.mxu0 0.0
    %2972 = vmatpush1.msra.mxu0 0.0
    %2973 = vmatprep.subr.mxu0 0.0
    %2974 = vmatpush1.msra.mxu0 0.0
    %2975 = vmatprep.subr.mxu0 0.0
    %2976 = vmatpush1.msra.mxu0 0.0
    %2977 = vmatprep.subr.mxu0 0.0
    %2978 = vmatpush1.msra.mxu0 0.0
    %2979 = vmatprep.mubr.f32.mxu0 0.0
    %2980 = vmatmul.mubr.f32.gmra.mrb[0].mxu0 %v2913
    %v2981 = vpop.f32.mrb[0].mxu0
    %v2982 = vadd.f32 0.0, %v2981
    %v2983 = vpop.f32.mrb[0].mxu0
    %2984 = vdwg.mxu0
    %2985 = vrot.lane.b32.xlu0 %v2064, 48
    %v2986 = vpop.permute.xlu0 %2985
    %v2989 = vsel %vm259, %v2908, 0
    %2991 = vmatprep.subr.mxu0 0.0
    %2992 = vmatpush1.msra.mxu0 %v2986
    %2993 = vmatprep.subr.mxu0 0.0
    %2994 = vmatpush1.msra.mxu0 0.0
    %2995 = vmatprep.subr.mxu0 0.0
    %2996 = vmatpush1.msra.mxu0 0.0
    %2997 = vmatprep.subr.mxu0 0.0
    %2998 = vmatpush1.msra.mxu0 0.0
    %2999 = vmatprep.subr.mxu0 0.0
    %3000 = vmatpush1.msra.mxu0 0.0
    %3001 = vmatprep.subr.mxu0 0.0
    %3002 = vmatpush1.msra.mxu0 0.0
    %3003 = vmatprep.subr.mxu0 0.0
    %3004 = vmatpush1.msra.mxu0 0.0
    %3005 = vmatprep.subr.mxu0 0.0
    %3006 = vmatpush1.msra.mxu0 0.0
    %3007 = vmatprep.subr.mxu0 0.0
    %3008 = vmatpush1.msra.mxu0 0.0
    %3009 = vmatprep.subr.mxu0 0.0
    %3010 = vmatpush1.msra.mxu0 0.0
    %3011 = vmatprep.subr.mxu0 0.0
    %3012 = vmatpush1.msra.mxu0 0.0
    %3013 = vmatprep.subr.mxu0 0.0
    %3014 = vmatpush1.msra.mxu0 0.0
    %3015 = vmatprep.subr.mxu0 0.0
    %3016 = vmatpush1.msra.mxu0 0.0
    %3017 = vmatprep.subr.mxu0 0.0
    %3018 = vmatpush1.msra.mxu0 0.0
    %3019 = vmatprep.subr.mxu0 0.0
    %3020 = vmatpush1.msra.mxu0 0.0
    %3021 = vmatprep.subr.mxu0 0.0
    %3022 = vmatpush1.msra.mxu0 0.0
    %3023 = vmatprep.subr.mxu0 0.0
    %3024 = vmatpush1.msra.mxu0 0.0
    %3025 = vmatprep.subr.mxu0 0.0
    %3026 = vmatpush1.msra.mxu0 0.0
    %3027 = vmatprep.subr.mxu0 0.0
    %3028 = vmatpush1.msra.mxu0 0.0
    %3029 = vmatprep.subr.mxu0 0.0
    %3030 = vmatpush1.msra.mxu0 0.0
    %3031 = vmatprep.subr.mxu0 0.0
    %3032 = vmatpush1.msra.mxu0 0.0
    %3033 = vmatprep.subr.mxu0 0.0
    %3034 = vmatpush1.msra.mxu0 0.0
    %3035 = vmatprep.subr.mxu0 0.0
    %3036 = vmatpush1.msra.mxu0 0.0
    %3037 = vmatprep.subr.mxu0 0.0
    %3038 = vmatpush1.msra.mxu0 0.0
    %3039 = vmatprep.subr.mxu0 0.0
    %3040 = vmatpush1.msra.mxu0 0.0
    %3041 = vmatprep.subr.mxu0 0.0
    %3042 = vmatpush1.msra.mxu0 0.0
    %3043 = vmatprep.subr.mxu0 0.0
    %3044 = vmatpush1.msra.mxu0 0.0
    %3045 = vmatprep.subr.mxu0 0.0
    %3046 = vmatpush1.msra.mxu0 0.0
    %3047 = vmatprep.subr.mxu0 0.0
    %3048 = vmatpush1.msra.mxu0 0.0
    %3049 = vmatprep.subr.mxu0 0.0
    %3050 = vmatpush1.msra.mxu0 0.0
    %3051 = vmatprep.subr.mxu0 0.0
    %3052 = vmatpush1.msra.mxu0 0.0
    %3053 = vmatprep.subr.mxu0 0.0
    %3054 = vmatpush1.msra.mxu0 0.0
    %3055 = vmatprep.mubr.f32.mxu0 0.0
    %3056 = vmatmul.mubr.f32.gmra.mrb[0].mxu0 %v2989
    %v3057 = vpop.f32.mrb[0].mxu0
    %v3058 = vadd.f32 0.0, %v3057
    %v3059 = vpop.f32.mrb[0].mxu0
    %3060 = vdwg.mxu0
    %3061 = vrot.lane.b32.xlu0 %v2059, 104
    %v3062 = vpop.permute.xlu0 %3061
    %3063 = vrot.lane.b32.xlu0 %v2059, 72
    %v3064 = vpop.permute.xlu0 %3063
    %v3065 = vsel %vm259, %v3062, 0
    %v3067 = vsel %vm259, %v3064, 0
    %3069 = vmatprep.subr.mxu0 0.0
    %3070 = vmatpush1.xpose.msra.mxu0 %v3067
    %3071 = vmatprep.subr.mxu0 0.0
    %3072 = vmatpush1.xpose.msra.mxu0 0.0
    %3073 = vmatprep.subr.mxu0 0.0
    %3074 = vmatpush1.xpose.msra.mxu0 0.0
    %3075 = vmatprep.subr.mxu0 0.0
    %3076 = vmatpush1.xpose.msra.mxu0 0.0
    %3077 = vmatprep.subr.mxu0 0.0
    %3078 = vmatpush1.xpose.msra.mxu0 0.0
    %3079 = vmatprep.subr.mxu0 0.0
    %3080 = vmatpush1.xpose.msra.mxu0 0.0
    %3081 = vmatprep.subr.mxu0 0.0
    %3082 = vmatpush1.xpose.msra.mxu0 0.0
    %3083 = vmatprep.subr.mxu0 0.0
    %3084 = vmatpush1.xpose.msra.mxu0 0.0
    %3085 = vmatprep.subr.mxu0 0.0
    %3086 = vmatpush1.xpose.msra.mxu0 0.0
    %3087 = vmatprep.subr.mxu0 0.0
    %3088 = vmatpush1.xpose.msra.mxu0 0.0
    %3089 = vmatprep.subr.mxu0 0.0
    %3090 = vmatpush1.xpose.msra.mxu0 0.0
    %3091 = vmatprep.subr.mxu0 0.0
    %3092 = vmatpush1.xpose.msra.mxu0 0.0
    %3093 = vmatprep.subr.mxu0 0.0
    %3094 = vmatpush1.xpose.msra.mxu0 0.0
    %3095 = vmatprep.subr.mxu0 0.0
    %3096 = vmatpush1.xpose.msra.mxu0 0.0
    %3097 = vmatprep.subr.mxu0 0.0
    %3098 = vmatpush1.xpose.msra.mxu0 0.0
    %3099 = vmatprep.subr.mxu0 0.0
    %3100 = vmatpush1.xpose.msra.mxu0 0.0
    %3101 = vmatprep.subr.mxu0 0.0
    %3102 = vmatpush1.xpose.msra.mxu0 0.0
    %3103 = vmatprep.subr.mxu0 0.0
    %3104 = vmatpush1.xpose.msra.mxu0 0.0
    %3105 = vmatprep.subr.mxu0 0.0
    %3106 = vmatpush1.xpose.msra.mxu0 0.0
    %3107 = vmatprep.subr.mxu0 0.0
    %3108 = vmatpush1.xpose.msra.mxu0 0.0
    %3109 = vmatprep.subr.mxu0 0.0
    %3110 = vmatpush1.xpose.msra.mxu0 0.0
    %3111 = vmatprep.subr.mxu0 0.0
    %3112 = vmatpush1.xpose.msra.mxu0 0.0
    %3113 = vmatprep.subr.mxu0 0.0
    %3114 = vmatpush1.xpose.msra.mxu0 0.0
    %3115 = vmatprep.subr.mxu0 0.0
    %3116 = vmatpush1.xpose.msra.mxu0 0.0
    %3117 = vmatprep.subr.mxu0 0.0
    %3118 = vmatpush1.xpose.msra.mxu0 0.0
    %3119 = vmatprep.subr.mxu0 0.0
    %3120 = vmatpush1.xpose.msra.mxu0 0.0
    %3121 = vmatprep.subr.mxu0 0.0
    %3122 = vmatpush1.xpose.msra.mxu0 0.0
    %3123 = vmatprep.subr.mxu0 0.0
    %3124 = vmatpush1.xpose.msra.mxu0 0.0
    %3125 = vmatprep.subr.mxu0 0.0
    %3126 = vmatpush1.xpose.msra.mxu0 0.0
    %3127 = vmatprep.subr.mxu0 0.0
    %3128 = vmatpush1.xpose.msra.mxu0 0.0
    %3129 = vmatprep.subr.mxu0 0.0
    %3130 = vmatpush1.xpose.msra.mxu0 0.0
    %3131 = vmatprep.subr.mxu0 0.0
    %3132 = vmatpush1.xpose.msra.mxu0 0.0
    %3133 = vmatprep.mubr.f32.mxu0 0.0
    %3134 = vmatmul.mubr.f32.gmra.mrb[0].mxu0 %v3065
    %v3135 = vpop.f32.mrb[0].mxu0
    %v3136 = vadd.f32 0.0, %v3135
    %v3137 = vpop.f32.mrb[0].mxu0
    %3138 = vdwg.mxu0
    %3139 = vrot.lane.b32.xlu0 %v2064, 104
    %v3140 = vpop.permute.xlu0 %3139
    %3141 = vrot.lane.b32.xlu0 %v2064, 72
    %v3142 = vpop.permute.xlu0 %3141
    %v3143 = vsel %vm259, %v3140, 0
    %v3145 = vsel %vm259, %v3142, 0
    %3147 = vmatprep.subr.mxu0 0.0
    %3148 = vmatpush1.xpose.msra.mxu0 %v3145
    %3149 = vmatprep.subr.mxu0 0.0
    %3150 = vmatpush1.xpose.msra.mxu0 0.0
    %3151 = vmatprep.subr.mxu0 0.0
    %3152 = vmatpush1.xpose.msra.mxu0 0.0
    %3153 = vmatprep.subr.mxu0 0.0
    %3154 = vmatpush1.xpose.msra.mxu0 0.0
    %3155 = vmatprep.subr.mxu0 0.0
    %3156 = vmatpush1.xpose.msra.mxu0 0.0
    %3157 = vmatprep.subr.mxu0 0.0
    %3158 = vmatpush1.xpose.msra.mxu0 0.0
    %3159 = vmatprep.subr.mxu0 0.0
    %3160 = vmatpush1.xpose.msra.mxu0 0.0
    %3161 = vmatprep.subr.mxu0 0.0
    %3162 = vmatpush1.xpose.msra.mxu0 0.0
    %3163 = vmatprep.subr.mxu0 0.0
    %3164 = vmatpush1.xpose.msra.mxu0 0.0
    %3165 = vmatprep.subr.mxu0 0.0
    %3166 = vmatpush1.xpose.msra.mxu0 0.0
    %3167 = vmatprep.subr.mxu0 0.0
    %3168 = vmatpush1.xpose.msra.mxu0 0.0
    %3169 = vmatprep.subr.mxu0 0.0
    %3170 = vmatpush1.xpose.msra.mxu0 0.0
    %3171 = vmatprep.subr.mxu0 0.0
    %3172 = vmatpush1.xpose.msra.mxu0 0.0
    %3173 = vmatprep.subr.mxu0 0.0
    %3174 = vmatpush1.xpose.msra.mxu0 0.0
    %3175 = vmatprep.subr.mxu0 0.0
    %3176 = vmatpush1.xpose.msra.mxu0 0.0
    %3177 = vmatprep.subr.mxu0 0.0
    %3178 = vmatpush1.xpose.msra.mxu0 0.0
    %3179 = vmatprep.subr.mxu0 0.0
    %3180 = vmatpush1.xpose.msra.mxu0 0.0
    %3181 = vmatprep.subr.mxu0 0.0
    %3182 = vmatpush1.xpose.msra.mxu0 0.0
    %3183 = vmatprep.subr.mxu0 0.0
    %3184 = vmatpush1.xpose.msra.mxu0 0.0
    %3185 = vmatprep.subr.mxu0 0.0
    %3186 = vmatpush1.xpose.msra.mxu0 0.0
    %3187 = vmatprep.subr.mxu0 0.0
    %3188 = vmatpush1.xpose.msra.mxu0 0.0
    %3189 = vmatprep.subr.mxu0 0.0
    %3190 = vmatpush1.xpose.msra.mxu0 0.0
    %3191 = vmatprep.subr.mxu0 0.0
    %3192 = vmatpush1.xpose.msra.mxu0 0.0
    %3193 = vmatprep.subr.mxu0 0.0
    %3194 = vmatpush1.xpose.msra.mxu0 0.0
    %3195 = vmatprep.subr.mxu0 0.0
    %3196 = vmatpush1.xpose.msra.mxu0 0.0
    %3197 = vmatprep.subr.mxu0 0.0
    %3198 = vmatpush1.xpose.msra.mxu0 0.0
    %3199 = vmatprep.subr.mxu0 0.0
    %3200 = vmatpush1.xpose.msra.mxu0 0.0
    %3201 = vmatprep.subr.mxu0 0.0
    %3202 = vmatpush1.xpose.msra.mxu0 0.0
    %3203 = vmatprep.subr.mxu0 0.0
    %3204 = vmatpush1.xpose.msra.mxu0 0.0
    %3205 = vmatprep.subr.mxu0 0.0
    %3206 = vmatpush1.xpose.msra.mxu0 0.0
    %3207 = vmatprep.subr.mxu0 0.0
    %3208 = vmatpush1.xpose.msra.mxu0 0.0
    %3209 = vmatprep.subr.mxu0 0.0
    %3210 = vmatpush1.xpose.msra.mxu0 0.0
    %3211 = vmatprep.mubr.f32.mxu0 0.0
    %3212 = vmatmul.mubr.f32.gmra.mrb[0].mxu0 %v3143
    %v3213 = vpop.f32.mrb[0].mxu0
    %v3214 = vadd.f32 0.0, %v3213
    %v3215 = vpop.f32.mrb[0].mxu0
    %3216 = vdwg.mxu0
    %v3217 = vmul.f32 %v3136, 0.35355338
    %v3218 = vmul.f32 %v3214, 0.35355338
    %v3219 = vsel %vm259, %v3217, -inf
    %3220 = vmax.xlane.f32.xlu0 %v3219
    %v3221 = vpop.xlane.xlu0 %3220
    %v3222 = vsel %vm259, %v3218, -inf
    %3223 = vmax.xlane.f32.xlu0 %v3222
    %v3224 = vpop.xlane.xlu0 %3223
    %v3225 = vsub.f32 %v3217, %v3221
    %v3226 = vsub.f32 %v3218, %v3224
    %v3227 = vmul.f32 %v3225, 1.442695
    %v3228 = vpow.pop %v3227
    %v3229 = vmul.f32 %v3226, 1.442695
    %v3230 = vpow.pop %v3229
    %v3231 = vsel %vm259, %v3228, 0.0
    %3232 = vadd.xlane.f32.xlu0 %v3231
    %v3233 = vpop.xlane.xlu0 %3232
    %v3234 = vsel %vm259, %v3230, 0.0
    %3235 = vadd.xlane.f32.xlu0 %v3234
    %v3236 = vpop.xlane.xlu0 %3235
    %v3237 = vrcp.pop %v3233
    %v3238 = vmul.f32 %v3228, %v3237
    %v3239 = vrcp.pop %v3236
    %v3240 = vmul.f32 %v3230, %v3239
    %3241 = vrot.lane.b32.xlu0 %v2059, 40
    %v3242 = vpop.permute.xlu0 %3241
    %v3245 = vsel %vm259, %v3238, 0
    %3247 = vmatprep.subr.mxu0 0.0
    %3248 = vmatpush1.msra.mxu0 %v3242
    %3249 = vmatprep.subr.mxu0 0.0
    %3250 = vmatpush1.msra.mxu0 0.0
    %3251 = vmatprep.subr.mxu0 0.0
    %3252 = vmatpush1.msra.mxu0 0.0
    %3253 = vmatprep.subr.mxu0 0.0
    %3254 = vmatpush1.msra.mxu0 0.0
    %3255 = vmatprep.subr.mxu0 0.0
    %3256 = vmatpush1.msra.mxu0 0.0
    %3257 = vmatprep.subr.mxu0 0.0
    %3258 = vmatpush1.msra.mxu0 0.0
    %3259 = vmatprep.subr.mxu0 0.0
    %3260 = vmatpush1.msra.mxu0 0.0
    %3261 = vmatprep.subr.mxu0 0.0
    %3262 = vmatpush1.msra.mxu0 0.0
    %3263 = vmatprep.subr.mxu0 0.0
    %3264 = vmatpush1.msra.mxu0 0.0
    %3265 = vmatprep.subr.mxu0 0.0
    %3266 = vmatpush1.msra.mxu0 0.0
    %3267 = vmatprep.subr.mxu0 0.0
    %3268 = vmatpush1.msra.mxu0 0.0
    %3269 = vmatprep.subr.mxu0 0.0
    %3270 = vmatpush1.msra.mxu0 0.0
    %3271 = vmatprep.subr.mxu0 0.0
    %3272 = vmatpush1.msra.mxu0 0.0
    %3273 = vmatprep.subr.mxu0 0.0
    %3274 = vmatpush1.msra.mxu0 0.0
    %3275 = vmatprep.subr.mxu0 0.0
    %3276 = vmatpush1.msra.mxu0 0.0
    %3277 = vmatprep.subr.mxu0 0.0
    %3278 = vmatpush1.msra.mxu0 0.0
    %3279 = vmatprep.subr.mxu0 0.0
    %3280 = vmatpush1.msra.mxu0 0.0
    %3281 = vmatprep.subr.mxu0 0.0
    %3282 = vmatpush1.msra.mxu0 0.0
    %3283 = vmatprep.subr.mxu0 0.0
    %3284 = vmatpush1.msra.mxu0 0.0
    %3285 = vmatprep.subr.mxu0 0.0
    %3286 = vmatpush1.msra.mxu0 0.0
    %3287 = vmatprep.subr.mxu0 0.0
    %3288 = vmatpush1.msra.mxu0 0.0
    %3289 = vmatprep.subr.mxu0 0.0
    %3290 = vmatpush1.msra.mxu0 0.0
    %3291 = vmatprep.subr.mxu0 0.0
    %3292 = vmatpush1.msra.mxu0 0.0
    %3293 = vmatprep.subr.mxu0 0.0
    %3294 = vmatpush1.msra.mxu0 0.0
    %3295 = vmatprep.subr.mxu0 0.0
    %3296 = vmatpush1.msra.mxu0 0.0
    %3297 = vmatprep.subr.mxu0 0.0
    %3298 = vmatpush1.msra.mxu0 0.0
    %3299 = vmatprep.subr.mxu0 0.0
    %3300 = vmatpush1.msra.mxu0 0.0
    %3301 = vmatprep.subr.mxu0 0.0
    %3302 = vmatpush1.msra.mxu0 0.0
    %3303 = vmatprep.subr.mxu0 0.0
    %3304 = vmatpush1.msra.mxu0 0.0
    %3305 = vmatprep.subr.mxu0 0.0
    %3306 = vmatpush1.msra.mxu0 0.0
    %3307 = vmatprep.subr.mxu0 0.0
    %3308 = vmatpush1.msra.mxu0 0.0
    %3309 = vmatprep.subr.mxu0 0.0
    %3310 = vmatpush1.msra.mxu0 0.0
    %3311 = vmatprep.mubr.f32.mxu0 0.0
    %3312 = vmatmul.mubr.f32.gmra.mrb[0].mxu0 %v3245
    %v3313 = vpop.f32.mrb[0].mxu0
    %v3314 = vadd.f32 0.0, %v3313
    %v3315 = vpop.f32.mrb[0].mxu0
    %3316 = vdwg.mxu0
    %3317 = vrot.lane.b32.xlu0 %v2064, 40
    %v3318 = vpop.permute.xlu0 %3317
    %v3321 = vsel %vm259, %v3240, 0
    %3323 = vmatprep.subr.mxu0 0.0
    %3324 = vmatpush1.msra.mxu0 %v3318
    %3325 = vmatprep.subr.mxu0 0.0
    %3326 = vmatpush1.msra.mxu0 0.0
    %3327 = vmatprep.subr.mxu0 0.0
    %3328 = vmatpush1.msra.mxu0 0.0
    %3329 = vmatprep.subr.mxu0 0.0
    %3330 = vmatpush1.msra.mxu0 0.0
    %3331 = vmatprep.subr.mxu0 0.0
    %3332 = vmatpush1.msra.mxu0 0.0
    %3333 = vmatprep.subr.mxu0 0.0
    %3334 = vmatpush1.msra.mxu0 0.0
    %3335 = vmatprep.subr.mxu0 0.0
    %3336 = vmatpush1.msra.mxu0 0.0
    %3337 = vmatprep.subr.mxu0 0.0
    %3338 = vmatpush1.msra.mxu0 0.0
    %3339 = vmatprep.subr.mxu0 0.0
    %3340 = vmatpush1.msra.mxu0 0.0
    %3341 = vmatprep.subr.mxu0 0.0
    %3342 = vmatpush1.msra.mxu0 0.0
    %3343 = vmatprep.subr.mxu0 0.0
    %3344 = vmatpush1.msra.mxu0 0.0
    %3345 = vmatprep.subr.mxu0 0.0
    %3346 = vmatpush1.msra.mxu0 0.0
    %3347 = vmatprep.subr.mxu0 0.0
    %3348 = vmatpush1.msra.mxu0 0.0
    %3349 = vmatprep.subr.mxu0 0.0
    %3350 = vmatpush1.msra.mxu0 0.0
    %3351 = vmatprep.subr.mxu0 0.0
    %3352 = vmatpush1.msra.mxu0 0.0
    %3353 = vmatprep.subr.mxu0 0.0
    %3354 = vmatpush1.msra.mxu0 0.0
    %3355 = vmatprep.subr.mxu0 0.0
    %3356 = vmatpush1.msra.mxu0 0.0
    %3357 = vmatprep.subr.mxu0 0.0
    %3358 = vmatpush1.msra.mxu0 0.0
    %3359 = vmatprep.subr.mxu0 0.0
    %3360 = vmatpush1.msra.mxu0 0.0
    %3361 = vmatprep.subr.mxu0 0.0
    %3362 = vmatpush1.msra.mxu0 0.0
    %3363 = vmatprep.subr.mxu0 0.0
    %3364 = vmatpush1.msra.mxu0 0.0
    %3365 = vmatprep.subr.mxu0 0.0
    %3366 = vmatpush1.msra.mxu0 0.0
    %3367 = vmatprep.subr.mxu0 0.0
    %3368 = vmatpush1.msra.mxu0 0.0
    %3369 = vmatprep.subr.mxu0 0.0
    %3370 = vmatpush1.msra.mxu0 0.0
    %3371 = vmatprep.subr.mxu0 0.0
    %3372 = vmatpush1.msra.mxu0 0.0
    %3373 = vmatprep.subr.mxu0 0.0
    %3374 = vmatpush1.msra.mxu0 0.0
    %3375 = vmatprep.subr.mxu0 0.0
    %3376 = vmatpush1.msra.mxu0 0.0
    %3377 = vmatprep.subr.mxu0 0.0
    %3378 = vmatpush1.msra.mxu0 0.0
    %3379 = vmatprep.subr.mxu0 0.0
    %3380 = vmatpush1.msra.mxu0 0.0
    %3381 = vmatprep.subr.mxu0 0.0
    %3382 = vmatpush1.msra.mxu0 0.0
    %3383 = vmatprep.subr.mxu0 0.0
    %3384 = vmatpush1.msra.mxu0 0.0
    %3385 = vmatprep.subr.mxu0 0.0
    %3386 = vmatpush1.msra.mxu0 0.0
    %3387 = vmatprep.mubr.f32.mxu0 0.0
    %3388 = vmatmul.mubr.f32.gmra.mrb[0].mxu0 %v3321
    %v3389 = vpop.f32.mrb[0].mxu0
    %v3390 = vadd.f32 0.0, %v3389
    %v3391 = vpop.f32.mrb[0].mxu0
    %3392 = vdwg.mxu0
    %3395 = vrot.lane.b32.xlu0 %v2650, 8
    %v3396 = vpop.permute.xlu0 %3395
    %3397 = vrot.lane.b32.xlu0 %v2726, 8
    %v3398 = vpop.permute.xlu0 %3397
    %3403 = vrot.lane.b32.xlu0 %v2982, 16
    %v3404 = vpop.permute.xlu0 %3403
    %3405 = vrot.lane.b32.xlu0 %v3058, 16
    %v3406 = vpop.permute.xlu0 %3405
    %3411 = vrot.lane.b32.xlu0 %v3314, 24
    %v3412 = vpop.permute.xlu0 %3411
    %3413 = vrot.lane.b32.xlu0 %v3390, 24
    %v3414 = vpop.permute.xlu0 %3413
    %v3417 = vsel %vm259, %v2318, %v3396
    %v3418 = vsel %vm259, %v2394, %v3398
    %v3419 = vsel %vm80, %v3417, %v3404
    %v3420 = vsel %vm80, %v3418, %v3406
    %v3421 = vsel %vm1611, %v3419, %v3412
    %v3422 = vsel %vm1611, %v3420, %v3414
    %v3423 = vld [vmem:[%s1976 + $0x20] sm:$0xff]
    %v3424 = vld [vmem:[%s1976 + $0x28] sm:$0xff]
    %v3425 = vld [vmem:[%s1976 + $0x30] sm:$0xff]
    %v3426 = vld [vmem:[%s1976 + $0x38] sm:$0xff]
    %v3427 = vld [vmem:[%s1976 + $0xa1] sm:$0x1]
    %v3428 = vlaneseq
    %v3429 = vshrl.u32 %v3428, 7
    %v3430 = vsub.s32 0, %v3429
    %v3431 = vrot.slane %v3427, %v3430
    %v3433 = vsel %vm174, %v3421, 0
    %v3436 = vsel %vm174, %v3422, 0
    %3438 = vmatprep.subr.mxu0 0.0
    %3439 = vmatpush1.msra.mxu0 %v3423
    %3440 = vmatprep.subr.mxu0 0.0
    %3441 = vmatpush1.msra.mxu0 %v3424
    %3442 = vmatprep.subr.mxu0 0.0
    %3443 = vmatpush1.msra.mxu0 %v3425
    %3444 = vmatprep.subr.mxu0 0.0
    %3445 = vmatpush1.msra.mxu0 %v3426
    %3446 = vmatprep.subr.mxu0 0.0
    %3447 = vmatpush1.msra.mxu0 0.0
    %3448 = vmatprep.subr.mxu0 0.0
    %3449 = vmatpush1.msra.mxu0 0.0
    %3450 = vmatprep.subr.mxu0 0.0
    %3451 = vmatpush1.msra.mxu0 0.0
    %3452 = vmatprep.subr.mxu0 0.0
    %3453 = vmatpush1.msra.mxu0 0.0
    %3454 = vmatprep.subr.mxu0 0.0
    %3455 = vmatpush1.msra.mxu0 0.0
    %3456 = vmatprep.subr.mxu0 0.0
    %3457 = vmatpush1.msra.mxu0 0.0
    %3458 = vmatprep.subr.mxu0 0.0
    %3459 = vmatpush1.msra.mxu0 0.0
    %3460 = vmatprep.subr.mxu0 0.0
    %3461 = vmatpush1.msra.mxu0 0.0
    %3462 = vmatprep.subr.mxu0 0.0
    %3463 = vmatpush1.msra.mxu0 0.0
    %3464 = vmatprep.subr.mxu0 0.0
    %3465 = vmatpush1.msra.mxu0 0.0
    %3466 = vmatprep.subr.mxu0 0.0
    %3467 = vmatpush1.msra.mxu0 0.0
    %3468 = vmatprep.subr.mxu0 0.0
    %3469 = vmatpush1.msra.mxu0 0.0
    %3470 = vmatprep.subr.mxu0 0.0
    %3471 = vmatpush1.msra.mxu0 0.0
    %3472 = vmatprep.subr.mxu0 0.0
    %3473 = vmatpush1.msra.mxu0 0.0
    %3474 = vmatprep.subr.mxu0 0.0
    %3475 = vmatpush1.msra.mxu0 0.0
    %3476 = vmatprep.subr.mxu0 0.0
    %3477 = vmatpush1.msra.mxu0 0.0
    %3478 = vmatprep.subr.mxu0 0.0
    %3479 = vmatpush1.msra.mxu0 0.0
    %3480 = vmatprep.subr.mxu0 0.0
    %3481 = vmatpush1.msra.mxu0 0.0
    %3482 = vmatprep.subr.mxu0 0.0
    %3483 = vmatpush1.msra.mxu0 0.0
    %3484 = vmatprep.subr.mxu0 0.0
    %3485 = vmatpush1.msra.mxu0 0.0
    %3486 = vmatprep.subr.mxu0 0.0
    %3487 = vmatpush1.msra.mxu0 0.0
    %3488 = vmatprep.subr.mxu0 0.0
    %3489 = vmatpush1.msra.mxu0 0.0
    %3490 = vmatprep.subr.mxu0 0.0
    %3491 = vmatpush1.msra.mxu0 0.0
    %3492 = vmatprep.subr.mxu0 0.0
    %3493 = vmatpush1.msra.mxu0 0.0
    %3494 = vmatprep.subr.mxu0 0.0
    %3495 = vmatpush1.msra.mxu0 0.0
    %3496 = vmatprep.subr.mxu0 0.0
    %3497 = vmatpush1.msra.mxu0 0.0
    %3498 = vmatprep.subr.mxu0 0.0
    %3499 = vmatpush1.msra.mxu0 0.0
    %3500 = vmatprep.subr.mxu0 0.0
    %3501 = vmatpush1.msra.mxu0 0.0
    %3502 = vmatprep.mubr.f32.mxu0 0.0
    %3503 = vmatmul.mubr.f32.gmra.mrb[0].mxu0 %v3433
    %v3504 = vpop.f32.mrb[0].mxu0
    %v3505 = vadd.f32 %v3431, %v3504
    %v3506 = vpop.f32.mrb[0].mxu0
    %3507 = vmatprep.mubr.f32.mxu0 0.0
    %3508 = vmatmul.mubr.f32.gmra.mrb[0].mxu0 %v3436
    %v3509 = vpop.f32.mrb[0].mxu0
    %v3510 = vadd.f32 %v3431, %v3509
    %v3511 = vpop.f32.mrb[0].mxu0
    %3512 = vdwg.mxu0
    %v3513 = vadd.f32 %v1974, %v3505
    %v3514 = vadd.f32 %v1975, %v3510
    %v3515 = vld [vmem:[%s1976 + $0xa2] sm:$0x1]
    %v3516 = vld [vmem:[%s1976 + $0xa3] sm:$0x1]
    %v3517 = vsel %vm174, %v3513, 0.0
    %3518 = vadd.xlane.f32.xlu0 %v3517
    %v3519 = vpop.xlane.xlu0 %3518
    %v3520 = vsel %vm174, %v3514, 0.0
    %3521 = vadd.xlane.f32.xlu0 %v3520
    %v3522 = vpop.xlane.xlu0 %3521
    %v3523 = vmul.f32 %v3519, %v1714
    %v3524 = vmul.f32 %v3522, %v1714
    %v3525 = vsub.f32 %v3513, %v3523
    %v3526 = vsub.f32 %v3514, %v3524
    %v3527 = vmul.f32 %v3525, %v3525
    %v3528 = vmul.f32 %v3526, %v3526
    %v3529 = vsel %vm174, %v3527, 0.0
    %3530 = vadd.xlane.f32.xlu0 %v3529
    %v3531 = vpop.xlane.xlu0 %3530
    %v3532 = vsel %vm174, %v3528, 0.0
    %3533 = vadd.xlane.f32.xlu0 %v3532
    %v3534 = vpop.xlane.xlu0 %3533
    %v3535 = vmul.f32 %v3531, %v1714
    %v3536 = vmul.f32 %v3534, %v1714
    %v3537 = vadd.f32 %v3535, 1e-05
    %v3538 = vadd.f32 %v3536, 1e-05
    %v3539 = vrsqrt.pop %v3537
    %v3540 = vrsqrt.pop %v3538
    %v3541 = vmul.f32 %v3525, %v3539
    %v3542 = vmul.f32 %v3526, %v3540
    %v3543 = vlaneseq
    %v3544 = vshrl.u32 %v3543, 7
    %v3545 = vsub.s32 0, %v3544
    %v3546 = vrot.slane %v3515, %v3545
    %v3547 = vmul.f32 %v3541, %v3546
    %v3548 = vmul.f32 %v3542, %v3546
    %v3549 = vlaneseq
    %v3550 = vshrl.u32 %v3549, 7
    %v3551 = vsub.s32 0, %v3550
    %v3552 = vrot.slane %v3516, %v3551
    %v3553 = vadd.f32 %v3547, %v3552
    %v3554 = vadd.f32 %v3548, %v3552
    %v3555 = vld [vmem:[%s1976 + $0x40] sm:$0xff]
    %v3556 = vld [vmem:[%s1976 + $0x48] sm:$0xff]
    %v3557 = vld [vmem:[%s1976 + $0x50] sm:$0xff]
    %v3558 = vld [vmem:[%s1976 + $0x58] sm:$0xff]
    %v3559 = vld [vmem:[%s1976 + $0xa4] sm:$0x1]
    %v3560 = vlaneseq
    %v3561 = vshrl.u32 %v3560, 7
    %v3562 = vsub.s32 0, %v3561
    %v3563 = vrot.slane %v3559, %v3562
    %v3565 = vsel %vm174, %v3553, 0
    %v3568 = vsel %vm174, %v3554, 0
    %3570 = vmatprep.subr.mxu0 0.0
    %3571 = vmatpush1.msra.mxu0 %v3555
    %3572 = vmatprep.subr.mxu0 0.0
    %3573 = vmatpush1.msra.mxu0 %v3556
    %3574 = vmatprep.subr.mxu0 0.0
    %3575 = vmatpush1.msra.mxu0 %v3557
    %3576 = vmatprep.subr.mxu0 0.0
    %3577 = vmatpush1.msra.mxu0 %v3558
    %3578 = vmatprep.subr.mxu0 0.0
    %3579 = vmatpush1.msra.mxu0 0.0
    %3580 = vmatprep.subr.mxu0 0.0
    %3581 = vmatpush1.msra.mxu0 0.0
    %3582 = vmatprep.subr.mxu0 0.0
    %3583 = vmatpush1.msra.mxu0 0.0
    %3584 = vmatprep.subr.mxu0 0.0
    %3585 = vmatpush1.msra.mxu0 0.0
    %3586 = vmatprep.subr.mxu0 0.0
    %3587 = vmatpush1.msra.mxu0 0.0
    %3588 = vmatprep.subr.mxu0 0.0
    %3589 = vmatpush1.msra.mxu0 0.0
    %3590 = vmatprep.subr.mxu0 0.0
    %3591 = vmatpush1.msra.mxu0 0.0
    %3592 = vmatprep.subr.mxu0 0.0
    %3593 = vmatpush1.msra.mxu0 0.0
    %3594 = vmatprep.subr.mxu0 0.0
    %3595 = vmatpush1.msra.mxu0 0.0
    %3596 = vmatprep.subr.mxu0 0.0
    %3597 = vmatpush1.msra.mxu0 0.0
    %3598 = vmatprep.subr.mxu0 0.0
    %3599 = vmatpush1.msra.mxu0 0.0
    %3600 = vmatprep.subr.mxu0 0.0
    %3601 = vmatpush1.msra.mxu0 0.0
    %3602 = vmatprep.subr.mxu0 0.0
    %3603 = vmatpush1.msra.mxu0 0.0
    %3604 = vmatprep.subr.mxu0 0.0
    %3605 = vmatpush1.msra.mxu0 0.0
    %3606 = vmatprep.subr.mxu0 0.0
    %3607 = vmatpush1.msra.mxu0 0.0
    %3608 = vmatprep.subr.mxu0 0.0
    %3609 = vmatpush1.msra.mxu0 0.0
    %3610 = vmatprep.subr.mxu0 0.0
    %3611 = vmatpush1.msra.mxu0 0.0
    %3612 = vmatprep.subr.mxu0 0.0
    %3613 = vmatpush1.msra.mxu0 0.0
    %3614 = vmatprep.subr.mxu0 0.0
    %3615 = vmatpush1.msra.mxu0 0.0
    %3616 = vmatprep.subr.mxu0 0.0
    %3617 = vmatpush1.msra.mxu0 0.0
    %3618 = vmatprep.subr.mxu0 0.0
    %3619 = vmatpush1.msra.mxu0 0.0
    %3620 = vmatprep.subr.mxu0 0.0
    %3621 = vmatpush1.msra.mxu0 0.0
    %3622 = vmatprep.subr.mxu0 0.0
    %3623 = vmatpush1.msra.mxu0 0.0
    %3624 = vmatprep.subr.mxu0 0.0
    %3625 = vmatpush1.msra.mxu0 0.0
    %3626 = vmatprep.subr.mxu0 0.0
    %3627 = vmatpush1.msra.mxu0 0.0
    %3628 = vmatprep.subr.mxu0 0.0
    %3629 = vmatpush1.msra.mxu0 0.0
    %3630 = vmatprep.subr.mxu0 0.0
    %3631 = vmatpush1.msra.mxu0 0.0
    %3632 = vmatprep.subr.mxu0 0.0
    %3633 = vmatpush1.msra.mxu0 0.0
    %3634 = vmatprep.mubr.f32.mxu0 0.0
    %3635 = vmatmul.mubr.f32.gmra.mrb[0].mxu0 %v3565
    %v3636 = vpop.f32.mrb[0].mxu0
    %v3637 = vadd.f32 %v3563, %v3636
    %v3638 = vpop.f32.mrb[0].mxu0
    %3639 = vmatprep.mubr.f32.mxu0 0.0
    %3640 = vmatmul.mubr.f32.gmra.mrb[0].mxu0 %v3568
    %v3641 = vpop.f32.mrb[0].mxu0
    %v3642 = vadd.f32 %v3563, %v3641
    %v3643 = vpop.f32.mrb[0].mxu0
    %3644 = vdwg.mxu0
    %v3645 = vmax.f32 %v3637, 0.0
    %v3646 = vmax.f32 %v3642, 0.0
    %v3647 = vld [vmem:[%s1976 + $0x60] sm:$0xff]
    %v3648 = vld [vmem:[%s1976 + $0x68] sm:$0xff]
    %v3649 = vld [vmem:[%s1976 + $0x70] sm:$0xff]
    %v3650 = vld [vmem:[%s1976 + $0x78] sm:$0xff]
    %v3651 = vld [vmem:[%s1976 + $0x80] sm:$0xff]
    %v3652 = vld [vmem:[%s1976 + $0x88] sm:$0xff]
    %v3653 = vld [vmem:[%s1976 + $0x90] sm:$0xff]
    %v3654 = vld [vmem:[%s1976 + $0x98] sm:$0xff]
    %v3655 = vld [vmem:[%s1976 + $0xa5] sm:$0x1]
    %v3656 = vlaneseq
    %v3657 = vshrl.u32 %v3656, 7
    %v3658 = vsub.s32 0, %v3657
    %v3659 = vrot.slane %v3655, %v3658
    %v3661 = vsel %vm1852, %v3645, 0
    %v3664 = vsel %vm1852, %v3646, 0
    %3666 = vmatprep.subr.mxu0 0.0
    %3667 = vmatpush1.msra.mxu0 %v3647
    %3668 = vmatprep.subr.mxu0 0.0
    %3669 = vmatpush1.msra.mxu0 %v3648
    %3670 = vmatprep.subr.mxu0 0.0
    %3671 = vmatpush1.msra.mxu0 %v3649
    %3672 = vmatprep.subr.mxu0 0.0
    %3673 = vmatpush1.msra.mxu0 %v3650
    %3674 = vmatprep.subr.mxu0 0.0
    %3675 = vmatpush1.msra.mxu0 %v3651
    %3676 = vmatprep.subr.mxu0 0.0
    %3677 = vmatpush1.msra.mxu0 %v3652
    %3678 = vmatprep.subr.mxu0 0.0
    %3679 = vmatpush1.msra.mxu0 %v3653
    %3680 = vmatprep.subr.mxu0 0.0
    %3681 = vmatpush1.msra.mxu0 %v3654
    %3682 = vmatprep.subr.mxu0 0.0
    %3683 = vmatpush1.msra.mxu0 0.0
    %3684 = vmatprep.subr.mxu0 0.0
    %3685 = vmatpush1.msra.mxu0 0.0
    %3686 = vmatprep.subr.mxu0 0.0
    %3687 = vmatpush1.msra.mxu0 0.0
    %3688 = vmatprep.subr.mxu0 0.0
    %3689 = vmatpush1.msra.mxu0 0.0
    %3690 = vmatprep.subr.mxu0 0.0
    %3691 = vmatpush1.msra.mxu0 0.0
    %3692 = vmatprep.subr.mxu0 0.0
    %3693 = vmatpush1.msra.mxu0 0.0
    %3694 = vmatprep.subr.mxu0 0.0
    %3695 = vmatpush1.msra.mxu0 0.0
    %3696 = vmatprep.subr.mxu0 0.0
    %3697 = vmatpush1.msra.mxu0 0.0
    %3698 = vmatprep.subr.mxu0 0.0
    %3699 = vmatpush1.msra.mxu0 0.0
    %3700 = vmatprep.subr.mxu0 0.0
    %3701 = vmatpush1.msra.mxu0 0.0
    %3702 = vmatprep.subr.mxu0 0.0
    %3703 = vmatpush1.msra.mxu0 0.0
    %3704 = vmatprep.subr.mxu0 0.0
    %3705 = vmatpush1.msra.mxu0 0.0
    %3706 = vmatprep.subr.mxu0 0.0
    %3707 = vmatpush1.msra.mxu0 0.0
    %3708 = vmatprep.subr.mxu0 0.0
    %3709 = vmatpush1.msra.mxu0 0.0
    %3710 = vmatprep.subr.mxu0 0.0
    %3711 = vmatpush1.msra.mxu0 0.0
    %3712 = vmatprep.subr.mxu0 0.0
    %3713 = vmatpush1.msra.mxu0 0.0
    %3714 = vmatprep.subr.mxu0 0.0
    %3715 = vmatpush1.msra.mxu0 0.0
    %3716 = vmatprep.subr.mxu0 0.0
    %3717 = vmatpush1.msra.mxu0 0.0
    %3718 = vmatprep.subr.mxu0 0.0
    %3719 = vmatpush1.msra.mxu0 0.0
    %3720 = vmatprep.subr.mxu0 0.0
    %3721 = vmatpush1.msra.mxu0 0.0
    %3722 = vmatprep.subr.mxu0 0.0
    %3723 = vmatpush1.msra.mxu0 0.0
    %3724 = vmatprep.subr.mxu0 0.0
    %3725 = vmatpush1.msra.mxu0 0.0
    %3726 = vmatprep.subr.mxu0 0.0
    %3727 = vmatpush1.msra.mxu0 0.0
    %3728 = vmatprep.subr.mxu0 0.0
    %3729 = vmatpush1.msra.mxu0 0.0
    %3730 = vmatprep.mubr.f32.mxu0 0.0
    %3731 = vmatmul.mubr.f32.gmra.mrb[0].mxu0 %v3661
    %v3732 = vpop.f32.mrb[0].mxu0
    %v3733 = vadd.f32 %v3659, %v3732
    %v3734 = vpop.f32.mrb[0].mxu0
    %3735 = vmatprep.mubr.f32.mxu0 0.0
    %3736 = vmatmul.mubr.f32.gmra.mrb[0].mxu0 %v3664
    %v3737 = vpop.f32.mrb[0].mxu0
    %v3738 = vadd.f32 %v3659, %v3737
    %v3739 = vpop.f32.mrb[0].mxu0
    %3740 = vdwg.mxu0
    %v3741 = vadd.f32 %v3553, %v3733
    %v3742 = vadd.f32 %v3554, %v3738
    %v3743 = vld [vmem:[%s1976 + $0xa6] sm:$0x1]
    %v3744 = vld [vmem:[%s1976 + $0xa7] sm:$0x1]
    %v3745 = vsel %vm174, %v3741, 0.0
    %3746 = vadd.xlane.f32.xlu0 %v3745
    %v3747 = vpop.xlane.xlu0 %3746
    %v3748 = vsel %vm174, %v3742, 0.0
    %3749 = vadd.xlane.f32.xlu0 %v3748
    %v3750 = vpop.xlane.xlu0 %3749
    %v3751 = vmul.f32 %v3747, %v1714
    %v3752 = vmul.f32 %v3750, %v1714
    %v3753 = vsub.f32 %v3741, %v3751
    %v3754 = vsub.f32 %v3742, %v3752
    %v3755 = vmul.f32 %v3753, %v3753
    %v3756 = vmul.f32 %v3754, %v3754
    %v3757 = vsel %vm174, %v3755, 0.0
    %3758 = vadd.xlane.f32.xlu0 %v3757
    %v3759 = vpop.xlane.xlu0 %3758
    %v3760 = vsel %vm174, %v3756, 0.0
    %3761 = vadd.xlane.f32.xlu0 %v3760
    %v3762 = vpop.xlane.xlu0 %3761
    %v3763 = vmul.f32 %v3759, %v1714
    %v3764 = vmul.f32 %v3762, %v1714
    %v3765 = vadd.f32 %v3763, 1e-05
    %v3766 = vadd.f32 %v3764, 1e-05
    %v3767 = vrsqrt.pop %v3765
    %v3768 = vrsqrt.pop %v3766
    %v3769 = vmul.f32 %v3753, %v3767
    %v3770 = vmul.f32 %v3754, %v3768
    %v3771 = vlaneseq
    %v3772 = vshrl.u32 %v3771, 7
    %v3773 = vsub.s32 0, %v3772
    %v3774 = vrot.slane %v3743, %v3773
    %v3775 = vmul.f32 %v3769, %v3774
    %v3776 = vmul.f32 %v3770, %v3774
    %v3777 = vlaneseq
    %v3778 = vshrl.u32 %v3777, 7
    %v3779 = vsub.s32 0, %v3778
    %v3780 = vrot.slane %v3744, %v3779
    %v3781 = vadd.f32 %v3775, %v3780
    %v3782 = vadd.f32 %v3776, %v3780
    %v3783 = vsel %vm174, %v3781, -inf
    %v3784 = vrot.slane %v3783, 4
    %v3785 = vmax.f32 %v3783, %v3784
    %v3786 = vrot.slane %v3785, 2
    %v3787 = vmax.f32 %v3785, %v3786
    %v3788 = vrot.slane %v3787, 1
    %v3789 = vmax.f32 %v3787, %v3788
    %v3790 = vsel %vm174, %v3782, -inf
    %v3791 = vrot.slane %v3790, 4
    %v3792 = vmax.f32 %v3790, %v3791
    %v3793 = vrot.slane %v3792, 2
    %v3794 = vmax.f32 %v3792, %v3793
    %v3795 = vrot.slane %v3794, 1
    %v3796 = vmax.f32 %v3794, %v3795
    %vm3799 = vcmask 1041409
    %v3800 = vsel %vm3799, %v3796, %v3789
    %vm3802 = vcmask 1041408
    %v3803 = vsel %vm3802, %v3800, 0.0
    %v3804 = vld [vmem:[#allocation7 + $0x10] sm:$0xff]
    %v3805 = vld [vmem:[#allocation7 + $0x18] sm:$0xff]
    %v3806 = vld [vmem:[#allocation7 + $0x20] sm:$0xff]
    %v3807 = vld [vmem:[#allocation7 + $0x28] sm:$0xff]
    %v3808 = vld [vmem:[#allocation7 + $0x31] sm:$0x1]
    %v3809 = vlaneseq
    %v3810 = vshrl.u32 %v3809, 7
    %v3811 = vsub.s32 0, %v3810
    %v3812 = vrot.slane %v3808, %v3811
    %v3814 = vsel %vm174, %v3803, 0
    %3816 = vmatprep.subr.mxu0 0.0
    %3817 = vmatpush1.msra.mxu0 %v3804
    %3818 = vmatprep.subr.mxu0 0.0
    %3819 = vmatpush1.msra.mxu0 %v3805
    %3820 = vmatprep.subr.mxu0 0.0
    %3821 = vmatpush1.msra.mxu0 %v3806
    %3822 = vmatprep.subr.mxu0 0.0
    %3823 = vmatpush1.msra.mxu0 %v3807
    %3824 = vmatprep.subr.mxu0 0.0
    %3825 = vmatpush1.msra.mxu0 0.0
    %3826 = vmatprep.subr.mxu0 0.0
    %3827 = vmatpush1.msra.mxu0 0.0
    %3828 = vmatprep.subr.mxu0 0.0
    %3829 = vmatpush1.msra.mxu0 0.0
    %3830 = vmatprep.subr.mxu0 0.0
    %3831 = vmatpush1.msra.mxu0 0.0
    %3832 = vmatprep.subr.mxu0 0.0
    %3833 = vmatpush1.msra.mxu0 0.0
    %3834 = vmatprep.subr.mxu0 0.0
    %3835 = vmatpush1.msra.mxu0 0.0
    %3836 = vmatprep.subr.mxu0 0.0
    %3837 = vmatpush1.msra.mxu0 0.0
    %3838 = vmatprep.subr.mxu0 0.0
    %3839 = vmatpush1.msra.mxu0 0.0
    %3840 = vmatprep.subr.mxu0 0.0
    %3841 = vmatpush1.msra.mxu0 0.0
    %3842 = vmatprep.subr.mxu0 0.0
    %3843 = vmatpush1.msra.mxu0 0.0
    %3844 = vmatprep.subr.mxu0 0.0
    %3845 = vmatpush1.msra.mxu0 0.0
    %3846 = vmatprep.subr.mxu0 0.0
    %3847 = vmatpush1.msra.mxu0 0.0
    %3848 = vmatprep.subr.mxu0 0.0
    %3849 = vmatpush1.msra.mxu0 0.0
    %3850 = vmatprep.subr.mxu0 0.0
    %3851 = vmatpush1.msra.mxu0 0.0
    %3852 = vmatprep.subr.mxu0 0.0
    %3853 = vmatpush1.msra.mxu0 0.0
    %3854 = vmatprep.subr.mxu0 0.0
    %3855 = vmatpush1.msra.mxu0 0.0
    %3856 = vmatprep.subr.mxu0 0.0
    %3857 = vmatpush1.msra.mxu0 0.0
    %3858 = vmatprep.subr.mxu0 0.0
    %3859 = vmatpush1.msra.mxu0 0.0
    %3860 = vmatprep.subr.mxu0 0.0
    %3861 = vmatpush1.msra.mxu0 0.0
    %3862 = vmatprep.subr.mxu0 0.0
    %3863 = vmatpush1.msra.mxu0 0.0
    %3864 = vmatprep.subr.mxu0 0.0
    %3865 = vmatpush1.msra.mxu0 0.0
    %3866 = vmatprep.subr.mxu0 0.0
    %3867 = vmatpush1.msra.mxu0 0.0
    %3868 = vmatprep.subr.mxu0 0.0
    %3869 = vmatpush1.msra.mxu0 0.0
    %3870 = vmatprep.subr.mxu0 0.0
    %3871 = vmatpush1.msra.mxu0 0.0
    %3872 = vmatprep.subr.mxu0 0.0
    %3873 = vmatpush1.msra.mxu0 0.0
    %3874 = vmatprep.subr.mxu0 0.0
    %3875 = vmatpush1.msra.mxu0 0.0
    %3876 = vmatprep.subr.mxu0 0.0
    %3877 = vmatpush1.msra.mxu0 0.0
    %3878 = vmatprep.subr.mxu0 0.0
    %3879 = vmatpush1.msra.mxu0 0.0
    %3880 = vmatprep.mubr.f32.mxu0 0.0
    %3881 = vmatmul.mubr.f32.gmra.mrb[0].mxu0 %v3814
    %v3882 = vpop.f32.mrb[0].mxu0
    %v3883 = vadd.f32 %v3812, %v3882
    %v3884 = vpop.f32.mrb[0].mxu0
    %3885 = vdwg.mxu0
    %3886 = vst [vmem:[#allocation10] sm:$0xff] %v3883
    // Predicated region
    $region34: #{tpu_custom_call.1} parent=1 // pred_check
      _
    $region35: #{tpu_custom_call.1} parent=1 // pred_check_branch
      %3888 = sbr.rel (0) target = $region37
    $region36: #{tpu_custom_call.1} parent=1 // pred_region
      %s3890 = ssub.s32 128, 128
      %3891 = vsyncadd [#allocation4], %s3890
      %s3893 = sshll.u32 [#allocation10], 4
      %s3894 = int_to_ptr.vmem [resolvable:$true] %s3893
      %3896 = dma.vmem_to_hbm [thread:$0]  %s3894, 128, %s4, [#allocation4]
    $region37: #{tpu_custom_call.1} parent=1 // pred_fallthru
      _
    // Predicated region
    $region38: #{tpu_custom_call.1} parent=1 // pred_check
      _
    $region39: #{tpu_custom_call.1} parent=1 // pred_check_branch
      %3898 = sbr.rel (0) target = $region41
    $region40: #{tpu_custom_call.1} parent=1 // pred_region
      %3899 = dma.done [#allocation4], 128
    $region41: #{tpu_custom_call.1} parent=1 // pred_fallthru
      _
    %3900 = vsyncpa [#allocation3], 1
    %3901 = vsyncpa [#allocation6], 1
    %3902 = vsyncpa [#allocation9], 1
    %3903 = vsyncpa [#allocation4], 1

</llo_original>
